<compile_context>
chip_gen: v6e
topology: v6e:2x2x1
jax: 0.10.0
libtpu: 0.0.40
codegen_flags: <defaults>
</compile_context>

<pallas_src>
import functools

import numpy as np
import jax
import jax.numpy as jnp
from jax.experimental import pallas as pl
from jax.experimental.pallas import tpu as pltpu

MIN_DB = -80.0
FREQ_TILE = 256       # frequency-tile width (fused [re|im] RHS is 2*FREQ_TILE wide)
TILE_S_MAX = 512      # max frames (sublanes) per gain-kernel tile
MIX_COLS = 512        # lane width of the mixing tiles
MIX_MAX_ROWS = 1024   # max sublane rows per mixing tile (~2 MiB f32 per operand)


def _round_up(x, m):
    return ((x + m - 1) // m) * m


# ----------------------------------------------------------------------------
# Constants, built once per sample_rate with numpy (hoisted out of the trace).
# ----------------------------------------------------------------------------
def _build_basis(fs, n_fft, min_db=MIN_DB):
    """Fused rfft basis with the Hann window and sqrt(A-weight) folded in.

    Returns (basis bf16 (n_fft, 2*f_pad), n_blocks).  Block k of the basis is
    [win*sqrt(w)*cos | -win*sqrt(w)*sin] for FREQ_TILE consecutive bins, so
    (frames @ basis_k)^2 summed over lanes == sum_f w_f * |rfft(win*frame)_f|^2.
    """
    n_freq = n_fft // 2 + 1
    f_pad = _round_up(n_freq, FREQ_TILE)
    n_blocks = f_pad // FREQ_TILE

    # A-weighting in dB -> linear power weights (matches the torch reference).
    freq = np.linspace(0.0, float(fs // 2), n_freq, dtype=np.float64)
    fsq = freq ** 2
    fsq[0] = 1.0
    wdb = 2.0 + 20.0 * (
        2.0 * np.log10(12194.0) + 2.0 * np.log10(fsq)
        - np.log10(fsq + 12194.0 ** 2) - np.log10(fsq + 20.6 ** 2)
        - 0.5 * np.log10(fsq + 107.7 ** 2) - 0.5 * np.log10(fsq + 737.9 ** 2))
    wdb = np.clip(wdb, min_db, None)
    aw_sqrt = np.sqrt(np.power(10.0, wdb / 10.0))            # (n_freq,)

    # Periodic Hann window (torch.hann_window default).
    n = np.arange(n_fft, dtype=np.float64)
    window = 0.5 * (1.0 - np.cos(2.0 * np.pi * n / n_fft))

    # Exact integer phase for the rfft basis.
    nn = np.arange(n_fft, dtype=np.int64)[:, None]
    ff = np.arange(n_freq, dtype=np.int64)[None, :]
    phase = 2.0 * np.pi * ((nn * ff) % n_fft).astype(np.float64) / n_fft
    scale = window[:, None] * aw_sqrt[None, :]
    re = np.cos(phase) * scale
    im = -np.sin(phase) * scale
    pad = ((0, 0), (0, f_pad - n_freq))
    re = np.pad(re, pad)
    im = np.pad(im, pad)
    basis = np.concatenate(
        [re.reshape(n_fft, n_blocks, FREQ_TILE),
         im.reshape(n_fft, n_blocks, FREQ_TILE)], axis=-1,
    ).reshape(n_fft, 2 * f_pad)
    return jnp.asarray(basis, dtype=jnp.bfloat16), n_blocks


# ----------------------------------------------------------------------------
# Pallas kernels
# ----------------------------------------------------------------------------
def _gain_kernel(wf_ref, dft_ref, out_ref, acc_ref, *, min_gain):
    """Grid = (frame_tiles, freq_blocks); one fused [re|im] tile per step.

    wf_ref  : (TILE_S, n_fft)       bf16  raw frames (window folded into basis)
    dft_ref : (n_fft, 2*FREQ_TILE)  bf16  window*sqrt(A-weight)*[cos|-sin]
    out_ref : (TILE_S, 1)           f32   per-frame gain_db (written last step)
    acc_ref : (TILE_S, 1)           f32   weighted-power accumulator (scratch)
    """
    k = pl.program_id(1)

    @pl.when(k == 0)
    def _():
        acc_ref[...] = jnp.zeros_like(acc_ref)

    # single MXU push per step; re^2 + im^2 folds into the lane reduction
    y = jnp.dot(wf_ref[...], dft_ref[...], preferred_element_type=jnp.float32)
    acc_ref[...] += jnp.sum(y * y, axis=-1, keepdims=True)

    @pl.when(k == pl.num_programs(1) - 1)
    def _():
        out_ref[...] = 10.0 * jnp.log10(jnp.maximum(acc_ref[...], min_gain))


def _mix_kernel(coef_ref, s1_ref, s2_ref, o_ref):
    # coef_ref (SMEM, shape (2,)): [t, 1-t] / sqrt(t^2 + (1-t)^2), precomputed.
    o_ref[...] = s1_ref[...] * coef_ref[0] + s2_ref[...] * coef_ref[1]


# ----------------------------------------------------------------------------
# Wrappers
# ----------------------------------------------------------------------------
def _frames_bf16(sound, n_fft, stride):
    """torch.as_strided framing (50% overlap) without a gather: since
    stride == n_fft/2, frame i == concat(rows[i], rows[i+1]) of the
    (len//stride, stride) view.  Returns (frames bf16 (num_seg, n_fft), num_seg)."""
    if sound.ndim >= 2:
        assert sound.shape[-2] == 1, "only mono-track audio is supported"
    x = sound.reshape(-1).astype(jnp.float32)
    length = x.shape[0]
    if length < n_fft:                       # guard: pad very short signals
        x = jnp.pad(x, (0, n_fft - length))
        length = n_fft
    trim = (length // stride) * stride
    raw = x[:trim].astype(jnp.bfloat16).reshape(-1, stride)
    frames = jnp.concatenate([raw[:-1], raw[1:]], axis=1)     # (num_seg, n_fft)
    return frames, raw.shape[0] - 1


def compute_gains_batched(sound1, sound2, basis, *, n_fft, stride, n_blocks,
                          min_db=MIN_DB):
    """compute_gain(s1).max(), compute_gain(s2).max() (A_weighting mode),
    both sounds batched into one pallas_call along the frame axis."""
    f1, n1 = _frames_bf16(sound1, n_fft, stride)
    f2, n2 = _frames_bf16(sound2, n_fft, stride)
    s_total = n1 + n2

    tile_s = min(TILE_S_MAX, _round_up(s_total, 8))
    s_pad = _round_up(s_total, tile_s)
    parts = [f1, f2]
    if s_pad > s_total:
        # zero rows give gain_db == min_db, and are sliced away before the max
        parts.append(jnp.zeros((s_pad - s_total, n_fft), jnp.bfloat16))
    frames = jnp.concatenate(parts, axis=0)                   # (s_pad, n_fft)

    min_gain = float(10.0 ** (min_db / 10.0))
    kernel = functools.partial(_gain_kernel, min_gain=min_gain)

    gains_db = pl.pallas_call(
        kernel,
        out_shape=jax.ShapeDtypeStruct((s_pad, 1), jnp.float32),
        grid=(s_pad // tile_s, n_blocks),
        in_specs=[
            pl.BlockSpec((tile_s, n_fft), lambda i, k: (i, 0)),
            pl.BlockSpec((n_fft, 2 * FREQ_TILE), lambda i, k: (0, k)),
        ],
        out_specs=pl.BlockSpec((tile_s, 1), lambda i, k: (i, 0)),
        scratch_shapes=[pltpu.VMEM((tile_s, 1), jnp.float32)],
        compiler_params=pltpu.CompilerParams(
            dimension_semantics=("parallel", "arbitrary"),
            vmem_limit_bytes=32 * 1024 * 1024),
    )(frames, basis)

    gain1 = jnp.max(gains_db[:n1, 0])
    gain2 = jnp.max(gains_db[n1:s_total, 0])
    return gain1, gain2


def mix_pallas(sound1, sound2, t):
    orig_shape = sound1.shape
    s1 = sound1.reshape(-1).astype(jnp.float32)
    s2 = sound2.reshape(-1).astype(jnp.float32)
    assert s1.shape == s2.shape, "sound1/sound2 must have the same length"
    length = s1.shape[0]

    # normalized mixing coefficients computed once (kernel is 2 muls + 1 add
    # per element -> pure HBM roofline)
    u = 1.0 - t
    inv = jax.lax.rsqrt(t * t + u * u)
    coef = jnp.stack([t * inv, u * inv]).astype(jnp.float32)   # (2,) -> SMEM

    # lane/sublane-dense layout: (rows, 512) f32, rows a multiple of 8.
    chunk = 8 * MIX_COLS
    l_pad = _round_up(length, chunk)
    if l_pad != length:                      # misaligned lengths only
        s1 = jnp.pad(s1, (0, l_pad - length))
        s2 = jnp.pad(s2, (0, l_pad - length))
    rows = l_pad // MIX_COLS
    tile_rows = min(MIX_MAX_ROWS, rows)      # both multiples of 8
    s1p = s1.reshape(rows, MIX_COLS)         # contiguous reshape: no copy
    s2p = s2.reshape(rows, MIX_COLS)

    out = pl.pallas_call(
        _mix_kernel,
        out_shape=jax.ShapeDtypeStruct((rows, MIX_COLS), jnp.float32),
        grid=(pl.cdiv(rows, tile_rows),),    # partial last block is masked
        in_specs=[
            pl.BlockSpec(memory_space=pltpu.MemorySpace.SMEM),
            pl.BlockSpec((tile_rows, MIX_COLS), lambda i: (i, 0)),
            pl.BlockSpec((tile_rows, MIX_COLS), lambda i: (i, 0)),
        ],
        out_specs=pl.BlockSpec((tile_rows, MIX_COLS), lambda i: (i, 0)),
        compiler_params=pltpu.CompilerParams(
            dimension_semantics=("parallel",)),
    )(coef, s1p, s2p)

    out = out.reshape(-1)
    if l_pad != length:
        out = out[:length]
    return out.reshape(orig_shape)


def _mix_sounds_impl(sound1, sound2, r, basis, *, n_fft, stride, n_blocks):
    gain1, gain2 = compute_gains_batched(
        sound1, sound2, basis, n_fft=n_fft, stride=stride, n_blocks=n_blocks)
    # same r-hazard semantics as the torch reference (r must be in (0, 1])
    t = 1.0 / (1.0 + jnp.power(10.0, (gain1 - gain2) / 20.0) * (1.0 - r) / r)
    return mix_pallas(sound1, sound2, t)


class BCAugmentorPallas:
    """JAX/Pallas port of BCAugmentor (between-class audio mixing)."""

    def __init__(self, sample_rate):
        self.sample_rate = sample_rate
        self.n_fft = 2048 if sample_rate in (16000, 20000) else 4096
        self.stride = self.n_fft // 2
        # fused window * sqrt(A-weight) * rfft basis, built once with numpy
        self.basis, self.n_blocks = _build_basis(sample_rate, self.n_fft)
        self._mix_fn = jax.jit(functools.partial(
            _mix_sounds_impl, n_fft=self.n_fft, stride=self.stride,
            n_blocks=self.n_blocks))

    def mix_sounds(self, sound1, sound2, r):
        return self._mix_fn(sound1, sound2, jnp.asarray(r, jnp.float32),
                            self.basis)

    def __call__(self, sound1, sound2, r):
        return self.mix_sounds(sound1, sound2, r)


if __name__ == "__main__":
    key = jax.random.PRNGKey(0)
    k1, k2 = jax.random.split(key)

    fs = 16000                      # -> n_fft = 2048, stride = 1024
    L = 16384                       # 15 analysis frames per sound, 32x512 mix tile
    sound1 = 0.10 * jax.random.normal(k1, (1, L), jnp.float32)   # mono: (1, L)
    sound2 = 0.05 * jax.random.normal(k2, (1, L), jnp.float32)
    r = 0.4

    aug = BCAugmentorPallas(sample_rate=fs)
    mixed = aug(sound1, sound2, r)
    jax.block_until_ready(mixed)
    assert mixed.shape == sound1.shape and mixed.dtype == jnp.float32
    assert bool(jnp.all(jnp.isfinite(mixed)))
    print("KERNEL_OK")
</pallas_src>

<mosaic_0001>
module attributes {stable_mosaic.version = 11 : i64} {
  func.func @_gain_kernel(%arg0: i32, %arg1: i32, %arg2: memref<32x2048xbf16, #tpu.memory_space<vmem>>, %arg3: memref<2048x512xbf16, #tpu.memory_space<vmem>>, %arg4: memref<32x1xf32, #tpu.memory_space<vmem>>, %arg5: memref<32x1xf32, #tpu.memory_space<vmem>>) attributes {dimension_semantics = [#tpu.dimension_semantics<parallel>, #tpu.dimension_semantics<arbitrary>], iteration_bounds = array<i64: 1, 5>, scalar_prefetch = 0 : i64, scratch_operands = 1 : i64, tpu.core_type = #tpu.core_type<tc>, window_params = [{transform_indices = @transform_0, window_bounds = array<i64: 32, 2048>}, {transform_indices = @transform_1, window_bounds = array<i64: 2048, 512>}, {transform_indices = @transform_2, window_bounds = array<i64: 32, 1>}]} {
    %c0_i32 = arith.constant 0 : i32
    %0 = arith.cmpi eq, %arg1, %c0_i32 : i32
    %1 = arith.extui %0 : i1 to i32
    %c0_i32_0 = arith.constant 0 : i32
    %2 = arith.cmpi ne, %1, %c0_i32_0 : i32
    scf.if %2 {
      %cst_10 = arith.constant 0.000000e+00 : f32
      %15 = vector.broadcast %cst_10 : f32 to vector<32x1xf32>
      %c0_11 = arith.constant 0 : index
      %c0_12 = arith.constant 0 : index
      %16 = vector.load %arg5[%c0_11, %c0_12] : memref<32x1xf32, #tpu.memory_space<vmem>>, vector<32x1xf32>
      tpu.vector_store %arg5[%c0_11, %c0_12], %15 {strides = array<i32>} : memref<32x1xf32, #tpu.memory_space<vmem>>, vector<32x1xf32>,
    } else {
    }
    %c0 = arith.constant 0 : index
    %c0_1 = arith.constant 0 : index
    %3 = vector.load %arg2[%c0, %c0_1] : memref<32x2048xbf16, #tpu.memory_space<vmem>>, vector<32x2048xbf16>
    %c0_2 = arith.constant 0 : index
    %c0_3 = arith.constant 0 : index
    %4 = vector.load %arg3[%c0_2, %c0_3] : memref<2048x512xbf16, #tpu.memory_space<vmem>>, vector<2048x512xbf16>
    %cst = arith.constant dense<0.000000e+00> : vector<32x512xf32>
    %5 = tpu.matmul %3, %4, %cst {dimension_numbers = #tpu.dot_dimension_numbers<[1], [0], [0], [1], [0, 0, 1, 1], [], []>} : vector<32x2048xbf16>, vector<2048x512xbf16>, vector<32x512xf32> -> vector<32x512xf32>
    %c0_4 = arith.constant 0 : index
    %c0_5 = arith.constant 0 : index
    %6 = vector.load %arg5[%c0_4, %c0_5] : memref<32x1xf32, #tpu.memory_space<vmem>>, vector<32x1xf32>
    %7 = arith.mulf %5, %5 : vector<32x512xf32>
    %cst_6 = arith.constant dense<0.000000e+00> : vector<32xf32>
    %8 = vector.multi_reduction <add>, %7, %cst_6 [1] : vector<32x512xf32> to vector<32xf32>
    %9 = vector.shape_cast %8 : vector<32xf32> to vector<32x1xf32>
    %10 = arith.addf %6, %9 : vector<32x1xf32>
    %c0_7 = arith.constant 0 : index
    %c0_8 = arith.constant 0 : index
    %11 = vector.load %arg5[%c0_7, %c0_8] : memref<32x1xf32, #tpu.memory_space<vmem>>, vector<32x1xf32>
    tpu.vector_store %arg5[%c0_7, %c0_8], %10 {strides = array<i32>} : memref<32x1xf32, #tpu.memory_space<vmem>>, vector<32x1xf32>,
    %c4_i32 = arith.constant 4 : i32
    %12 = arith.cmpi eq, %arg1, %c4_i32 : i32
    %13 = arith.extui %12 : i1 to i32
    %c0_i32_9 = arith.constant 0 : i32
    %14 = arith.cmpi ne, %13, %c0_i32_9 : i32
    scf.if %14 {
      %c0_10 = arith.constant 0 : index
      %c0_11 = arith.constant 0 : index
      %15 = vector.load %arg5[%c0_10, %c0_11] : memref<32x1xf32, #tpu.memory_space<vmem>>, vector<32x1xf32>
      %cst_12 = arith.constant 9.99999993E-9 : f32
      %16 = vector.broadcast %cst_12 : f32 to vector<32x1xf32>
      %17 = arith.maximumf %15, %16 : vector<32x1xf32>
      %18 = math.log %17 : vector<32x1xf32>
      %cst_13 = arith.constant 0.434294492 : f32
      %19 = vector.broadcast %cst_13 : f32 to vector<32x1xf32>
      %20 = arith.mulf %18, %19 : vector<32x1xf32>
      %cst_14 = arith.constant 1.000000e+01 : f32
      %21 = vector.broadcast %cst_14 : f32 to vector<32x1xf32>
      %22 = arith.mulf %21, %20 : vector<32x1xf32>
      %c0_15 = arith.constant 0 : index
      %c0_16 = arith.constant 0 : index
      %23 = vector.load %arg4[%c0_15, %c0_16] : memref<32x1xf32, #tpu.memory_space<vmem>>, vector<32x1xf32>
      tpu.vector_store %arg4[%c0_15, %c0_16], %22 {strides = array<i32>} : memref<32x1xf32, #tpu.memory_space<vmem>>, vector<32x1xf32>,
    } else {
    }
    return
  }
  func.func @transform_0(%arg0: i32, %arg1: i32) -> (i32, i32) {
    %c0_i32 = arith.constant 0 : i32
    %c0_i32_0 = arith.constant 0 : i32
    return %arg0, %c0_i32 : i32, i32
  }
  func.func @transform_1(%arg0: i32, %arg1: i32) -> (i32, i32) {
    %c0_i32 = arith.constant 0 : i32
    %c0_i32_0 = arith.constant 0 : i32
    return %c0_i32, %arg1 : i32, i32
  }
  func.func @transform_2(%arg0: i32, %arg1: i32) -> (i32, i32) {
    %c0_i32 = arith.constant 0 : i32
    %c0_i32_0 = arith.constant 0 : i32
    return %arg0, %c0_i32 : i32, i32
  }
}

module attributes {stable_mosaic.version = 11 : i64} {
  func.func @_mix_kernel(%arg0: i32, %arg1: memref<2xf32, #tpu.memory_space<smem>>, %arg2: memref<32x512xf32, #tpu.memory_space<vmem>>, %arg3: memref<32x512xf32, #tpu.memory_space<vmem>>, %arg4: memref<32x512xf32, #tpu.memory_space<vmem>>) attributes {dimension_semantics = [#tpu.dimension_semantics<parallel>], iteration_bounds = array<i64: 1>, scalar_prefetch = 0 : i64, scratch_operands = 0 : i64, tpu.core_type = #tpu.core_type<tc>, window_params = [{transform_indices = @transform_0, window_bounds = array<i64: 2>}, {transform_indices = @transform_1, window_bounds = array<i64: 32, 512>}, {transform_indices = @transform_2, window_bounds = array<i64: 32, 512>}, {transform_indices = @transform_3, window_bounds = array<i64: 32, 512>}]} {
    %c0 = arith.constant 0 : index
    %c0_0 = arith.constant 0 : index
    %0 = vector.load %arg2[%c0, %c0_0] : memref<32x512xf32, #tpu.memory_space<vmem>>, vector<32x512xf32>
    %c0_1 = arith.constant 0 : index
    %1 = memref.load %arg1[%c0_1] : memref<2xf32, #tpu.memory_space<smem>>
    %2 = vector.broadcast %1 : f32 to vector<32x512xf32>
    %3 = arith.mulf %0, %2 : vector<32x512xf32>
    %c0_2 = arith.constant 0 : index
    %c0_3 = arith.constant 0 : index
    %4 = vector.load %arg3[%c0_2, %c0_3] : memref<32x512xf32, #tpu.memory_space<vmem>>, vector<32x512xf32>
    %c1 = arith.constant 1 : index
    %5 = memref.load %arg1[%c1] : memref<2xf32, #tpu.memory_space<smem>>
    %6 = vector.broadcast %5 : f32 to vector<32x512xf32>
    %7 = arith.mulf %4, %6 : vector<32x512xf32>
    %8 = arith.addf %3, %7 : vector<32x512xf32>
    %c0_4 = arith.constant 0 : index
    %c0_5 = arith.constant 0 : index
    %9 = vector.load %arg4[%c0_4, %c0_5] : memref<32x512xf32, #tpu.memory_space<vmem>>, vector<32x512xf32>
    tpu.vector_store %arg4[%c0_4, %c0_5], %8 {strides = array<i32>} : memref<32x512xf32, #tpu.memory_space<vmem>>, vector<32x512xf32>,
    return
  }
  func.func @transform_0(%arg0: i32) -> i32 {
    %c0_i32 = arith.constant 0 : i32
    %c0_i32_0 = arith.constant 0 : i32
    return %c0_i32 : i32
  }
  func.func @transform_1(%arg0: i32) -> (i32, i32) {
    %c0_i32 = arith.constant 0 : i32
    %c0_i32_0 = arith.constant 0 : i32
    return %arg0, %c0_i32 : i32, i32
  }
  func.func @transform_2(%arg0: i32) -> (i32, i32) {
    %c0_i32 = arith.constant 0 : i32
    %c0_i32_0 = arith.constant 0 : i32
    return %arg0, %c0_i32 : i32, i32
  }
  func.func @transform_3(%arg0: i32) -> (i32, i32) {
    %c0_i32 = arith.constant 0 : i32
    %c0_i32_0 = arith.constant 0 : i32
    return %arg0, %c0_i32 : i32, i32
  }
}

</mosaic_0001>

<llo_original>
// kernel: _mix_sounds_impl.3
$region0: #{_mix_sounds_impl.3}
  #allocation0 [shape = 'u32[]', space=smem, size = 0x4, offset = 0x4, fixed_abs, tag = 'smem constant byte address 0x4 - core index']
  #allocation1 [shape = 'u32[144,128]{1,0:T(1,128)}', space=vmem, size = 0x12000, scoped, tag = 'internal scratch']
  %s0 = inlined_call_operand.vmem [shape: f32[2], index: 0, kind: input, shape index: {}]
  %s1 = inlined_call_operand.vmem [shape: f32[32,512], index: 1, kind: input, shape index: {}]
  %s2 = inlined_call_operand.vmem [shape: f32[32,512], index: 2, kind: input, shape index: {}]
  %s3 = inlined_call_operand.vmem [shape: f32[32,512], index: 3, kind: output, shape index: {}]
  %s4 = sld [smem:[#allocation0]]
  $region26: #{_mix_sounds_impl.3} parent=0
    _
  %s6 = ssub.s32 1, %s4
  %s7 = scalar_select 0, %s6, %s4
  $region1: #{_mix_sounds_impl.3} parent=0
    #allocation2 [shape = 'u8[512]{0}', space=smem, size = 0x200, scoped, tag = 'input window, operand 0, single buffered']
    #allocation3 [shape = 's32[1]{0}', space=sflag, size = 0x4, scoped, tag = 'scoped memory for _mix_sounds_impl.3']
    %8 = vsyncpa [#allocation3], 0
    // Predicated region
    $region2: #{_mix_sounds_impl.3} parent=1 // pred_check
      _
    $region3: #{_mix_sounds_impl.3} parent=1 // pred_check_branch
      %10 = sbr.rel (0) target = $region5
    $region4: #{_mix_sounds_impl.3} parent=1 // pred_region
      %s12 = ssub.s32 16, 16
      %13 = vsyncadd [#allocation3], %s12
      %s15 = sshll.u32 %s0, 4
      %s16 = int_to_ptr.vmem [resolvable:$true] %s15
      %18 = dma.vmem_to_smem %s16, 16, [#allocation2], [#allocation3]
    $region5: #{_mix_sounds_impl.3} parent=1 // pred_fallthru
      _
    // Predicated region
    $region6: #{_mix_sounds_impl.3} parent=1 // pred_check
      _
    $region7: #{_mix_sounds_impl.3} parent=1 // pred_check_branch
      %20 = sbr.rel (0) target = $region9
    $region8: #{_mix_sounds_impl.3} parent=1 // pred_region
      _
    $region9: #{_mix_sounds_impl.3} parent=1 // pred_fallthru
      _
    // Predicated region
    $region10: #{_mix_sounds_impl.3} parent=1 // pred_check
      _
    $region11: #{_mix_sounds_impl.3} parent=1 // pred_check_branch
      %22 = sbr.rel (0) target = $region13
    $region12: #{_mix_sounds_impl.3} parent=1 // pred_region
      _
    $region13: #{_mix_sounds_impl.3} parent=1 // pred_fallthru
      _
    // Predicated region
    $region14: #{_mix_sounds_impl.3} parent=1 // pred_check
      _
    $region15: #{_mix_sounds_impl.3} parent=1 // pred_check_branch
      %24 = sbr.rel (0) target = $region17
    $region16: #{_mix_sounds_impl.3} parent=1 // pred_region
      %25 = dma.done [#allocation3], 16
    $region17: #{_mix_sounds_impl.3} parent=1 // pred_fallthru
      _
    %26 = sfence
    %v27 = vld [vmem:[%s1] sm:$0xff]
    %v28 = vld [vmem:[%s1 + $0x8] sm:$0xff]
    %v29 = vld [vmem:[%s1 + $0x10] sm:$0xff]
    %v30 = vld [vmem:[%s1 + $0x18] sm:$0xff]
    %v31 = vld [vmem:[%s1 + $0x20] sm:$0xff]
    %v32 = vld [vmem:[%s1 + $0x28] sm:$0xff]
    %v33 = vld [vmem:[%s1 + $0x30] sm:$0xff]
    %v34 = vld [vmem:[%s1 + $0x38] sm:$0xff]
    %v35 = vld [vmem:[%s1 + $0x40] sm:$0xff]
    %v36 = vld [vmem:[%s1 + $0x48] sm:$0xff]
    %v37 = vld [vmem:[%s1 + $0x50] sm:$0xff]
    %v38 = vld [vmem:[%s1 + $0x58] sm:$0xff]
    %v39 = vld [vmem:[%s1 + $0x60] sm:$0xff]
    %v40 = vld [vmem:[%s1 + $0x68] sm:$0xff]
    %v41 = vld [vmem:[%s1 + $0x70] sm:$0xff]
    %v42 = vld [vmem:[%s1 + $0x78] sm:$0xff]
    %s43 = sld [smem:[#allocation2]]
    %v44 = vstv %s43
    %v45 = vmul.f32 %v27, %v44
    %v46 = vmul.f32 %v28, %v44
    %v47 = vmul.f32 %v29, %v44
    %v48 = vmul.f32 %v30, %v44
    %v49 = vmul.f32 %v31, %v44
    %v50 = vmul.f32 %v32, %v44
    %v51 = vmul.f32 %v33, %v44
    %v52 = vmul.f32 %v34, %v44
    %v53 = vmul.f32 %v35, %v44
    %v54 = vmul.f32 %v36, %v44
    %v55 = vmul.f32 %v37, %v44
    %v56 = vmul.f32 %v38, %v44
    %v57 = vmul.f32 %v39, %v44
    %v58 = vmul.f32 %v40, %v44
    %v59 = vmul.f32 %v41, %v44
    %v60 = vmul.f32 %v42, %v44
    %v61 = vld [vmem:[%s2] sm:$0xff]
    %v62 = vld [vmem:[%s2 + $0x8] sm:$0xff]
    %v63 = vld [vmem:[%s2 + $0x10] sm:$0xff]
    %v64 = vld [vmem:[%s2 + $0x18] sm:$0xff]
    %v65 = vld [vmem:[%s2 + $0x20] sm:$0xff]
    %v66 = vld [vmem:[%s2 + $0x28] sm:$0xff]
    %v67 = vld [vmem:[%s2 + $0x30] sm:$0xff]
    %v68 = vld [vmem:[%s2 + $0x38] sm:$0xff]
    %v69 = vld [vmem:[%s2 + $0x40] sm:$0xff]
    %v70 = vld [vmem:[%s2 + $0x48] sm:$0xff]
    %v71 = vld [vmem:[%s2 + $0x50] sm:$0xff]
    %v72 = vld [vmem:[%s2 + $0x58] sm:$0xff]
    %v73 = vld [vmem:[%s2 + $0x60] sm:$0xff]
    %v74 = vld [vmem:[%s2 + $0x68] sm:$0xff]
    %v75 = vld [vmem:[%s2 + $0x70] sm:$0xff]
    %v76 = vld [vmem:[%s2 + $0x78] sm:$0xff]
    %s77 = sld [smem:[#allocation2 + $0x1]]
    %v78 = vstv %s77
    %v79 = vmul.f32 %v61, %v78
    %v80 = vmul.f32 %v62, %v78
    %v81 = vmul.f32 %v63, %v78
    %v82 = vmul.f32 %v64, %v78
    %v83 = vmul.f32 %v65, %v78
    %v84 = vmul.f32 %v66, %v78
    %v85 = vmul.f32 %v67, %v78
    %v86 = vmul.f32 %v68, %v78
    %v87 = vmul.f32 %v69, %v78
    %v88 = vmul.f32 %v70, %v78
    %v89 = vmul.f32 %v71, %v78
    %v90 = vmul.f32 %v72, %v78
    %v91 = vmul.f32 %v73, %v78
    %v92 = vmul.f32 %v74, %v78
    %v93 = vmul.f32 %v75, %v78
    %v94 = vmul.f32 %v76, %v78
    %v95 = vadd.f32 %v45, %v79
    %v96 = vadd.f32 %v46, %v80
    %v97 = vadd.f32 %v47, %v81
    %v98 = vadd.f32 %v48, %v82
    %v99 = vadd.f32 %v49, %v83
    %v100 = vadd.f32 %v50, %v84
    %v101 = vadd.f32 %v51, %v85
    %v102 = vadd.f32 %v52, %v86
    %v103 = vadd.f32 %v53, %v87
    %v104 = vadd.f32 %v54, %v88
    %v105 = vadd.f32 %v55, %v89
    %v106 = vadd.f32 %v56, %v90
    %v107 = vadd.f32 %v57, %v91
    %v108 = vadd.f32 %v58, %v92
    %v109 = vadd.f32 %v59, %v93
    %v110 = vadd.f32 %v60, %v94
    %111 = vst [vmem:[%s3] sm:$0xff] %v95
    %112 = vst [vmem:[%s3 + $0x8] sm:$0xff] %v96
    %113 = vst [vmem:[%s3 + $0x10] sm:$0xff] %v97
    %114 = vst [vmem:[%s3 + $0x18] sm:$0xff] %v98
    %115 = vst [vmem:[%s3 + $0x20] sm:$0xff] %v99
    %116 = vst [vmem:[%s3 + $0x28] sm:$0xff] %v100
    %117 = vst [vmem:[%s3 + $0x30] sm:$0xff] %v101
    %118 = vst [vmem:[%s3 + $0x38] sm:$0xff] %v102
    %119 = vst [vmem:[%s3 + $0x40] sm:$0xff] %v103
    %120 = vst [vmem:[%s3 + $0x48] sm:$0xff] %v104
    %121 = vst [vmem:[%s3 + $0x50] sm:$0xff] %v105
    %122 = vst [vmem:[%s3 + $0x58] sm:$0xff] %v106
    %123 = vst [vmem:[%s3 + $0x60] sm:$0xff] %v107
    %124 = vst [vmem:[%s3 + $0x68] sm:$0xff] %v108
    %125 = vst [vmem:[%s3 + $0x70] sm:$0xff] %v109
    %126 = vst [vmem:[%s3 + $0x78] sm:$0xff] %v110
    // Predicated region
    $region18: #{_mix_sounds_impl.3} parent=1 // pred_check
      _
    $region19: #{_mix_sounds_impl.3} parent=1 // pred_check_branch
      %128 = sbr.rel (0) target = $region21
    $region20: #{_mix_sounds_impl.3} parent=1 // pred_region
      _
    $region21: #{_mix_sounds_impl.3} parent=1 // pred_fallthru
      _
    // Predicated region
    $region22: #{_mix_sounds_impl.3} parent=1 // pred_check
      _
    $region23: #{_mix_sounds_impl.3} parent=1 // pred_check_branch
      %130 = sbr.rel (0) target = $region25
    $region24: #{_mix_sounds_impl.3} parent=1 // pred_region
      _
    $region25: #{_mix_sounds_impl.3} parent=1 // pred_fallthru
      _
    %131 = vsyncpa [#allocation3], 1

// kernel: _mix_sounds_impl.2
$region0: #{_mix_sounds_impl.2}
  #allocation0 [shape = 'u32[]', space=smem, size = 0x4, offset = 0x4, fixed_abs, tag = 'smem constant byte address 0x4 - core index']
  #allocation1 [shape = 'u32[144,128]{1,0:T(1,128)}', space=vmem, size = 0x12000, scoped, tag = 'internal scratch']
  #allocation2 [shape = 'f32[32,1]{1,0:T(8,128)}', space=vmem, size = 0x4000, scoped, tag = 'scratch operand']
  %s0 = inlined_call_operand.vmem [shape: bf16[32,2048], index: 0, kind: input, shape index: {}]
  %s1 = inlined_call_operand.hbm [shape: bf16[2048,2560], index: 1, kind: input, shape index: {}]
  %s2 = inlined_call_operand.vmem [shape: f32[32,1], index: 2, kind: output, shape index: {}]
  %s3 = sld [smem:[#allocation0]]
  $region53: #{_mix_sounds_impl.2} parent=0
    _
  %s5 = ssub.s32 1, %s3
  %s6 = scalar_select 0, %s5, %s3
  $region1: #{_mix_sounds_impl.2} parent=0
    #allocation3 [shape = 'u8[4194304]{0}', space=vmem, size = 0x400000, scoped, tag = 'input window, operand 1']
    #allocation4 [shape = 's32[2]{0}', space=sflag, size = 0x8, scoped, tag = 'scoped memory for _mix_sounds_impl.2']
    %7 = vsyncpa [#allocation4], 0
    %s8 = scalar_lea.sflag [#allocation4], 1
    %9 = vsyncpa %s8, 0
    loop: start=0, step=1, limit=7
    $region2: #{_mix_sounds_impl.2} parent=1 // loop_pre_header
      _
    $region3: #{_mix_sounds_impl.2} parent=1 // loop_header
      %s11 = sphi 0, %s15
      %p12 = scmp.ge.s32.totalorder %s11, 7
      %s18 = sphi 0, %s30
      %s19 = sphi 0, %s26
      %s20 = sphi 0, %s18
      %s21 = sphi 0, %s19
      %s22 = sphi 0, %s20
      %s23 = sphi 0, %s21
      %s33 = sphi 0, %s35
      %s36 = sphi 0, %s33
      %s37 = sphi 0, %s36
      %s53 = sphi 0, %s37
      %s59 = sphi 0, %s61
      %s62 = sphi 0, %s59
      %s63 = sphi 0, %s62
      %s79 = sphi 0, %s63
      %s85 = sphi 0, %s87
      %s88 = sphi 0, %s85
      %s89 = sphi 0, %s88
      %s105 = sphi 0, %s89
    $region4: #{_mix_sounds_impl.2} parent=1 // loop_header_branch
      %14 = sbr.rel (%p12) target = $region8
    $region5: #{_mix_sounds_impl.2} parent=1 // loop_body
      %s16 = ssub.s32 %s11, 1
      %s17 = ssub.s32 %s11, 2
      %s24 = sadd.s32 1, %s19
      %p25 = scmp.ge.s32.totalorder %s24, 5
      %s26 = scalar_select %p25, 0, %s24
      %s27 = sadd.s32 1, %s18
      %s28 = scalar_select %p25, %s27, %s18
      %p29 = scmp.ge.s32.totalorder %s28, 1
      %s30 = scalar_select %p29, 0, %s28
      %s31 = ssub.s32 %s18, %s30
      %p32 = scmp.eq.s32.totalorder %s31, 0
      %s34 = sadd.s32 %s33, 1
      %s35 = scalar_select %p32, %s33, %s34
      %p38 = pneg %p32
      %p39 = scmp.eq.s32.totalorder %s11, 4
      %p40 = por %p38, %p39
      %p41 = scmp.ne.s32.totalorder %s33, %s36
      %p42 = scmp.eq.s32.totalorder %s11, 0
      %p43 = por %p41, %p42
      %p44 = scmp.ne.s32.totalorder %s33, %s36
      %p45 = scmp.eq.s32.totalorder %s16, 4
      %p46 = por %p44, %p45
      %p47 = scmp.ne.s32.totalorder %s36, %s37
      %p48 = scmp.eq.s32.totalorder %s16, 0
      %p49 = por %p47, %p48
      %p50 = scmp.ne.s32.totalorder %s36, %s37
      %p51 = scmp.eq.s32.totalorder %s17, 4
      %p52 = por %p50, %p51
      %p54 = scmp.ne.s32.totalorder %s37, %s53
      %p55 = scmp.eq.s32.totalorder %s17, 0
      %p56 = por %p54, %p55
      %s57 = ssub.s32 %s19, %s26
      %p58 = scmp.eq.s32.totalorder %s57, 0
      %s60 = sadd.s32 %s59, 1
      %s61 = scalar_select %p58, %s59, %s60
      %p64 = pneg %p58
      %p65 = scmp.eq.s32.totalorder %s11, 4
      %p66 = por %p64, %p65
      %p67 = scmp.ne.s32.totalorder %s59, %s62
      %p68 = scmp.eq.s32.totalorder %s11, 0
      %p69 = por %p67, %p68
      %p70 = scmp.ne.s32.totalorder %s59, %s62
      %p71 = scmp.eq.s32.totalorder %s16, 4
      %p72 = por %p70, %p71
      %p73 = scmp.ne.s32.totalorder %s62, %s63
      %p74 = scmp.eq.s32.totalorder %s16, 0
      %p75 = por %p73, %p74
      %p76 = scmp.ne.s32.totalorder %s62, %s63
      %p77 = scmp.eq.s32.totalorder %s17, 4
      %p78 = por %p76, %p77
      %p80 = scmp.ne.s32.totalorder %s63, %s79
      %p81 = scmp.eq.s32.totalorder %s17, 0
      %p82 = por %p80, %p81
      %s83 = ssub.s32 %s18, %s30
      %p84 = scmp.eq.s32.totalorder %s83, 0
      %s86 = sadd.s32 %s85, 1
      %s87 = scalar_select %p84, %s85, %s86
      %p90 = pneg %p84
      %p91 = scmp.eq.s32.totalorder %s11, 4
      %p92 = por %p90, %p91
      %p93 = scmp.ne.s32.totalorder %s85, %s88
      %p94 = scmp.eq.s32.totalorder %s11, 0
      %p95 = por %p93, %p94
      %p96 = scmp.ne.s32.totalorder %s85, %s88
      %p97 = scmp.eq.s32.totalorder %s16, 4
      %p98 = por %p96, %p97
      %p99 = scmp.ne.s32.totalorder %s88, %s89
      %p100 = scmp.eq.s32.totalorder %s16, 0
      %p101 = por %p99, %p100
      %p102 = scmp.ne.s32.totalorder %s88, %s89
      %p103 = scmp.eq.s32.totalorder %s17, 4
      %p104 = por %p102, %p103
      %p106 = scmp.ne.s32.totalorder %s89, %s105
      %p107 = scmp.eq.s32.totalorder %s17, 0
      %p108 = por %p106, %p107
      %p109 = scmp.le.s32.totalorder 1, %s11
      %p110 = scmp.lt.s32.totalorder %s11, 6
      %p111 = pnand %p109, %p110
      %p112 = pneg %p111
      // Predicated region
      $region9: #{_mix_sounds_impl.2} parent=5 // pred_check
        _
      $region10: #{_mix_sounds_impl.2} parent=5 // pred_check_branch
        %114 = sbr.rel (%p111) target = $region12
      $region11: #{_mix_sounds_impl.2} parent=5 // pred_region
        %s115 = ssub.s32 %s11, 1
        // Predicated region
        $region13: #{_mix_sounds_impl.2} parent=11 // pred_check
          %p116 = pneg %p49
        $region14: #{_mix_sounds_impl.2} parent=11 // pred_check_branch
          %118 = sbr.rel (%p116) target = $region16
        $region15: #{_mix_sounds_impl.2} parent=11 // pred_region
          %s119 = smul.u32 4, %s20
          %p120 = scmp.lt.s32.totalorder %s119, 3
          %s121 = scalar_select %p120, %s119, 3
          %s122 = smul.addr %s121, 16
          %s123 = smul.addr %s122, 4
          %s124 = scalar_lea.vmem %s0, %s123
          %s125 = smul.u32 4, %s20
        $region16: #{_mix_sounds_impl.2} parent=11 // pred_fallthru
          _
      $region12: #{_mix_sounds_impl.2} parent=5 // pred_fallthru
        _
      %p126 = scmp.lt.s32.totalorder %s11, 5
      // Predicated region
      $region17: #{_mix_sounds_impl.2} parent=5 // pred_check
        %p127 = pneg %p126
      $region18: #{_mix_sounds_impl.2} parent=5 // pred_check_branch
        %129 = sbr.rel (%p127) target = $region20
      $region19: #{_mix_sounds_impl.2} parent=5 // pred_region
        // Predicated region
        $region21: #{_mix_sounds_impl.2} parent=19 // pred_check
          %p130 = pneg %p69
        $region22: #{_mix_sounds_impl.2} parent=19 // pred_check_branch
          %132 = sbr.rel (%p130) target = $region24
        $region23: #{_mix_sounds_impl.2} parent=19 // pred_region
          %s133 = sand.u32 %s59, 1
          %s134 = scalar_lea.sflag [#allocation4], %s133
          %s135 = sand.u32 %s59, 1
          %s136 = smul.addr %s135, 4096
          %s137 = scalar_lea.vmem [#allocation3], %s136
          %s138 = smul.u32 4, %s19
          %s140 = ssub.s32 65536, 65536
          %141 = vsyncadd %s134, %s140
          %s142 = smul.addr %s138, 64
          %s143 = scalar_lea.hbm %s1, %s142
          %s144 = sshll.u32 %s137, 4
          %s145 = int_to_ptr.vmem [resolvable:$true] %s144
          %150 = dma.hbm_to_vmem [thread:$0]  %s143, 65536, %s145, %s134, 1280, 256, 16
        $region24: #{_mix_sounds_impl.2} parent=19 // pred_fallthru
          _
      $region20: #{_mix_sounds_impl.2} parent=5 // pred_fallthru
        _
      %p151 = scmp.le.s32.totalorder 1, %s11
      %p152 = scmp.lt.s32.totalorder %s11, 6
      %p153 = pnand %p151, %p152
      %p154 = pneg %p153
      // Predicated region
      $region25: #{_mix_sounds_impl.2} parent=5 // pred_check
        _
      $region26: #{_mix_sounds_impl.2} parent=5 // pred_check_branch
        %156 = sbr.rel (%p153) target = $region28
      $region27: #{_mix_sounds_impl.2} parent=5 // pred_region
        %s157 = ssub.s32 %s11, 1
        %s158 = sand.u32 %s62, 1
        %s159 = scalar_lea.sflag [#allocation4], %s158
        %s160 = sand.u32 %s62, 1
        %s161 = smul.addr %s160, 4096
        %s162 = scalar_lea.vmem [#allocation3], %s161
        // Predicated region
        $region29: #{_mix_sounds_impl.2} parent=27 // pred_check
          %p163 = pneg %p75
        $region30: #{_mix_sounds_impl.2} parent=27 // pred_check_branch
          %165 = sbr.rel (%p163) target = $region32
        $region31: #{_mix_sounds_impl.2} parent=27 // pred_region
          %166 = dma.done %s159, 65536
        $region32: #{_mix_sounds_impl.2} parent=27 // pred_fallthru
          _
        %s167 = smul.u32 4, %s20
        %p168 = scmp.lt.s32.totalorder %s167, 3
        %s169 = scalar_select %p168, %s167, 3
        %s170 = smul.addr %s169, 16
        %s171 = smul.addr %s170, 4
        %s172 = scalar_lea.vmem %s0, %s171
        %p173 = pneg %p49
        %p174 = pneg %p46
        %s175 = sand.u32 %s62, 1
        %s176 = scalar_lea.sflag [#allocation4], %s175
        %s177 = sand.u32 %s62, 1
        %s178 = smul.addr %s177, 4096
        %s179 = scalar_lea.vmem [#allocation3], %s178
        %p180 = pneg %p75
        %p181 = pneg %p72
        %p182 = pneg %p101
        %p183 = pneg %p98
        %s184 = smul.u32 4, %s20
        %p185 = scmp.lt.s32.totalorder %s184, 3
        %s186 = scalar_select %p185, %s184, 3
        %s187 = smul.addr %s186, 8
        %s188 = scalar_lea.vmem %s2, %s187
        %s189 = smul.u32 4, %s20
        %p190 = scmp.lt.s32.totalorder %s189, 3
        %s191 = scalar_select %p190, %s189, 3
        %s192 = smul.addr %s191, 16
        %s193 = smul.addr %s192, 4
        %s194 = scalar_lea.vmem %s0, %s193
        %s195 = smul.u32 4, %s20
        %s196 = smul.u32 4, %s21
        %s197 = smul.u32 4, %s20
        %p198 = scmp.lt.s32.totalorder %s197, 3
        %s199 = scalar_select %p198, %s197, 3
        %s200 = smul.addr %s199, 8
        %s201 = scalar_lea.vmem %s2, %s200
        %s202 = smul.u32 4, %s20
        %p203 = scmp.eq.s32.totalorder %s21, 0
        // Predicated region
        $region33: #{_mix_sounds_impl.2} parent=27 // pred_check
          %p204 = pneg %p203
        $region34: #{_mix_sounds_impl.2} parent=27 // pred_check_branch
          %206 = sbr.rel (%p204) target = $region36
        $region35: #{_mix_sounds_impl.2} parent=27 // pred_region
          %vm207 = vcmask 7168
          %208 = vst.msk [vmem:[#allocation2] sm:$0xff] %vm207, 0.0
          %209 = vst.msk [vmem:[#allocation2 + $0x8] sm:$0xff] %vm207, 0.0
          %210 = vst.msk [vmem:[#allocation2 + $0x10] sm:$0xff] %vm207, 0.0
          %211 = vst.msk [vmem:[#allocation2 + $0x18] sm:$0xff] %vm207, 0.0
        $region36: #{_mix_sounds_impl.2} parent=27 // pred_fallthru
          _
        %v212 = vld [vmem:[%s194] sm:$0xff]
        %v213 = vld [vmem:[%s194 + $0x8] sm:$0xff]
        %v214 = vld [vmem:[%s194 + $0x10] sm:$0xff]
        %v215 = vld [vmem:[%s194 + $0x18] sm:$0xff]
        %v216 = vld [vmem:[%s194 + $0x20] sm:$0xff]
        %v217 = vld [vmem:[%s194 + $0x28] sm:$0xff]
        %v218 = vld [vmem:[%s194 + $0x30] sm:$0xff]
        %v219 = vld [vmem:[%s194 + $0x38] sm:$0xff]
        %v220 = vld [vmem:[%s194 + $0x40] sm:$0xff]
        %v221 = vld [vmem:[%s194 + $0x48] sm:$0xff]
        %v222 = vld [vmem:[%s194 + $0x50] sm:$0xff]
        %v223 = vld [vmem:[%s194 + $0x58] sm:$0xff]
        %v224 = vld [vmem:[%s194 + $0x60] sm:$0xff]
        %v225 = vld [vmem:[%s194 + $0x68] sm:$0xff]
        %v226 = vld [vmem:[%s194 + $0x70] sm:$0xff]
        %v227 = vld [vmem:[%s194 + $0x78] sm:$0xff]
        %v228 = vld [vmem:[%s194 + $0x80] sm:$0xff]
        %v229 = vld [vmem:[%s194 + $0x88] sm:$0xff]
        %v230 = vld [vmem:[%s194 + $0x90] sm:$0xff]
        %v231 = vld [vmem:[%s194 + $0x98] sm:$0xff]
        %v232 = vld [vmem:[%s194 + $0xa0] sm:$0xff]
        %v233 = vld [vmem:[%s194 + $0xa8] sm:$0xff]
        %v234 = vld [vmem:[%s194 + $0xb0] sm:$0xff]
        %v235 = vld [vmem:[%s194 + $0xb8] sm:$0xff]
        %v236 = vld [vmem:[%s194 + $0xc0] sm:$0xff]
        %v237 = vld [vmem:[%s194 + $0xc8] sm:$0xff]
        %v238 = vld [vmem:[%s194 + $0xd0] sm:$0xff]
        %v239 = vld [vmem:[%s194 + $0xd8] sm:$0xff]
        %v240 = vld [vmem:[%s194 + $0xe0] sm:$0xff]
        %v241 = vld [vmem:[%s194 + $0xe8] sm:$0xff]
        %v242 = vld [vmem:[%s194 + $0xf0] sm:$0xff]
        %v243 = vld [vmem:[%s194 + $0xf8] sm:$0xff]
        %v244 = vld [vmem:[%s162] sm:$0xff]
        %v245 = vld [vmem:[%s162 + $0x8] sm:$0xff]
        %v246 = vld [vmem:[%s162 + $0x10] sm:$0xff]
        %v247 = vld [vmem:[%s162 + $0x18] sm:$0xff]
        %v248 = vld [vmem:[%s162 + $0x20] sm:$0xff]
        %v249 = vld [vmem:[%s162 + $0x28] sm:$0xff]
        %v250 = vld [vmem:[%s162 + $0x30] sm:$0xff]
        %v251 = vld [vmem:[%s162 + $0x38] sm:$0xff]
        %v252 = vld [vmem:[%s162 + $0x40] sm:$0xff]
        %v253 = vld [vmem:[%s162 + $0x48] sm:$0xff]
        %v254 = vld [vmem:[%s162 + $0x50] sm:$0xff]
        %v255 = vld [vmem:[%s162 + $0x58] sm:$0xff]
        %v256 = vld [vmem:[%s162 + $0x60] sm:$0xff]
        %v257 = vld [vmem:[%s162 + $0x68] sm:$0xff]
        %v258 = vld [vmem:[%s162 + $0x70] sm:$0xff]
        %v259 = vld [vmem:[%s162 + $0x78] sm:$0xff]
        %v260 = vld [vmem:[%s162 + $0x80] sm:$0xff]
        %v261 = vld [vmem:[%s162 + $0x88] sm:$0xff]
        %v262 = vld [vmem:[%s162 + $0x90] sm:$0xff]
        %v263 = vld [vmem:[%s162 + $0x98] sm:$0xff]
        %v264 = vld [vmem:[%s162 + $0xa0] sm:$0xff]
        %v265 = vld [vmem:[%s162 + $0xa8] sm:$0xff]
        %v266 = vld [vmem:[%s162 + $0xb0] sm:$0xff]
        %v267 = vld [vmem:[%s162 + $0xb8] sm:$0xff]
        %v268 = vld [vmem:[%s162 + $0xc0] sm:$0xff]
        %v269 = vld [vmem:[%s162 + $0xc8] sm:$0xff]
        %v270 = vld [vmem:[%s162 + $0xd0] sm:$0xff]
        %v271 = vld [vmem:[%s162 + $0xd8] sm:$0xff]
        %v272 = vld [vmem:[%s162 + $0xe0] sm:$0xff]
        %v273 = vld [vmem:[%s162 + $0xe8] sm:$0xff]
        %v274 = vld [vmem:[%s162 + $0xf0] sm:$0xff]
        %v275 = vld [vmem:[%s162 + $0xf8] sm:$0xff]
        %v276 = vld [vmem:[%s162 + $0x100] sm:$0xff]
        %v277 = vld [vmem:[%s162 + $0x108] sm:$0xff]
        %v278 = vld [vmem:[%s162 + $0x110] sm:$0xff]
        %v279 = vld [vmem:[%s162 + $0x118] sm:$0xff]
        %v280 = vld [vmem:[%s162 + $0x120] sm:$0xff]
        %v281 = vld [vmem:[%s162 + $0x128] sm:$0xff]
        %v282 = vld [vmem:[%s162 + $0x130] sm:$0xff]
        %v283 = vld [vmem:[%s162 + $0x138] sm:$0xff]
        %v284 = vld [vmem:[%s162 + $0x140] sm:$0xff]
        %v285 = vld [vmem:[%s162 + $0x148] sm:$0xff]
        %v286 = vld [vmem:[%s162 + $0x150] sm:$0xff]
        %v287 = vld [vmem:[%s162 + $0x158] sm:$0xff]
        %v288 = vld [vmem:[%s162 + $0x160] sm:$0xff]
        %v289 = vld [vmem:[%s162 + $0x168] sm:$0xff]
        %v290 = vld [vmem:[%s162 + $0x170] sm:$0xff]
        %v291 = vld [vmem:[%s162 + $0x178] sm:$0xff]
        %v292 = vld [vmem:[%s162 + $0x180] sm:$0xff]
        %v293 = vld [vmem:[%s162 + $0x188] sm:$0xff]
        %v294 = vld [vmem:[%s162 + $0x190] sm:$0xff]
        %v295 = vld [vmem:[%s162 + $0x198] sm:$0xff]
        %v296 = vld [vmem:[%s162 + $0x1a0] sm:$0xff]
        %v297 = vld [vmem:[%s162 + $0x1a8] sm:$0xff]
        %v298 = vld [vmem:[%s162 + $0x1b0] sm:$0xff]
        %v299 = vld [vmem:[%s162 + $0x1b8] sm:$0xff]
        %v300 = vld [vmem:[%s162 + $0x1c0] sm:$0xff]
        %v301 = vld [vmem:[%s162 + $0x1c8] sm:$0xff]
        %v302 = vld [vmem:[%s162 + $0x1d0] sm:$0xff]
        %v303 = vld [vmem:[%s162 + $0x1d8] sm:$0xff]
        %v304 = vld [vmem:[%s162 + $0x1e0] sm:$0xff]
        %v305 = vld [vmem:[%s162 + $0x1e8] sm:$0xff]
        %v306 = vld [vmem:[%s162 + $0x1f0] sm:$0xff]
        %v307 = vld [vmem:[%s162 + $0x1f8] sm:$0xff]
        %v308 = vld [vmem:[%s162 + $0x200] sm:$0xff]
        %v309 = vld [vmem:[%s162 + $0x208] sm:$0xff]
        %v310 = vld [vmem:[%s162 + $0x210] sm:$0xff]
        %v311 = vld [vmem:[%s162 + $0x218] sm:$0xff]
        %v312 = vld [vmem:[%s162 + $0x220] sm:$0xff]
        %v313 = vld [vmem:[%s162 + $0x228] sm:$0xff]
        %v314 = vld [vmem:[%s162 + $0x230] sm:$0xff]
        %v315 = vld [vmem:[%s162 + $0x238] sm:$0xff]
        %v316 = vld [vmem:[%s162 + $0x240] sm:$0xff]
        %v317 = vld [vmem:[%s162 + $0x248] sm:$0xff]
        %v318 = vld [vmem:[%s162 + $0x250] sm:$0xff]
        %v319 = vld [vmem:[%s162 + $0x258] sm:$0xff]
        %v320 = vld [vmem:[%s162 + $0x260] sm:$0xff]
        %v321 = vld [vmem:[%s162 + $0x268] sm:$0xff]
        %v322 = vld [vmem:[%s162 + $0x270] sm:$0xff]
        %v323 = vld [vmem:[%s162 + $0x278] sm:$0xff]
        %v324 = vld [vmem:[%s162 + $0x280] sm:$0xff]
        %v325 = vld [vmem:[%s162 + $0x288] sm:$0xff]
        %v326 = vld [vmem:[%s162 + $0x290] sm:$0xff]
        %v327 = vld [vmem:[%s162 + $0x298] sm:$0xff]
        %v328 = vld [vmem:[%s162 + $0x2a0] sm:$0xff]
        %v329 = vld [vmem:[%s162 + $0x2a8] sm:$0xff]
        %v330 = vld [vmem:[%s162 + $0x2b0] sm:$0xff]
        %v331 = vld [vmem:[%s162 + $0x2b8] sm:$0xff]
        %v332 = vld [vmem:[%s162 + $0x2c0] sm:$0xff]
        %v333 = vld [vmem:[%s162 + $0x2c8] sm:$0xff]
        %v334 = vld [vmem:[%s162 + $0x2d0] sm:$0xff]
        %v335 = vld [vmem:[%s162 + $0x2d8] sm:$0xff]
        %v336 = vld [vmem:[%s162 + $0x2e0] sm:$0xff]
        %v337 = vld [vmem:[%s162 + $0x2e8] sm:$0xff]
        %v338 = vld [vmem:[%s162 + $0x2f0] sm:$0xff]
        %v339 = vld [vmem:[%s162 + $0x2f8] sm:$0xff]
        %v340 = vld [vmem:[%s162 + $0x300] sm:$0xff]
        %v341 = vld [vmem:[%s162 + $0x308] sm:$0xff]
        %v342 = vld [vmem:[%s162 + $0x310] sm:$0xff]
        %v343 = vld [vmem:[%s162 + $0x318] sm:$0xff]
        %v344 = vld [vmem:[%s162 + $0x320] sm:$0xff]
        %v345 = vld [vmem:[%s162 + $0x328] sm:$0xff]
        %v346 = vld [vmem:[%s162 + $0x330] sm:$0xff]
        %v347 = vld [vmem:[%s162 + $0x338] sm:$0xff]
        %v348 = vld [vmem:[%s162 + $0x340] sm:$0xff]
        %v349 = vld [vmem:[%s162 + $0x348] sm:$0xff]
        %v350 = vld [vmem:[%s162 + $0x350] sm:$0xff]
        %v351 = vld [vmem:[%s162 + $0x358] sm:$0xff]
        %v352 = vld [vmem:[%s162 + $0x360] sm:$0xff]
        %v353 = vld [vmem:[%s162 + $0x368] sm:$0xff]
        %v354 = vld [vmem:[%s162 + $0x370] sm:$0xff]
        %v355 = vld [vmem:[%s162 + $0x378] sm:$0xff]
        %v356 = vld [vmem:[%s162 + $0x380] sm:$0xff]
        %v357 = vld [vmem:[%s162 + $0x388] sm:$0xff]
        %v358 = vld [vmem:[%s162 + $0x390] sm:$0xff]
        %v359 = vld [vmem:[%s162 + $0x398] sm:$0xff]
        %v360 = vld [vmem:[%s162 + $0x3a0] sm:$0xff]
        %v361 = vld [vmem:[%s162 + $0x3a8] sm:$0xff]
        %v362 = vld [vmem:[%s162 + $0x3b0] sm:$0xff]
        %v363 = vld [vmem:[%s162 + $0x3b8] sm:$0xff]
        %v364 = vld [vmem:[%s162 + $0x3c0] sm:$0xff]
        %v365 = vld [vmem:[%s162 + $0x3c8] sm:$0xff]
        %v366 = vld [vmem:[%s162 + $0x3d0] sm:$0xff]
        %v367 = vld [vmem:[%s162 + $0x3d8] sm:$0xff]
        %v368 = vld [vmem:[%s162 + $0x3e0] sm:$0xff]
        %v369 = vld [vmem:[%s162 + $0x3e8] sm:$0xff]
        %v370 = vld [vmem:[%s162 + $0x3f0] sm:$0xff]
        %v371 = vld [vmem:[%s162 + $0x3f8] sm:$0xff]
        %v372 = vld [vmem:[%s162 + $0x400] sm:$0xff]
        %v373 = vld [vmem:[%s162 + $0x408] sm:$0xff]
        %v374 = vld [vmem:[%s162 + $0x410] sm:$0xff]
        %v375 = vld [vmem:[%s162 + $0x418] sm:$0xff]
        %v376 = vld [vmem:[%s162 + $0x420] sm:$0xff]
        %v377 = vld [vmem:[%s162 + $0x428] sm:$0xff]
        %v378 = vld [vmem:[%s162 + $0x430] sm:$0xff]
        %v379 = vld [vmem:[%s162 + $0x438] sm:$0xff]
        %v380 = vld [vmem:[%s162 + $0x440] sm:$0xff]
        %v381 = vld [vmem:[%s162 + $0x448] sm:$0xff]
        %v382 = vld [vmem:[%s162 + $0x450] sm:$0xff]
        %v383 = vld [vmem:[%s162 + $0x458] sm:$0xff]
        %v384 = vld [vmem:[%s162 + $0x460] sm:$0xff]
        %v385 = vld [vmem:[%s162 + $0x468] sm:$0xff]
        %v386 = vld [vmem:[%s162 + $0x470] sm:$0xff]
        %v387 = vld [vmem:[%s162 + $0x478] sm:$0xff]
        %v388 = vld [vmem:[%s162 + $0x480] sm:$0xff]
        %v389 = vld [vmem:[%s162 + $0x488] sm:$0xff]
        %v390 = vld [vmem:[%s162 + $0x490] sm:$0xff]
        %v391 = vld [vmem:[%s162 + $0x498] sm:$0xff]
        %v392 = vld [vmem:[%s162 + $0x4a0] sm:$0xff]
        %v393 = vld [vmem:[%s162 + $0x4a8] sm:$0xff]
        %v394 = vld [vmem:[%s162 + $0x4b0] sm:$0xff]
        %v395 = vld [vmem:[%s162 + $0x4b8] sm:$0xff]
        %v396 = vld [vmem:[%s162 + $0x4c0] sm:$0xff]
        %v397 = vld [vmem:[%s162 + $0x4c8] sm:$0xff]
        %v398 = vld [vmem:[%s162 + $0x4d0] sm:$0xff]
        %v399 = vld [vmem:[%s162 + $0x4d8] sm:$0xff]
        %v400 = vld [vmem:[%s162 + $0x4e0] sm:$0xff]
        %v401 = vld [vmem:[%s162 + $0x4e8] sm:$0xff]
        %v402 = vld [vmem:[%s162 + $0x4f0] sm:$0xff]
        %v403 = vld [vmem:[%s162 + $0x4f8] sm:$0xff]
        %v404 = vld [vmem:[%s162 + $0x500] sm:$0xff]
        %v405 = vld [vmem:[%s162 + $0x508] sm:$0xff]
        %v406 = vld [vmem:[%s162 + $0x510] sm:$0xff]
        %v407 = vld [vmem:[%s162 + $0x518] sm:$0xff]
        %v408 = vld [vmem:[%s162 + $0x520] sm:$0xff]
        %v409 = vld [vmem:[%s162 + $0x528] sm:$0xff]
        %v410 = vld [vmem:[%s162 + $0x530] sm:$0xff]
        %v411 = vld [vmem:[%s162 + $0x538] sm:$0xff]
        %v412 = vld [vmem:[%s162 + $0x540] sm:$0xff]
        %v413 = vld [vmem:[%s162 + $0x548] sm:$0xff]
        %v414 = vld [vmem:[%s162 + $0x550] sm:$0xff]
        %v415 = vld [vmem:[%s162 + $0x558] sm:$0xff]
        %v416 = vld [vmem:[%s162 + $0x560] sm:$0xff]
        %v417 = vld [vmem:[%s162 + $0x568] sm:$0xff]
        %v418 = vld [vmem:[%s162 + $0x570] sm:$0xff]
        %v419 = vld [vmem:[%s162 + $0x578] sm:$0xff]
        %v420 = vld [vmem:[%s162 + $0x580] sm:$0xff]
        %v421 = vld [vmem:[%s162 + $0x588] sm:$0xff]
        %v422 = vld [vmem:[%s162 + $0x590] sm:$0xff]
        %v423 = vld [vmem:[%s162 + $0x598] sm:$0xff]
        %v424 = vld [vmem:[%s162 + $0x5a0] sm:$0xff]
        %v425 = vld [vmem:[%s162 + $0x5a8] sm:$0xff]
        %v426 = vld [vmem:[%s162 + $0x5b0] sm:$0xff]
        %v427 = vld [vmem:[%s162 + $0x5b8] sm:$0xff]
        %v428 = vld [vmem:[%s162 + $0x5c0] sm:$0xff]
        %v429 = vld [vmem:[%s162 + $0x5c8] sm:$0xff]
        %v430 = vld [vmem:[%s162 + $0x5d0] sm:$0xff]
        %v431 = vld [vmem:[%s162 + $0x5d8] sm:$0xff]
        %v432 = vld [vmem:[%s162 + $0x5e0] sm:$0xff]
        %v433 = vld [vmem:[%s162 + $0x5e8] sm:$0xff]
        %v434 = vld [vmem:[%s162 + $0x5f0] sm:$0xff]
        %v435 = vld [vmem:[%s162 + $0x5f8] sm:$0xff]
        %v436 = vld [vmem:[%s162 + $0x600] sm:$0xff]
        %v437 = vld [vmem:[%s162 + $0x608] sm:$0xff]
        %v438 = vld [vmem:[%s162 + $0x610] sm:$0xff]
        %v439 = vld [vmem:[%s162 + $0x618] sm:$0xff]
        %v440 = vld [vmem:[%s162 + $0x620] sm:$0xff]
        %v441 = vld [vmem:[%s162 + $0x628] sm:$0xff]
        %v442 = vld [vmem:[%s162 + $0x630] sm:$0xff]
        %v443 = vld [vmem:[%s162 + $0x638] sm:$0xff]
        %v444 = vld [vmem:[%s162 + $0x640] sm:$0xff]
        %v445 = vld [vmem:[%s162 + $0x648] sm:$0xff]
        %v446 = vld [vmem:[%s162 + $0x650] sm:$0xff]
        %v447 = vld [vmem:[%s162 + $0x658] sm:$0xff]
        %v448 = vld [vmem:[%s162 + $0x660] sm:$0xff]
        %v449 = vld [vmem:[%s162 + $0x668] sm:$0xff]
        %v450 = vld [vmem:[%s162 + $0x670] sm:$0xff]
        %v451 = vld [vmem:[%s162 + $0x678] sm:$0xff]
        %v452 = vld [vmem:[%s162 + $0x680] sm:$0xff]
        %v453 = vld [vmem:[%s162 + $0x688] sm:$0xff]
        %v454 = vld [vmem:[%s162 + $0x690] sm:$0xff]
        %v455 = vld [vmem:[%s162 + $0x698] sm:$0xff]
        %v456 = vld [vmem:[%s162 + $0x6a0] sm:$0xff]
        %v457 = vld [vmem:[%s162 + $0x6a8] sm:$0xff]
        %v458 = vld [vmem:[%s162 + $0x6b0] sm:$0xff]
        %v459 = vld [vmem:[%s162 + $0x6b8] sm:$0xff]
        %v460 = vld [vmem:[%s162 + $0x6c0] sm:$0xff]
        %v461 = vld [vmem:[%s162 + $0x6c8] sm:$0xff]
        %v462 = vld [vmem:[%s162 + $0x6d0] sm:$0xff]
        %v463 = vld [vmem:[%s162 + $0x6d8] sm:$0xff]
        %v464 = vld [vmem:[%s162 + $0x6e0] sm:$0xff]
        %v465 = vld [vmem:[%s162 + $0x6e8] sm:$0xff]
        %v466 = vld [vmem:[%s162 + $0x6f0] sm:$0xff]
        %v467 = vld [vmem:[%s162 + $0x6f8] sm:$0xff]
        %v468 = vld [vmem:[%s162 + $0x700] sm:$0xff]
        %v469 = vld [vmem:[%s162 + $0x708] sm:$0xff]
        %v470 = vld [vmem:[%s162 + $0x710] sm:$0xff]
        %v471 = vld [vmem:[%s162 + $0x718] sm:$0xff]
        %v472 = vld [vmem:[%s162 + $0x720] sm:$0xff]
        %v473 = vld [vmem:[%s162 + $0x728] sm:$0xff]
        %v474 = vld [vmem:[%s162 + $0x730] sm:$0xff]
        %v475 = vld [vmem:[%s162 + $0x738] sm:$0xff]
        %v476 = vld [vmem:[%s162 + $0x740] sm:$0xff]
        %v477 = vld [vmem:[%s162 + $0x748] sm:$0xff]
        %v478 = vld [vmem:[%s162 + $0x750] sm:$0xff]
        %v479 = vld [vmem:[%s162 + $0x758] sm:$0xff]
        %v480 = vld [vmem:[%s162 + $0x760] sm:$0xff]
        %v481 = vld [vmem:[%s162 + $0x768] sm:$0xff]
        %v482 = vld [vmem:[%s162 + $0x770] sm:$0xff]
        %v483 = vld [vmem:[%s162 + $0x778] sm:$0xff]
        %v484 = vld [vmem:[%s162 + $0x780] sm:$0xff]
        %v485 = vld [vmem:[%s162 + $0x788] sm:$0xff]
        %v486 = vld [vmem:[%s162 + $0x790] sm:$0xff]
        %v487 = vld [vmem:[%s162 + $0x798] sm:$0xff]
        %v488 = vld [vmem:[%s162 + $0x7a0] sm:$0xff]
        %v489 = vld [vmem:[%s162 + $0x7a8] sm:$0xff]
        %v490 = vld [vmem:[%s162 + $0x7b0] sm:$0xff]
        %v491 = vld [vmem:[%s162 + $0x7b8] sm:$0xff]
        %v492 = vld [vmem:[%s162 + $0x7c0] sm:$0xff]
        %v493 = vld [vmem:[%s162 + $0x7c8] sm:$0xff]
        %v494 = vld [vmem:[%s162 + $0x7d0] sm:$0xff]
        %v495 = vld [vmem:[%s162 + $0x7d8] sm:$0xff]
        %v496 = vld [vmem:[%s162 + $0x7e0] sm:$0xff]
        %v497 = vld [vmem:[%s162 + $0x7e8] sm:$0xff]
        %v498 = vld [vmem:[%s162 + $0x7f0] sm:$0xff]
        %v499 = vld [vmem:[%s162 + $0x7f8] sm:$0xff]
        %v500 = vld [vmem:[%s162 + $0x800] sm:$0xff]
        %v501 = vld [vmem:[%s162 + $0x808] sm:$0xff]
        %v502 = vld [vmem:[%s162 + $0x810] sm:$0xff]
        %v503 = vld [vmem:[%s162 + $0x818] sm:$0xff]
        %v504 = vld [vmem:[%s162 + $0x820] sm:$0xff]
        %v505 = vld [vmem:[%s162 + $0x828] sm:$0xff]
        %v506 = vld [vmem:[%s162 + $0x830] sm:$0xff]
        %v507 = vld [vmem:[%s162 + $0x838] sm:$0xff]
        %v508 = vld [vmem:[%s162 + $0x840] sm:$0xff]
        %v509 = vld [vmem:[%s162 + $0x848] sm:$0xff]
        %v510 = vld [vmem:[%s162 + $0x850] sm:$0xff]
        %v511 = vld [vmem:[%s162 + $0x858] sm:$0xff]
        %v512 = vld [vmem:[%s162 + $0x860] sm:$0xff]
        %v513 = vld [vmem:[%s162 + $0x868] sm:$0xff]
        %v514 = vld [vmem:[%s162 + $0x870] sm:$0xff]
        %v515 = vld [vmem:[%s162 + $0x878] sm:$0xff]
        %v516 = vld [vmem:[%s162 + $0x880] sm:$0xff]
        %v517 = vld [vmem:[%s162 + $0x888] sm:$0xff]
        %v518 = vld [vmem:[%s162 + $0x890] sm:$0xff]
        %v519 = vld [vmem:[%s162 + $0x898] sm:$0xff]
        %v520 = vld [vmem:[%s162 + $0x8a0] sm:$0xff]
        %v521 = vld [vmem:[%s162 + $0x8a8] sm:$0xff]
        %v522 = vld [vmem:[%s162 + $0x8b0] sm:$0xff]
        %v523 = vld [vmem:[%s162 + $0x8b8] sm:$0xff]
        %v524 = vld [vmem:[%s162 + $0x8c0] sm:$0xff]
        %v525 = vld [vmem:[%s162 + $0x8c8] sm:$0xff]
        %v526 = vld [vmem:[%s162 + $0x8d0] sm:$0xff]
        %v527 = vld [vmem:[%s162 + $0x8d8] sm:$0xff]
        %v528 = vld [vmem:[%s162 + $0x8e0] sm:$0xff]
        %v529 = vld [vmem:[%s162 + $0x8e8] sm:$0xff]
        %v530 = vld [vmem:[%s162 + $0x8f0] sm:$0xff]
        %v531 = vld [vmem:[%s162 + $0x8f8] sm:$0xff]
        %v532 = vld [vmem:[%s162 + $0x900] sm:$0xff]
        %v533 = vld [vmem:[%s162 + $0x908] sm:$0xff]
        %v534 = vld [vmem:[%s162 + $0x910] sm:$0xff]
        %v535 = vld [vmem:[%s162 + $0x918] sm:$0xff]
        %v536 = vld [vmem:[%s162 + $0x920] sm:$0xff]
        %v537 = vld [vmem:[%s162 + $0x928] sm:$0xff]
        %v538 = vld [vmem:[%s162 + $0x930] sm:$0xff]
        %v539 = vld [vmem:[%s162 + $0x938] sm:$0xff]
        %v540 = vld [vmem:[%s162 + $0x940] sm:$0xff]
        %v541 = vld [vmem:[%s162 + $0x948] sm:$0xff]
        %v542 = vld [vmem:[%s162 + $0x950] sm:$0xff]
        %v543 = vld [vmem:[%s162 + $0x958] sm:$0xff]
        %v544 = vld [vmem:[%s162 + $0x960] sm:$0xff]
        %v545 = vld [vmem:[%s162 + $0x968] sm:$0xff]
        %v546 = vld [vmem:[%s162 + $0x970] sm:$0xff]
        %v547 = vld [vmem:[%s162 + $0x978] sm:$0xff]
        %v548 = vld [vmem:[%s162 + $0x980] sm:$0xff]
        %v549 = vld [vmem:[%s162 + $0x988] sm:$0xff]
        %v550 = vld [vmem:[%s162 + $0x990] sm:$0xff]
        %v551 = vld [vmem:[%s162 + $0x998] sm:$0xff]
        %v552 = vld [vmem:[%s162 + $0x9a0] sm:$0xff]
        %v553 = vld [vmem:[%s162 + $0x9a8] sm:$0xff]
        %v554 = vld [vmem:[%s162 + $0x9b0] sm:$0xff]
        %v555 = vld [vmem:[%s162 + $0x9b8] sm:$0xff]
        %v556 = vld [vmem:[%s162 + $0x9c0] sm:$0xff]
        %v557 = vld [vmem:[%s162 + $0x9c8] sm:$0xff]
        %v558 = vld [vmem:[%s162 + $0x9d0] sm:$0xff]
        %v559 = vld [vmem:[%s162 + $0x9d8] sm:$0xff]
        %v560 = vld [vmem:[%s162 + $0x9e0] sm:$0xff]
        %v561 = vld [vmem:[%s162 + $0x9e8] sm:$0xff]
        %v562 = vld [vmem:[%s162 + $0x9f0] sm:$0xff]
        %v563 = vld [vmem:[%s162 + $0x9f8] sm:$0xff]
        %v564 = vld [vmem:[%s162 + $0xa00] sm:$0xff]
        %v565 = vld [vmem:[%s162 + $0xa08] sm:$0xff]
        %v566 = vld [vmem:[%s162 + $0xa10] sm:$0xff]
        %v567 = vld [vmem:[%s162 + $0xa18] sm:$0xff]
        %v568 = vld [vmem:[%s162 + $0xa20] sm:$0xff]
        %v569 = vld [vmem:[%s162 + $0xa28] sm:$0xff]
        %v570 = vld [vmem:[%s162 + $0xa30] sm:$0xff]
        %v571 = vld [vmem:[%s162 + $0xa38] sm:$0xff]
        %v572 = vld [vmem:[%s162 + $0xa40] sm:$0xff]
        %v573 = vld [vmem:[%s162 + $0xa48] sm:$0xff]
        %v574 = vld [vmem:[%s162 + $0xa50] sm:$0xff]
        %v575 = vld [vmem:[%s162 + $0xa58] sm:$0xff]
        %v576 = vld [vmem:[%s162 + $0xa60] sm:$0xff]
        %v577 = vld [vmem:[%s162 + $0xa68] sm:$0xff]
        %v578 = vld [vmem:[%s162 + $0xa70] sm:$0xff]
        %v579 = vld [vmem:[%s162 + $0xa78] sm:$0xff]
        %v580 = vld [vmem:[%s162 + $0xa80] sm:$0xff]
        %v581 = vld [vmem:[%s162 + $0xa88] sm:$0xff]
        %v582 = vld [vmem:[%s162 + $0xa90] sm:$0xff]
        %v583 = vld [vmem:[%s162 + $0xa98] sm:$0xff]
        %v584 = vld [vmem:[%s162 + $0xaa0] sm:$0xff]
        %v585 = vld [vmem:[%s162 + $0xaa8] sm:$0xff]
        %v586 = vld [vmem:[%s162 + $0xab0] sm:$0xff]
        %v587 = vld [vmem:[%s162 + $0xab8] sm:$0xff]
        %v588 = vld [vmem:[%s162 + $0xac0] sm:$0xff]
        %v589 = vld [vmem:[%s162 + $0xac8] sm:$0xff]
        %v590 = vld [vmem:[%s162 + $0xad0] sm:$0xff]
        %v591 = vld [vmem:[%s162 + $0xad8] sm:$0xff]
        %v592 = vld [vmem:[%s162 + $0xae0] sm:$0xff]
        %v593 = vld [vmem:[%s162 + $0xae8] sm:$0xff]
        %v594 = vld [vmem:[%s162 + $0xaf0] sm:$0xff]
        %v595 = vld [vmem:[%s162 + $0xaf8] sm:$0xff]
        %v596 = vld [vmem:[%s162 + $0xb00] sm:$0xff]
        %v597 = vld [vmem:[%s162 + $0xb08] sm:$0xff]
        %v598 = vld [vmem:[%s162 + $0xb10] sm:$0xff]
        %v599 = vld [vmem:[%s162 + $0xb18] sm:$0xff]
        %v600 = vld [vmem:[%s162 + $0xb20] sm:$0xff]
        %v601 = vld [vmem:[%s162 + $0xb28] sm:$0xff]
        %v602 = vld [vmem:[%s162 + $0xb30] sm:$0xff]
        %v603 = vld [vmem:[%s162 + $0xb38] sm:$0xff]
        %v604 = vld [vmem:[%s162 + $0xb40] sm:$0xff]
        %v605 = vld [vmem:[%s162 + $0xb48] sm:$0xff]
        %v606 = vld [vmem:[%s162 + $0xb50] sm:$0xff]
        %v607 = vld [vmem:[%s162 + $0xb58] sm:$0xff]
        %v608 = vld [vmem:[%s162 + $0xb60] sm:$0xff]
        %v609 = vld [vmem:[%s162 + $0xb68] sm:$0xff]
        %v610 = vld [vmem:[%s162 + $0xb70] sm:$0xff]
        %v611 = vld [vmem:[%s162 + $0xb78] sm:$0xff]
        %v612 = vld [vmem:[%s162 + $0xb80] sm:$0xff]
        %v613 = vld [vmem:[%s162 + $0xb88] sm:$0xff]
        %v614 = vld [vmem:[%s162 + $0xb90] sm:$0xff]
        %v615 = vld [vmem:[%s162 + $0xb98] sm:$0xff]
        %v616 = vld [vmem:[%s162 + $0xba0] sm:$0xff]
        %v617 = vld [vmem:[%s162 + $0xba8] sm:$0xff]
        %v618 = vld [vmem:[%s162 + $0xbb0] sm:$0xff]
        %v619 = vld [vmem:[%s162 + $0xbb8] sm:$0xff]
        %v620 = vld [vmem:[%s162 + $0xbc0] sm:$0xff]
        %v621 = vld [vmem:[%s162 + $0xbc8] sm:$0xff]
        %v622 = vld [vmem:[%s162 + $0xbd0] sm:$0xff]
        %v623 = vld [vmem:[%s162 + $0xbd8] sm:$0xff]
        %v624 = vld [vmem:[%s162 + $0xbe0] sm:$0xff]
        %v625 = vld [vmem:[%s162 + $0xbe8] sm:$0xff]
        %v626 = vld [vmem:[%s162 + $0xbf0] sm:$0xff]
        %v627 = vld [vmem:[%s162 + $0xbf8] sm:$0xff]
        %v628 = vld [vmem:[%s162 + $0xc00] sm:$0xff]
        %v629 = vld [vmem:[%s162 + $0xc08] sm:$0xff]
        %v630 = vld [vmem:[%s162 + $0xc10] sm:$0xff]
        %v631 = vld [vmem:[%s162 + $0xc18] sm:$0xff]
        %v632 = vld [vmem:[%s162 + $0xc20] sm:$0xff]
        %v633 = vld [vmem:[%s162 + $0xc28] sm:$0xff]
        %v634 = vld [vmem:[%s162 + $0xc30] sm:$0xff]
        %v635 = vld [vmem:[%s162 + $0xc38] sm:$0xff]
        %v636 = vld [vmem:[%s162 + $0xc40] sm:$0xff]
        %v637 = vld [vmem:[%s162 + $0xc48] sm:$0xff]
        %v638 = vld [vmem:[%s162 + $0xc50] sm:$0xff]
        %v639 = vld [vmem:[%s162 + $0xc58] sm:$0xff]
        %v640 = vld [vmem:[%s162 + $0xc60] sm:$0xff]
        %v641 = vld [vmem:[%s162 + $0xc68] sm:$0xff]
        %v642 = vld [vmem:[%s162 + $0xc70] sm:$0xff]
        %v643 = vld [vmem:[%s162 + $0xc78] sm:$0xff]
        %v644 = vld [vmem:[%s162 + $0xc80] sm:$0xff]
        %v645 = vld [vmem:[%s162 + $0xc88] sm:$0xff]
        %v646 = vld [vmem:[%s162 + $0xc90] sm:$0xff]
        %v647 = vld [vmem:[%s162 + $0xc98] sm:$0xff]
        %v648 = vld [vmem:[%s162 + $0xca0] sm:$0xff]
        %v649 = vld [vmem:[%s162 + $0xca8] sm:$0xff]
        %v650 = vld [vmem:[%s162 + $0xcb0] sm:$0xff]
        %v651 = vld [vmem:[%s162 + $0xcb8] sm:$0xff]
        %v652 = vld [vmem:[%s162 + $0xcc0] sm:$0xff]
        %v653 = vld [vmem:[%s162 + $0xcc8] sm:$0xff]
        %v654 = vld [vmem:[%s162 + $0xcd0] sm:$0xff]
        %v655 = vld [vmem:[%s162 + $0xcd8] sm:$0xff]
        %v656 = vld [vmem:[%s162 + $0xce0] sm:$0xff]
        %v657 = vld [vmem:[%s162 + $0xce8] sm:$0xff]
        %v658 = vld [vmem:[%s162 + $0xcf0] sm:$0xff]
        %v659 = vld [vmem:[%s162 + $0xcf8] sm:$0xff]
        %v660 = vld [vmem:[%s162 + $0xd00] sm:$0xff]
        %v661 = vld [vmem:[%s162 + $0xd08] sm:$0xff]
        %v662 = vld [vmem:[%s162 + $0xd10] sm:$0xff]
        %v663 = vld [vmem:[%s162 + $0xd18] sm:$0xff]
        %v664 = vld [vmem:[%s162 + $0xd20] sm:$0xff]
        %v665 = vld [vmem:[%s162 + $0xd28] sm:$0xff]
        %v666 = vld [vmem:[%s162 + $0xd30] sm:$0xff]
        %v667 = vld [vmem:[%s162 + $0xd38] sm:$0xff]
        %v668 = vld [vmem:[%s162 + $0xd40] sm:$0xff]
        %v669 = vld [vmem:[%s162 + $0xd48] sm:$0xff]
        %v670 = vld [vmem:[%s162 + $0xd50] sm:$0xff]
        %v671 = vld [vmem:[%s162 + $0xd58] sm:$0xff]
        %v672 = vld [vmem:[%s162 + $0xd60] sm:$0xff]
        %v673 = vld [vmem:[%s162 + $0xd68] sm:$0xff]
        %v674 = vld [vmem:[%s162 + $0xd70] sm:$0xff]
        %v675 = vld [vmem:[%s162 + $0xd78] sm:$0xff]
        %v676 = vld [vmem:[%s162 + $0xd80] sm:$0xff]
        %v677 = vld [vmem:[%s162 + $0xd88] sm:$0xff]
        %v678 = vld [vmem:[%s162 + $0xd90] sm:$0xff]
        %v679 = vld [vmem:[%s162 + $0xd98] sm:$0xff]
        %v680 = vld [vmem:[%s162 + $0xda0] sm:$0xff]
        %v681 = vld [vmem:[%s162 + $0xda8] sm:$0xff]
        %v682 = vld [vmem:[%s162 + $0xdb0] sm:$0xff]
        %v683 = vld [vmem:[%s162 + $0xdb8] sm:$0xff]
        %v684 = vld [vmem:[%s162 + $0xdc0] sm:$0xff]
        %v685 = vld [vmem:[%s162 + $0xdc8] sm:$0xff]
        %v686 = vld [vmem:[%s162 + $0xdd0] sm:$0xff]
        %v687 = vld [vmem:[%s162 + $0xdd8] sm:$0xff]
        %v688 = vld [vmem:[%s162 + $0xde0] sm:$0xff]
        %v689 = vld [vmem:[%s162 + $0xde8] sm:$0xff]
        %v690 = vld [vmem:[%s162 + $0xdf0] sm:$0xff]
        %v691 = vld [vmem:[%s162 + $0xdf8] sm:$0xff]
        %v692 = vld [vmem:[%s162 + $0xe00] sm:$0xff]
        %v693 = vld [vmem:[%s162 + $0xe08] sm:$0xff]
        %v694 = vld [vmem:[%s162 + $0xe10] sm:$0xff]
        %v695 = vld [vmem:[%s162 + $0xe18] sm:$0xff]
        %v696 = vld [vmem:[%s162 + $0xe20] sm:$0xff]
        %v697 = vld [vmem:[%s162 + $0xe28] sm:$0xff]
        %v698 = vld [vmem:[%s162 + $0xe30] sm:$0xff]
        %v699 = vld [vmem:[%s162 + $0xe38] sm:$0xff]
        %v700 = vld [vmem:[%s162 + $0xe40] sm:$0xff]
        %v701 = vld [vmem:[%s162 + $0xe48] sm:$0xff]
        %v702 = vld [vmem:[%s162 + $0xe50] sm:$0xff]
        %v703 = vld [vmem:[%s162 + $0xe58] sm:$0xff]
        %v704 = vld [vmem:[%s162 + $0xe60] sm:$0xff]
        %v705 = vld [vmem:[%s162 + $0xe68] sm:$0xff]
        %v706 = vld [vmem:[%s162 + $0xe70] sm:$0xff]
        %v707 = vld [vmem:[%s162 + $0xe78] sm:$0xff]
        %v708 = vld [vmem:[%s162 + $0xe80] sm:$0xff]
        %v709 = vld [vmem:[%s162 + $0xe88] sm:$0xff]
        %v710 = vld [vmem:[%s162 + $0xe90] sm:$0xff]
        %v711 = vld [vmem:[%s162 + $0xe98] sm:$0xff]
        %v712 = vld [vmem:[%s162 + $0xea0] sm:$0xff]
        %v713 = vld [vmem:[%s162 + $0xea8] sm:$0xff]
        %v714 = vld [vmem:[%s162 + $0xeb0] sm:$0xff]
        %v715 = vld [vmem:[%s162 + $0xeb8] sm:$0xff]
        %v716 = vld [vmem:[%s162 + $0xec0] sm:$0xff]
        %v717 = vld [vmem:[%s162 + $0xec8] sm:$0xff]
        %v718 = vld [vmem:[%s162 + $0xed0] sm:$0xff]
        %v719 = vld [vmem:[%s162 + $0xed8] sm:$0xff]
        %v720 = vld [vmem:[%s162 + $0xee0] sm:$0xff]
        %v721 = vld [vmem:[%s162 + $0xee8] sm:$0xff]
        %v722 = vld [vmem:[%s162 + $0xef0] sm:$0xff]
        %v723 = vld [vmem:[%s162 + $0xef8] sm:$0xff]
        %v724 = vld [vmem:[%s162 + $0xf00] sm:$0xff]
        %v725 = vld [vmem:[%s162 + $0xf08] sm:$0xff]
        %v726 = vld [vmem:[%s162 + $0xf10] sm:$0xff]
        %v727 = vld [vmem:[%s162 + $0xf18] sm:$0xff]
        %v728 = vld [vmem:[%s162 + $0xf20] sm:$0xff]
        %v729 = vld [vmem:[%s162 + $0xf28] sm:$0xff]
        %v730 = vld [vmem:[%s162 + $0xf30] sm:$0xff]
        %v731 = vld [vmem:[%s162 + $0xf38] sm:$0xff]
        %v732 = vld [vmem:[%s162 + $0xf40] sm:$0xff]
        %v733 = vld [vmem:[%s162 + $0xf48] sm:$0xff]
        %v734 = vld [vmem:[%s162 + $0xf50] sm:$0xff]
        %v735 = vld [vmem:[%s162 + $0xf58] sm:$0xff]
        %v736 = vld [vmem:[%s162 + $0xf60] sm:$0xff]
        %v737 = vld [vmem:[%s162 + $0xf68] sm:$0xff]
        %v738 = vld [vmem:[%s162 + $0xf70] sm:$0xff]
        %v739 = vld [vmem:[%s162 + $0xf78] sm:$0xff]
        %v740 = vld [vmem:[%s162 + $0xf80] sm:$0xff]
        %v741 = vld [vmem:[%s162 + $0xf88] sm:$0xff]
        %v742 = vld [vmem:[%s162 + $0xf90] sm:$0xff]
        %v743 = vld [vmem:[%s162 + $0xf98] sm:$0xff]
        %v744 = vld [vmem:[%s162 + $0xfa0] sm:$0xff]
        %v745 = vld [vmem:[%s162 + $0xfa8] sm:$0xff]
        %v746 = vld [vmem:[%s162 + $0xfb0] sm:$0xff]
        %v747 = vld [vmem:[%s162 + $0xfb8] sm:$0xff]
        %v748 = vld [vmem:[%s162 + $0xfc0] sm:$0xff]
        %v749 = vld [vmem:[%s162 + $0xfc8] sm:$0xff]
        %v750 = vld [vmem:[%s162 + $0xfd0] sm:$0xff]
        %v751 = vld [vmem:[%s162 + $0xfd8] sm:$0xff]
        %v752 = vld [vmem:[%s162 + $0xfe0] sm:$0xff]
        %v753 = vld [vmem:[%s162 + $0xfe8] sm:$0xff]
        %v754 = vld [vmem:[%s162 + $0xff0] sm:$0xff]
        %v755 = vld [vmem:[%s162 + $0xff8] sm:$0xff]
        %v788 = vunpack.c.l.b16 %v212
        %v789 = vunpack.c.h.b16 %v212
        %v790 = vunpack.c.l.b16 %v213
        %v791 = vunpack.c.h.b16 %v213
        %v792 = vunpack.c.l.b16 %v214
        %v793 = vunpack.c.h.b16 %v214
        %v794 = vunpack.c.l.b16 %v215
        %v795 = vunpack.c.h.b16 %v215
        %v796 = vunpack.c.l.b16 %v216
        %v797 = vunpack.c.h.b16 %v216
        %v798 = vunpack.c.l.b16 %v217
        %v799 = vunpack.c.h.b16 %v217
        %v800 = vunpack.c.l.b16 %v218
        %v801 = vunpack.c.h.b16 %v218
        %v802 = vunpack.c.l.b16 %v219
        %v803 = vunpack.c.h.b16 %v219
        %v804 = vunpack.c.l.b16 %v220
        %v805 = vunpack.c.h.b16 %v220
        %v806 = vunpack.c.l.b16 %v221
        %v807 = vunpack.c.h.b16 %v221
        %v808 = vunpack.c.l.b16 %v222
        %v809 = vunpack.c.h.b16 %v222
        %v810 = vunpack.c.l.b16 %v223
        %v811 = vunpack.c.h.b16 %v223
        %v812 = vunpack.c.l.b16 %v224
        %v813 = vunpack.c.h.b16 %v224
        %v814 = vunpack.c.l.b16 %v225
        %v815 = vunpack.c.h.b16 %v225
        %v816 = vunpack.c.l.b16 %v226
        %v817 = vunpack.c.h.b16 %v226
        %v818 = vunpack.c.l.b16 %v227
        %v819 = vunpack.c.h.b16 %v227
        %v820 = vunpack.c.l.b16 %v228
        %v821 = vunpack.c.h.b16 %v228
        %v822 = vunpack.c.l.b16 %v229
        %v823 = vunpack.c.h.b16 %v229
        %v824 = vunpack.c.l.b16 %v230
        %v825 = vunpack.c.h.b16 %v230
        %v826 = vunpack.c.l.b16 %v231
        %v827 = vunpack.c.h.b16 %v231
        %v828 = vunpack.c.l.b16 %v232
        %v829 = vunpack.c.h.b16 %v232
        %v830 = vunpack.c.l.b16 %v233
        %v831 = vunpack.c.h.b16 %v233
        %v832 = vunpack.c.l.b16 %v234
        %v833 = vunpack.c.h.b16 %v234
        %v834 = vunpack.c.l.b16 %v235
        %v835 = vunpack.c.h.b16 %v235
        %v836 = vunpack.c.l.b16 %v236
        %v837 = vunpack.c.h.b16 %v236
        %v838 = vunpack.c.l.b16 %v237
        %v839 = vunpack.c.h.b16 %v237
        %v840 = vunpack.c.l.b16 %v238
        %v841 = vunpack.c.h.b16 %v238
        %v842 = vunpack.c.l.b16 %v239
        %v843 = vunpack.c.h.b16 %v239
        %v844 = vunpack.c.l.b16 %v240
        %v845 = vunpack.c.h.b16 %v240
        %v846 = vunpack.c.l.b16 %v241
        %v847 = vunpack.c.h.b16 %v241
        %v848 = vunpack.c.l.b16 %v242
        %v849 = vunpack.c.h.b16 %v242
        %v850 = vunpack.c.l.b16 %v243
        %v851 = vunpack.c.h.b16 %v243
        %v852 = vpack.c.b16 %v804, %v788
        %v853 = vpack.c.b16 %v805, %v789
        %v854 = vpack.c.b16 %v806, %v790
        %v855 = vpack.c.b16 %v807, %v791
        %v856 = vpack.c.b16 %v808, %v792
        %v857 = vpack.c.b16 %v809, %v793
        %v858 = vpack.c.b16 %v810, %v794
        %v859 = vpack.c.b16 %v811, %v795
        %v860 = vpack.c.b16 %v812, %v796
        %v861 = vpack.c.b16 %v813, %v797
        %v862 = vpack.c.b16 %v814, %v798
        %v863 = vpack.c.b16 %v815, %v799
        %v864 = vpack.c.b16 %v816, %v800
        %v865 = vpack.c.b16 %v817, %v801
        %v866 = vpack.c.b16 %v818, %v802
        %v867 = vpack.c.b16 %v819, %v803
        %v868 = vpack.c.b16 %v836, %v820
        %v869 = vpack.c.b16 %v837, %v821
        %v870 = vpack.c.b16 %v838, %v822
        %v871 = vpack.c.b16 %v839, %v823
        %v872 = vpack.c.b16 %v840, %v824
        %v873 = vpack.c.b16 %v841, %v825
        %v874 = vpack.c.b16 %v842, %v826
        %v875 = vpack.c.b16 %v843, %v827
        %v876 = vpack.c.b16 %v844, %v828
        %v877 = vpack.c.b16 %v845, %v829
        %v878 = vpack.c.b16 %v846, %v830
        %v879 = vpack.c.b16 %v847, %v831
        %v880 = vpack.c.b16 %v848, %v832
        %v881 = vpack.c.b16 %v849, %v833
        %v882 = vpack.c.b16 %v850, %v834
        %v883 = vpack.c.b16 %v851, %v835
        %v1428 = vunpack.c.l.b16 %v244
        %v1429 = vunpack.c.h.b16 %v244
        %v1430 = vunpack.c.l.b16 %v245
        %v1431 = vunpack.c.h.b16 %v245
        %v1432 = vunpack.c.l.b16 %v246
        %v1433 = vunpack.c.h.b16 %v246
        %v1434 = vunpack.c.l.b16 %v247
        %v1435 = vunpack.c.h.b16 %v247
        %v1436 = vunpack.c.l.b16 %v248
        %v1437 = vunpack.c.h.b16 %v248
        %v1438 = vunpack.c.l.b16 %v249
        %v1439 = vunpack.c.h.b16 %v249
        %v1440 = vunpack.c.l.b16 %v250
        %v1441 = vunpack.c.h.b16 %v250
        %v1442 = vunpack.c.l.b16 %v251
        %v1443 = vunpack.c.h.b16 %v251
        %v1444 = vunpack.c.l.b16 %v252
        %v1445 = vunpack.c.h.b16 %v252
        %v1446 = vunpack.c.l.b16 %v253
        %v1447 = vunpack.c.h.b16 %v253
        %v1448 = vunpack.c.l.b16 %v254
        %v1449 = vunpack.c.h.b16 %v254
        %v1450 = vunpack.c.l.b16 %v255
        %v1451 = vunpack.c.h.b16 %v255
        %v1452 = vunpack.c.l.b16 %v256
        %v1453 = vunpack.c.h.b16 %v256
        %v1454 = vunpack.c.l.b16 %v257
        %v1455 = vunpack.c.h.b16 %v257
        %v1456 = vunpack.c.l.b16 %v258
        %v1457 = vunpack.c.h.b16 %v258
        %v1458 = vunpack.c.l.b16 %v259
        %v1459 = vunpack.c.h.b16 %v259
        %v1460 = vunpack.c.l.b16 %v260
        %v1461 = vunpack.c.h.b16 %v260
        %v1462 = vunpack.c.l.b16 %v261
        %v1463 = vunpack.c.h.b16 %v261
        %v1464 = vunpack.c.l.b16 %v262
        %v1465 = vunpack.c.h.b16 %v262
        %v1466 = vunpack.c.l.b16 %v263
        %v1467 = vunpack.c.h.b16 %v263
        %v1468 = vunpack.c.l.b16 %v264
        %v1469 = vunpack.c.h.b16 %v264
        %v1470 = vunpack.c.l.b16 %v265
        %v1471 = vunpack.c.h.b16 %v265
        %v1472 = vunpack.c.l.b16 %v266
        %v1473 = vunpack.c.h.b16 %v266
        %v1474 = vunpack.c.l.b16 %v267
        %v1475 = vunpack.c.h.b16 %v267
        %v1476 = vunpack.c.l.b16 %v268
        %v1477 = vunpack.c.h.b16 %v268
        %v1478 = vunpack.c.l.b16 %v269
        %v1479 = vunpack.c.h.b16 %v269
        %v1480 = vunpack.c.l.b16 %v270
        %v1481 = vunpack.c.h.b16 %v270
        %v1482 = vunpack.c.l.b16 %v271
        %v1483 = vunpack.c.h.b16 %v271
        %v1484 = vunpack.c.l.b16 %v272
        %v1485 = vunpack.c.h.b16 %v272
        %v1486 = vunpack.c.l.b16 %v273
        %v1487 = vunpack.c.h.b16 %v273
        %v1488 = vunpack.c.l.b16 %v274
        %v1489 = vunpack.c.h.b16 %v274
        %v1490 = vunpack.c.l.b16 %v275
        %v1491 = vunpack.c.h.b16 %v275
        %v1492 = vunpack.c.l.b16 %v276
        %v1493 = vunpack.c.h.b16 %v276
        %v1494 = vunpack.c.l.b16 %v277
        %v1495 = vunpack.c.h.b16 %v277
        %v1496 = vunpack.c.l.b16 %v278
        %v1497 = vunpack.c.h.b16 %v278
        %v1498 = vunpack.c.l.b16 %v279
        %v1499 = vunpack.c.h.b16 %v279
        %v1500 = vunpack.c.l.b16 %v280
        %v1501 = vunpack.c.h.b16 %v280
        %v1502 = vunpack.c.l.b16 %v281
        %v1503 = vunpack.c.h.b16 %v281
        %v1504 = vunpack.c.l.b16 %v282
        %v1505 = vunpack.c.h.b16 %v282
        %v1506 = vunpack.c.l.b16 %v283
        %v1507 = vunpack.c.h.b16 %v283
        %v1508 = vunpack.c.l.b16 %v284
        %v1509 = vunpack.c.h.b16 %v284
        %v1510 = vunpack.c.l.b16 %v285
        %v1511 = vunpack.c.h.b16 %v285
        %v1512 = vunpack.c.l.b16 %v286
        %v1513 = vunpack.c.h.b16 %v286
        %v1514 = vunpack.c.l.b16 %v287
        %v1515 = vunpack.c.h.b16 %v287
        %v1516 = vunpack.c.l.b16 %v288
        %v1517 = vunpack.c.h.b16 %v288
        %v1518 = vunpack.c.l.b16 %v289
        %v1519 = vunpack.c.h.b16 %v289
        %v1520 = vunpack.c.l.b16 %v290
        %v1521 = vunpack.c.h.b16 %v290
        %v1522 = vunpack.c.l.b16 %v291
        %v1523 = vunpack.c.h.b16 %v291
        %v1524 = vunpack.c.l.b16 %v292
        %v1525 = vunpack.c.h.b16 %v292
        %v1526 = vunpack.c.l.b16 %v293
        %v1527 = vunpack.c.h.b16 %v293
        %v1528 = vunpack.c.l.b16 %v294
        %v1529 = vunpack.c.h.b16 %v294
        %v1530 = vunpack.c.l.b16 %v295
        %v1531 = vunpack.c.h.b16 %v295
        %v1532 = vunpack.c.l.b16 %v296
        %v1533 = vunpack.c.h.b16 %v296
        %v1534 = vunpack.c.l.b16 %v297
        %v1535 = vunpack.c.h.b16 %v297
        %v1536 = vunpack.c.l.b16 %v298
        %v1537 = vunpack.c.h.b16 %v298
        %v1538 = vunpack.c.l.b16 %v299
        %v1539 = vunpack.c.h.b16 %v299
        %v1540 = vunpack.c.l.b16 %v300
        %v1541 = vunpack.c.h.b16 %v300
        %v1542 = vunpack.c.l.b16 %v301
        %v1543 = vunpack.c.h.b16 %v301
        %v1544 = vunpack.c.l.b16 %v302
        %v1545 = vunpack.c.h.b16 %v302
        %v1546 = vunpack.c.l.b16 %v303
        %v1547 = vunpack.c.h.b16 %v303
        %v1548 = vunpack.c.l.b16 %v304
        %v1549 = vunpack.c.h.b16 %v304
        %v1550 = vunpack.c.l.b16 %v305
        %v1551 = vunpack.c.h.b16 %v305
        %v1552 = vunpack.c.l.b16 %v306
        %v1553 = vunpack.c.h.b16 %v306
        %v1554 = vunpack.c.l.b16 %v307
        %v1555 = vunpack.c.h.b16 %v307
        %v1556 = vunpack.c.l.b16 %v308
        %v1557 = vunpack.c.h.b16 %v308
        %v1558 = vunpack.c.l.b16 %v309
        %v1559 = vunpack.c.h.b16 %v309
        %v1560 = vunpack.c.l.b16 %v310
        %v1561 = vunpack.c.h.b16 %v310
        %v1562 = vunpack.c.l.b16 %v311
        %v1563 = vunpack.c.h.b16 %v311
        %v1564 = vunpack.c.l.b16 %v312
        %v1565 = vunpack.c.h.b16 %v312
        %v1566 = vunpack.c.l.b16 %v313
        %v1567 = vunpack.c.h.b16 %v313
        %v1568 = vunpack.c.l.b16 %v314
        %v1569 = vunpack.c.h.b16 %v314
        %v1570 = vunpack.c.l.b16 %v315
        %v1571 = vunpack.c.h.b16 %v315
        %v1572 = vunpack.c.l.b16 %v316
        %v1573 = vunpack.c.h.b16 %v316
        %v1574 = vunpack.c.l.b16 %v317
        %v1575 = vunpack.c.h.b16 %v317
        %v1576 = vunpack.c.l.b16 %v318
        %v1577 = vunpack.c.h.b16 %v318
        %v1578 = vunpack.c.l.b16 %v319
        %v1579 = vunpack.c.h.b16 %v319
        %v1580 = vunpack.c.l.b16 %v320
        %v1581 = vunpack.c.h.b16 %v320
        %v1582 = vunpack.c.l.b16 %v321
        %v1583 = vunpack.c.h.b16 %v321
        %v1584 = vunpack.c.l.b16 %v322
        %v1585 = vunpack.c.h.b16 %v322
        %v1586 = vunpack.c.l.b16 %v323
        %v1587 = vunpack.c.h.b16 %v323
        %v1588 = vunpack.c.l.b16 %v324
        %v1589 = vunpack.c.h.b16 %v324
        %v1590 = vunpack.c.l.b16 %v325
        %v1591 = vunpack.c.h.b16 %v325
        %v1592 = vunpack.c.l.b16 %v326
        %v1593 = vunpack.c.h.b16 %v326
        %v1594 = vunpack.c.l.b16 %v327
        %v1595 = vunpack.c.h.b16 %v327
        %v1596 = vunpack.c.l.b16 %v328
        %v1597 = vunpack.c.h.b16 %v328
        %v1598 = vunpack.c.l.b16 %v329
        %v1599 = vunpack.c.h.b16 %v329
        %v1600 = vunpack.c.l.b16 %v330
        %v1601 = vunpack.c.h.b16 %v330
        %v1602 = vunpack.c.l.b16 %v331
        %v1603 = vunpack.c.h.b16 %v331
        %v1604 = vunpack.c.l.b16 %v332
        %v1605 = vunpack.c.h.b16 %v332
        %v1606 = vunpack.c.l.b16 %v333
        %v1607 = vunpack.c.h.b16 %v333
        %v1608 = vunpack.c.l.b16 %v334
        %v1609 = vunpack.c.h.b16 %v334
        %v1610 = vunpack.c.l.b16 %v335
        %v1611 = vunpack.c.h.b16 %v335
        %v1612 = vunpack.c.l.b16 %v336
        %v1613 = vunpack.c.h.b16 %v336
        %v1614 = vunpack.c.l.b16 %v337
        %v1615 = vunpack.c.h.b16 %v337
        %v1616 = vunpack.c.l.b16 %v338
        %v1617 = vunpack.c.h.b16 %v338
        %v1618 = vunpack.c.l.b16 %v339
        %v1619 = vunpack.c.h.b16 %v339
        %v1620 = vunpack.c.l.b16 %v340
        %v1621 = vunpack.c.h.b16 %v340
        %v1622 = vunpack.c.l.b16 %v341
        %v1623 = vunpack.c.h.b16 %v341
        %v1624 = vunpack.c.l.b16 %v342
        %v1625 = vunpack.c.h.b16 %v342
        %v1626 = vunpack.c.l.b16 %v343
        %v1627 = vunpack.c.h.b16 %v343
        %v1628 = vunpack.c.l.b16 %v344
        %v1629 = vunpack.c.h.b16 %v344
        %v1630 = vunpack.c.l.b16 %v345
        %v1631 = vunpack.c.h.b16 %v345
        %v1632 = vunpack.c.l.b16 %v346
        %v1633 = vunpack.c.h.b16 %v346
        %v1634 = vunpack.c.l.b16 %v347
        %v1635 = vunpack.c.h.b16 %v347
        %v1636 = vunpack.c.l.b16 %v348
        %v1637 = vunpack.c.h.b16 %v348
        %v1638 = vunpack.c.l.b16 %v349
        %v1639 = vunpack.c.h.b16 %v349
        %v1640 = vunpack.c.l.b16 %v350
        %v1641 = vunpack.c.h.b16 %v350
        %v1642 = vunpack.c.l.b16 %v351
        %v1643 = vunpack.c.h.b16 %v351
        %v1644 = vunpack.c.l.b16 %v352
        %v1645 = vunpack.c.h.b16 %v352
        %v1646 = vunpack.c.l.b16 %v353
        %v1647 = vunpack.c.h.b16 %v353
        %v1648 = vunpack.c.l.b16 %v354
        %v1649 = vunpack.c.h.b16 %v354
        %v1650 = vunpack.c.l.b16 %v355
        %v1651 = vunpack.c.h.b16 %v355
        %v1652 = vunpack.c.l.b16 %v356
        %v1653 = vunpack.c.h.b16 %v356
        %v1654 = vunpack.c.l.b16 %v357
        %v1655 = vunpack.c.h.b16 %v357
        %v1656 = vunpack.c.l.b16 %v358
        %v1657 = vunpack.c.h.b16 %v358
        %v1658 = vunpack.c.l.b16 %v359
        %v1659 = vunpack.c.h.b16 %v359
        %v1660 = vunpack.c.l.b16 %v360
        %v1661 = vunpack.c.h.b16 %v360
        %v1662 = vunpack.c.l.b16 %v361
        %v1663 = vunpack.c.h.b16 %v361
        %v1664 = vunpack.c.l.b16 %v362
        %v1665 = vunpack.c.h.b16 %v362
        %v1666 = vunpack.c.l.b16 %v363
        %v1667 = vunpack.c.h.b16 %v363
        %v1668 = vunpack.c.l.b16 %v364
        %v1669 = vunpack.c.h.b16 %v364
        %v1670 = vunpack.c.l.b16 %v365
        %v1671 = vunpack.c.h.b16 %v365
        %v1672 = vunpack.c.l.b16 %v366
        %v1673 = vunpack.c.h.b16 %v366
        %v1674 = vunpack.c.l.b16 %v367
        %v1675 = vunpack.c.h.b16 %v367
        %v1676 = vunpack.c.l.b16 %v368
        %v1677 = vunpack.c.h.b16 %v368
        %v1678 = vunpack.c.l.b16 %v369
        %v1679 = vunpack.c.h.b16 %v369
        %v1680 = vunpack.c.l.b16 %v370
        %v1681 = vunpack.c.h.b16 %v370
        %v1682 = vunpack.c.l.b16 %v371
        %v1683 = vunpack.c.h.b16 %v371
        %v1684 = vunpack.c.l.b16 %v372
        %v1685 = vunpack.c.h.b16 %v372
        %v1686 = vunpack.c.l.b16 %v373
        %v1687 = vunpack.c.h.b16 %v373
        %v1688 = vunpack.c.l.b16 %v374
        %v1689 = vunpack.c.h.b16 %v374
        %v1690 = vunpack.c.l.b16 %v375
        %v1691 = vunpack.c.h.b16 %v375
        %v1692 = vunpack.c.l.b16 %v376
        %v1693 = vunpack.c.h.b16 %v376
        %v1694 = vunpack.c.l.b16 %v377
        %v1695 = vunpack.c.h.b16 %v377
        %v1696 = vunpack.c.l.b16 %v378
        %v1697 = vunpack.c.h.b16 %v378
        %v1698 = vunpack.c.l.b16 %v379
        %v1699 = vunpack.c.h.b16 %v379
        %v1700 = vunpack.c.l.b16 %v380
        %v1701 = vunpack.c.h.b16 %v380
        %v1702 = vunpack.c.l.b16 %v381
        %v1703 = vunpack.c.h.b16 %v381
        %v1704 = vunpack.c.l.b16 %v382
        %v1705 = vunpack.c.h.b16 %v382
        %v1706 = vunpack.c.l.b16 %v383
        %v1707 = vunpack.c.h.b16 %v383
        %v1708 = vunpack.c.l.b16 %v384
        %v1709 = vunpack.c.h.b16 %v384
        %v1710 = vunpack.c.l.b16 %v385
        %v1711 = vunpack.c.h.b16 %v385
        %v1712 = vunpack.c.l.b16 %v386
        %v1713 = vunpack.c.h.b16 %v386
        %v1714 = vunpack.c.l.b16 %v387
        %v1715 = vunpack.c.h.b16 %v387
        %v1716 = vunpack.c.l.b16 %v388
        %v1717 = vunpack.c.h.b16 %v388
        %v1718 = vunpack.c.l.b16 %v389
        %v1719 = vunpack.c.h.b16 %v389
        %v1720 = vunpack.c.l.b16 %v390
        %v1721 = vunpack.c.h.b16 %v390
        %v1722 = vunpack.c.l.b16 %v391
        %v1723 = vunpack.c.h.b16 %v391
        %v1724 = vunpack.c.l.b16 %v392
        %v1725 = vunpack.c.h.b16 %v392
        %v1726 = vunpack.c.l.b16 %v393
        %v1727 = vunpack.c.h.b16 %v393
        %v1728 = vunpack.c.l.b16 %v394
        %v1729 = vunpack.c.h.b16 %v394
        %v1730 = vunpack.c.l.b16 %v395
        %v1731 = vunpack.c.h.b16 %v395
        %v1732 = vunpack.c.l.b16 %v396
        %v1733 = vunpack.c.h.b16 %v396
        %v1734 = vunpack.c.l.b16 %v397
        %v1735 = vunpack.c.h.b16 %v397
        %v1736 = vunpack.c.l.b16 %v398
        %v1737 = vunpack.c.h.b16 %v398
        %v1738 = vunpack.c.l.b16 %v399
        %v1739 = vunpack.c.h.b16 %v399
        %v1740 = vunpack.c.l.b16 %v400
        %v1741 = vunpack.c.h.b16 %v400
        %v1742 = vunpack.c.l.b16 %v401
        %v1743 = vunpack.c.h.b16 %v401
        %v1744 = vunpack.c.l.b16 %v402
        %v1745 = vunpack.c.h.b16 %v402
        %v1746 = vunpack.c.l.b16 %v403
        %v1747 = vunpack.c.h.b16 %v403
        %v1748 = vunpack.c.l.b16 %v404
        %v1749 = vunpack.c.h.b16 %v404
        %v1750 = vunpack.c.l.b16 %v405
        %v1751 = vunpack.c.h.b16 %v405
        %v1752 = vunpack.c.l.b16 %v406
        %v1753 = vunpack.c.h.b16 %v406
        %v1754 = vunpack.c.l.b16 %v407
        %v1755 = vunpack.c.h.b16 %v407
        %v1756 = vunpack.c.l.b16 %v408
        %v1757 = vunpack.c.h.b16 %v408
        %v1758 = vunpack.c.l.b16 %v409
        %v1759 = vunpack.c.h.b16 %v409
        %v1760 = vunpack.c.l.b16 %v410
        %v1761 = vunpack.c.h.b16 %v410
        %v1762 = vunpack.c.l.b16 %v411
        %v1763 = vunpack.c.h.b16 %v411
        %v1764 = vunpack.c.l.b16 %v412
        %v1765 = vunpack.c.h.b16 %v412
        %v1766 = vunpack.c.l.b16 %v413
        %v1767 = vunpack.c.h.b16 %v413
        %v1768 = vunpack.c.l.b16 %v414
        %v1769 = vunpack.c.h.b16 %v414
        %v1770 = vunpack.c.l.b16 %v415
        %v1771 = vunpack.c.h.b16 %v415
        %v1772 = vunpack.c.l.b16 %v416
        %v1773 = vunpack.c.h.b16 %v416
        %v1774 = vunpack.c.l.b16 %v417
        %v1775 = vunpack.c.h.b16 %v417
        %v1776 = vunpack.c.l.b16 %v418
        %v1777 = vunpack.c.h.b16 %v418
        %v1778 = vunpack.c.l.b16 %v419
        %v1779 = vunpack.c.h.b16 %v419
        %v1780 = vunpack.c.l.b16 %v420
        %v1781 = vunpack.c.h.b16 %v420
        %v1782 = vunpack.c.l.b16 %v421
        %v1783 = vunpack.c.h.b16 %v421
        %v1784 = vunpack.c.l.b16 %v422
        %v1785 = vunpack.c.h.b16 %v422
        %v1786 = vunpack.c.l.b16 %v423
        %v1787 = vunpack.c.h.b16 %v423
        %v1788 = vunpack.c.l.b16 %v424
        %v1789 = vunpack.c.h.b16 %v424
        %v1790 = vunpack.c.l.b16 %v425
        %v1791 = vunpack.c.h.b16 %v425
        %v1792 = vunpack.c.l.b16 %v426
        %v1793 = vunpack.c.h.b16 %v426
        %v1794 = vunpack.c.l.b16 %v427
        %v1795 = vunpack.c.h.b16 %v427
        %v1796 = vunpack.c.l.b16 %v428
        %v1797 = vunpack.c.h.b16 %v428
        %v1798 = vunpack.c.l.b16 %v429
        %v1799 = vunpack.c.h.b16 %v429
        %v1800 = vunpack.c.l.b16 %v430
        %v1801 = vunpack.c.h.b16 %v430
        %v1802 = vunpack.c.l.b16 %v431
        %v1803 = vunpack.c.h.b16 %v431
        %v1804 = vunpack.c.l.b16 %v432
        %v1805 = vunpack.c.h.b16 %v432
        %v1806 = vunpack.c.l.b16 %v433
        %v1807 = vunpack.c.h.b16 %v433
        %v1808 = vunpack.c.l.b16 %v434
        %v1809 = vunpack.c.h.b16 %v434
        %v1810 = vunpack.c.l.b16 %v435
        %v1811 = vunpack.c.h.b16 %v435
        %v1812 = vunpack.c.l.b16 %v436
        %v1813 = vunpack.c.h.b16 %v436
        %v1814 = vunpack.c.l.b16 %v437
        %v1815 = vunpack.c.h.b16 %v437
        %v1816 = vunpack.c.l.b16 %v438
        %v1817 = vunpack.c.h.b16 %v438
        %v1818 = vunpack.c.l.b16 %v439
        %v1819 = vunpack.c.h.b16 %v439
        %v1820 = vunpack.c.l.b16 %v440
        %v1821 = vunpack.c.h.b16 %v440
        %v1822 = vunpack.c.l.b16 %v441
        %v1823 = vunpack.c.h.b16 %v441
        %v1824 = vunpack.c.l.b16 %v442
        %v1825 = vunpack.c.h.b16 %v442
        %v1826 = vunpack.c.l.b16 %v443
        %v1827 = vunpack.c.h.b16 %v443
        %v1828 = vunpack.c.l.b16 %v444
        %v1829 = vunpack.c.h.b16 %v444
        %v1830 = vunpack.c.l.b16 %v445
        %v1831 = vunpack.c.h.b16 %v445
        %v1832 = vunpack.c.l.b16 %v446
        %v1833 = vunpack.c.h.b16 %v446
        %v1834 = vunpack.c.l.b16 %v447
        %v1835 = vunpack.c.h.b16 %v447
        %v1836 = vunpack.c.l.b16 %v448
        %v1837 = vunpack.c.h.b16 %v448
        %v1838 = vunpack.c.l.b16 %v449
        %v1839 = vunpack.c.h.b16 %v449
        %v1840 = vunpack.c.l.b16 %v450
        %v1841 = vunpack.c.h.b16 %v450
        %v1842 = vunpack.c.l.b16 %v451
        %v1843 = vunpack.c.h.b16 %v451
        %v1844 = vunpack.c.l.b16 %v452
        %v1845 = vunpack.c.h.b16 %v452
        %v1846 = vunpack.c.l.b16 %v453
        %v1847 = vunpack.c.h.b16 %v453
        %v1848 = vunpack.c.l.b16 %v454
        %v1849 = vunpack.c.h.b16 %v454
        %v1850 = vunpack.c.l.b16 %v455
        %v1851 = vunpack.c.h.b16 %v455
        %v1852 = vunpack.c.l.b16 %v456
        %v1853 = vunpack.c.h.b16 %v456
        %v1854 = vunpack.c.l.b16 %v457
        %v1855 = vunpack.c.h.b16 %v457
        %v1856 = vunpack.c.l.b16 %v458
        %v1857 = vunpack.c.h.b16 %v458
        %v1858 = vunpack.c.l.b16 %v459
        %v1859 = vunpack.c.h.b16 %v459
        %v1860 = vunpack.c.l.b16 %v460
        %v1861 = vunpack.c.h.b16 %v460
        %v1862 = vunpack.c.l.b16 %v461
        %v1863 = vunpack.c.h.b16 %v461
        %v1864 = vunpack.c.l.b16 %v462
        %v1865 = vunpack.c.h.b16 %v462
        %v1866 = vunpack.c.l.b16 %v463
        %v1867 = vunpack.c.h.b16 %v463
        %v1868 = vunpack.c.l.b16 %v464
        %v1869 = vunpack.c.h.b16 %v464
        %v1870 = vunpack.c.l.b16 %v465
        %v1871 = vunpack.c.h.b16 %v465
        %v1872 = vunpack.c.l.b16 %v466
        %v1873 = vunpack.c.h.b16 %v466
        %v1874 = vunpack.c.l.b16 %v467
        %v1875 = vunpack.c.h.b16 %v467
        %v1876 = vunpack.c.l.b16 %v468
        %v1877 = vunpack.c.h.b16 %v468
        %v1878 = vunpack.c.l.b16 %v469
        %v1879 = vunpack.c.h.b16 %v469
        %v1880 = vunpack.c.l.b16 %v470
        %v1881 = vunpack.c.h.b16 %v470
        %v1882 = vunpack.c.l.b16 %v471
        %v1883 = vunpack.c.h.b16 %v471
        %v1884 = vunpack.c.l.b16 %v472
        %v1885 = vunpack.c.h.b16 %v472
        %v1886 = vunpack.c.l.b16 %v473
        %v1887 = vunpack.c.h.b16 %v473
        %v1888 = vunpack.c.l.b16 %v474
        %v1889 = vunpack.c.h.b16 %v474
        %v1890 = vunpack.c.l.b16 %v475
        %v1891 = vunpack.c.h.b16 %v475
        %v1892 = vunpack.c.l.b16 %v476
        %v1893 = vunpack.c.h.b16 %v476
        %v1894 = vunpack.c.l.b16 %v477
        %v1895 = vunpack.c.h.b16 %v477
        %v1896 = vunpack.c.l.b16 %v478
        %v1897 = vunpack.c.h.b16 %v478
        %v1898 = vunpack.c.l.b16 %v479
        %v1899 = vunpack.c.h.b16 %v479
        %v1900 = vunpack.c.l.b16 %v480
        %v1901 = vunpack.c.h.b16 %v480
        %v1902 = vunpack.c.l.b16 %v481
        %v1903 = vunpack.c.h.b16 %v481
        %v1904 = vunpack.c.l.b16 %v482
        %v1905 = vunpack.c.h.b16 %v482
        %v1906 = vunpack.c.l.b16 %v483
        %v1907 = vunpack.c.h.b16 %v483
        %v1908 = vunpack.c.l.b16 %v484
        %v1909 = vunpack.c.h.b16 %v484
        %v1910 = vunpack.c.l.b16 %v485
        %v1911 = vunpack.c.h.b16 %v485
        %v1912 = vunpack.c.l.b16 %v486
        %v1913 = vunpack.c.h.b16 %v486
        %v1914 = vunpack.c.l.b16 %v487
        %v1915 = vunpack.c.h.b16 %v487
        %v1916 = vunpack.c.l.b16 %v488
        %v1917 = vunpack.c.h.b16 %v488
        %v1918 = vunpack.c.l.b16 %v489
        %v1919 = vunpack.c.h.b16 %v489
        %v1920 = vunpack.c.l.b16 %v490
        %v1921 = vunpack.c.h.b16 %v490
        %v1922 = vunpack.c.l.b16 %v491
        %v1923 = vunpack.c.h.b16 %v491
        %v1924 = vunpack.c.l.b16 %v492
        %v1925 = vunpack.c.h.b16 %v492
        %v1926 = vunpack.c.l.b16 %v493
        %v1927 = vunpack.c.h.b16 %v493
        %v1928 = vunpack.c.l.b16 %v494
        %v1929 = vunpack.c.h.b16 %v494
        %v1930 = vunpack.c.l.b16 %v495
        %v1931 = vunpack.c.h.b16 %v495
        %v1932 = vunpack.c.l.b16 %v496
        %v1933 = vunpack.c.h.b16 %v496
        %v1934 = vunpack.c.l.b16 %v497
        %v1935 = vunpack.c.h.b16 %v497
        %v1936 = vunpack.c.l.b16 %v498
        %v1937 = vunpack.c.h.b16 %v498
        %v1938 = vunpack.c.l.b16 %v499
        %v1939 = vunpack.c.h.b16 %v499
        %v1940 = vunpack.c.l.b16 %v500
        %v1941 = vunpack.c.h.b16 %v500
        %v1942 = vunpack.c.l.b16 %v501
        %v1943 = vunpack.c.h.b16 %v501
        %v1944 = vunpack.c.l.b16 %v502
        %v1945 = vunpack.c.h.b16 %v502
        %v1946 = vunpack.c.l.b16 %v503
        %v1947 = vunpack.c.h.b16 %v503
        %v1948 = vunpack.c.l.b16 %v504
        %v1949 = vunpack.c.h.b16 %v504
        %v1950 = vunpack.c.l.b16 %v505
        %v1951 = vunpack.c.h.b16 %v505
        %v1952 = vunpack.c.l.b16 %v506
        %v1953 = vunpack.c.h.b16 %v506
        %v1954 = vunpack.c.l.b16 %v507
        %v1955 = vunpack.c.h.b16 %v507
        %v1956 = vunpack.c.l.b16 %v508
        %v1957 = vunpack.c.h.b16 %v508
        %v1958 = vunpack.c.l.b16 %v509
        %v1959 = vunpack.c.h.b16 %v509
        %v1960 = vunpack.c.l.b16 %v510
        %v1961 = vunpack.c.h.b16 %v510
        %v1962 = vunpack.c.l.b16 %v511
        %v1963 = vunpack.c.h.b16 %v511
        %v1964 = vunpack.c.l.b16 %v512
        %v1965 = vunpack.c.h.b16 %v512
        %v1966 = vunpack.c.l.b16 %v513
        %v1967 = vunpack.c.h.b16 %v513
        %v1968 = vunpack.c.l.b16 %v514
        %v1969 = vunpack.c.h.b16 %v514
        %v1970 = vunpack.c.l.b16 %v515
        %v1971 = vunpack.c.h.b16 %v515
        %v1972 = vunpack.c.l.b16 %v516
        %v1973 = vunpack.c.h.b16 %v516
        %v1974 = vunpack.c.l.b16 %v517
        %v1975 = vunpack.c.h.b16 %v517
        %v1976 = vunpack.c.l.b16 %v518
        %v1977 = vunpack.c.h.b16 %v518
        %v1978 = vunpack.c.l.b16 %v519
        %v1979 = vunpack.c.h.b16 %v519
        %v1980 = vunpack.c.l.b16 %v520
        %v1981 = vunpack.c.h.b16 %v520
        %v1982 = vunpack.c.l.b16 %v521
        %v1983 = vunpack.c.h.b16 %v521
        %v1984 = vunpack.c.l.b16 %v522
        %v1985 = vunpack.c.h.b16 %v522
        %v1986 = vunpack.c.l.b16 %v523
        %v1987 = vunpack.c.h.b16 %v523
        %v1988 = vunpack.c.l.b16 %v524
        %v1989 = vunpack.c.h.b16 %v524
        %v1990 = vunpack.c.l.b16 %v525
        %v1991 = vunpack.c.h.b16 %v525
        %v1992 = vunpack.c.l.b16 %v526
        %v1993 = vunpack.c.h.b16 %v526
        %v1994 = vunpack.c.l.b16 %v527
        %v1995 = vunpack.c.h.b16 %v527
        %v1996 = vunpack.c.l.b16 %v528
        %v1997 = vunpack.c.h.b16 %v528
        %v1998 = vunpack.c.l.b16 %v529
        %v1999 = vunpack.c.h.b16 %v529
        %v2000 = vunpack.c.l.b16 %v530
        %v2001 = vunpack.c.h.b16 %v530
        %v2002 = vunpack.c.l.b16 %v531
        %v2003 = vunpack.c.h.b16 %v531
        %v2004 = vunpack.c.l.b16 %v532
        %v2005 = vunpack.c.h.b16 %v532
        %v2006 = vunpack.c.l.b16 %v533
        %v2007 = vunpack.c.h.b16 %v533
        %v2008 = vunpack.c.l.b16 %v534
        %v2009 = vunpack.c.h.b16 %v534
        %v2010 = vunpack.c.l.b16 %v535
        %v2011 = vunpack.c.h.b16 %v535
        %v2012 = vunpack.c.l.b16 %v536
        %v2013 = vunpack.c.h.b16 %v536
        %v2014 = vunpack.c.l.b16 %v537
        %v2015 = vunpack.c.h.b16 %v537
        %v2016 = vunpack.c.l.b16 %v538
        %v2017 = vunpack.c.h.b16 %v538
        %v2018 = vunpack.c.l.b16 %v539
        %v2019 = vunpack.c.h.b16 %v539
        %v2020 = vunpack.c.l.b16 %v540
        %v2021 = vunpack.c.h.b16 %v540
        %v2022 = vunpack.c.l.b16 %v541
        %v2023 = vunpack.c.h.b16 %v541
        %v2024 = vunpack.c.l.b16 %v542
        %v2025 = vunpack.c.h.b16 %v542
        %v2026 = vunpack.c.l.b16 %v543
        %v2027 = vunpack.c.h.b16 %v543
        %v2028 = vunpack.c.l.b16 %v544
        %v2029 = vunpack.c.h.b16 %v544
        %v2030 = vunpack.c.l.b16 %v545
        %v2031 = vunpack.c.h.b16 %v545
        %v2032 = vunpack.c.l.b16 %v546
        %v2033 = vunpack.c.h.b16 %v546
        %v2034 = vunpack.c.l.b16 %v547
        %v2035 = vunpack.c.h.b16 %v547
        %v2036 = vunpack.c.l.b16 %v548
        %v2037 = vunpack.c.h.b16 %v548
        %v2038 = vunpack.c.l.b16 %v549
        %v2039 = vunpack.c.h.b16 %v549
        %v2040 = vunpack.c.l.b16 %v550
        %v2041 = vunpack.c.h.b16 %v550
        %v2042 = vunpack.c.l.b16 %v551
        %v2043 = vunpack.c.h.b16 %v551
        %v2044 = vunpack.c.l.b16 %v552
        %v2045 = vunpack.c.h.b16 %v552
        %v2046 = vunpack.c.l.b16 %v553
        %v2047 = vunpack.c.h.b16 %v553
        %v2048 = vunpack.c.l.b16 %v554
        %v2049 = vunpack.c.h.b16 %v554
        %v2050 = vunpack.c.l.b16 %v555
        %v2051 = vunpack.c.h.b16 %v555
        %v2052 = vunpack.c.l.b16 %v556
        %v2053 = vunpack.c.h.b16 %v556
        %v2054 = vunpack.c.l.b16 %v557
        %v2055 = vunpack.c.h.b16 %v557
        %v2056 = vunpack.c.l.b16 %v558
        %v2057 = vunpack.c.h.b16 %v558
        %v2058 = vunpack.c.l.b16 %v559
        %v2059 = vunpack.c.h.b16 %v559
        %v2060 = vunpack.c.l.b16 %v560
        %v2061 = vunpack.c.h.b16 %v560
        %v2062 = vunpack.c.l.b16 %v561
        %v2063 = vunpack.c.h.b16 %v561
        %v2064 = vunpack.c.l.b16 %v562
        %v2065 = vunpack.c.h.b16 %v562
        %v2066 = vunpack.c.l.b16 %v563
        %v2067 = vunpack.c.h.b16 %v563
        %v2068 = vunpack.c.l.b16 %v564
        %v2069 = vunpack.c.h.b16 %v564
        %v2070 = vunpack.c.l.b16 %v565
        %v2071 = vunpack.c.h.b16 %v565
        %v2072 = vunpack.c.l.b16 %v566
        %v2073 = vunpack.c.h.b16 %v566
        %v2074 = vunpack.c.l.b16 %v567
        %v2075 = vunpack.c.h.b16 %v567
        %v2076 = vunpack.c.l.b16 %v568
        %v2077 = vunpack.c.h.b16 %v568
        %v2078 = vunpack.c.l.b16 %v569
        %v2079 = vunpack.c.h.b16 %v569
        %v2080 = vunpack.c.l.b16 %v570
        %v2081 = vunpack.c.h.b16 %v570
        %v2082 = vunpack.c.l.b16 %v571
        %v2083 = vunpack.c.h.b16 %v571
        %v2084 = vunpack.c.l.b16 %v572
        %v2085 = vunpack.c.h.b16 %v572
        %v2086 = vunpack.c.l.b16 %v573
        %v2087 = vunpack.c.h.b16 %v573
        %v2088 = vunpack.c.l.b16 %v574
        %v2089 = vunpack.c.h.b16 %v574
        %v2090 = vunpack.c.l.b16 %v575
        %v2091 = vunpack.c.h.b16 %v575
        %v2092 = vunpack.c.l.b16 %v576
        %v2093 = vunpack.c.h.b16 %v576
        %v2094 = vunpack.c.l.b16 %v577
        %v2095 = vunpack.c.h.b16 %v577
        %v2096 = vunpack.c.l.b16 %v578
        %v2097 = vunpack.c.h.b16 %v578
        %v2098 = vunpack.c.l.b16 %v579
        %v2099 = vunpack.c.h.b16 %v579
        %v2100 = vunpack.c.l.b16 %v580
        %v2101 = vunpack.c.h.b16 %v580
        %v2102 = vunpack.c.l.b16 %v581
        %v2103 = vunpack.c.h.b16 %v581
        %v2104 = vunpack.c.l.b16 %v582
        %v2105 = vunpack.c.h.b16 %v582
        %v2106 = vunpack.c.l.b16 %v583
        %v2107 = vunpack.c.h.b16 %v583
        %v2108 = vunpack.c.l.b16 %v584
        %v2109 = vunpack.c.h.b16 %v584
        %v2110 = vunpack.c.l.b16 %v585
        %v2111 = vunpack.c.h.b16 %v585
        %v2112 = vunpack.c.l.b16 %v586
        %v2113 = vunpack.c.h.b16 %v586
        %v2114 = vunpack.c.l.b16 %v587
        %v2115 = vunpack.c.h.b16 %v587
        %v2116 = vunpack.c.l.b16 %v588
        %v2117 = vunpack.c.h.b16 %v588
        %v2118 = vunpack.c.l.b16 %v589
        %v2119 = vunpack.c.h.b16 %v589
        %v2120 = vunpack.c.l.b16 %v590
        %v2121 = vunpack.c.h.b16 %v590
        %v2122 = vunpack.c.l.b16 %v591
        %v2123 = vunpack.c.h.b16 %v591
        %v2124 = vunpack.c.l.b16 %v592
        %v2125 = vunpack.c.h.b16 %v592
        %v2126 = vunpack.c.l.b16 %v593
        %v2127 = vunpack.c.h.b16 %v593
        %v2128 = vunpack.c.l.b16 %v594
        %v2129 = vunpack.c.h.b16 %v594
        %v2130 = vunpack.c.l.b16 %v595
        %v2131 = vunpack.c.h.b16 %v595
        %v2132 = vunpack.c.l.b16 %v596
        %v2133 = vunpack.c.h.b16 %v596
        %v2134 = vunpack.c.l.b16 %v597
        %v2135 = vunpack.c.h.b16 %v597
        %v2136 = vunpack.c.l.b16 %v598
        %v2137 = vunpack.c.h.b16 %v598
        %v2138 = vunpack.c.l.b16 %v599
        %v2139 = vunpack.c.h.b16 %v599
        %v2140 = vunpack.c.l.b16 %v600
        %v2141 = vunpack.c.h.b16 %v600
        %v2142 = vunpack.c.l.b16 %v601
        %v2143 = vunpack.c.h.b16 %v601
        %v2144 = vunpack.c.l.b16 %v602
        %v2145 = vunpack.c.h.b16 %v602
        %v2146 = vunpack.c.l.b16 %v603
        %v2147 = vunpack.c.h.b16 %v603
        %v2148 = vunpack.c.l.b16 %v604
        %v2149 = vunpack.c.h.b16 %v604
        %v2150 = vunpack.c.l.b16 %v605
        %v2151 = vunpack.c.h.b16 %v605
        %v2152 = vunpack.c.l.b16 %v606
        %v2153 = vunpack.c.h.b16 %v606
        %v2154 = vunpack.c.l.b16 %v607
        %v2155 = vunpack.c.h.b16 %v607
        %v2156 = vunpack.c.l.b16 %v608
        %v2157 = vunpack.c.h.b16 %v608
        %v2158 = vunpack.c.l.b16 %v609
        %v2159 = vunpack.c.h.b16 %v609
        %v2160 = vunpack.c.l.b16 %v610
        %v2161 = vunpack.c.h.b16 %v610
        %v2162 = vunpack.c.l.b16 %v611
        %v2163 = vunpack.c.h.b16 %v611
        %v2164 = vunpack.c.l.b16 %v612
        %v2165 = vunpack.c.h.b16 %v612
        %v2166 = vunpack.c.l.b16 %v613
        %v2167 = vunpack.c.h.b16 %v613
        %v2168 = vunpack.c.l.b16 %v614
        %v2169 = vunpack.c.h.b16 %v614
        %v2170 = vunpack.c.l.b16 %v615
        %v2171 = vunpack.c.h.b16 %v615
        %v2172 = vunpack.c.l.b16 %v616
        %v2173 = vunpack.c.h.b16 %v616
        %v2174 = vunpack.c.l.b16 %v617
        %v2175 = vunpack.c.h.b16 %v617
        %v2176 = vunpack.c.l.b16 %v618
        %v2177 = vunpack.c.h.b16 %v618
        %v2178 = vunpack.c.l.b16 %v619
        %v2179 = vunpack.c.h.b16 %v619
        %v2180 = vunpack.c.l.b16 %v620
        %v2181 = vunpack.c.h.b16 %v620
        %v2182 = vunpack.c.l.b16 %v621
        %v2183 = vunpack.c.h.b16 %v621
        %v2184 = vunpack.c.l.b16 %v622
        %v2185 = vunpack.c.h.b16 %v622
        %v2186 = vunpack.c.l.b16 %v623
        %v2187 = vunpack.c.h.b16 %v623
        %v2188 = vunpack.c.l.b16 %v624
        %v2189 = vunpack.c.h.b16 %v624
        %v2190 = vunpack.c.l.b16 %v625
        %v2191 = vunpack.c.h.b16 %v625
        %v2192 = vunpack.c.l.b16 %v626
        %v2193 = vunpack.c.h.b16 %v626
        %v2194 = vunpack.c.l.b16 %v627
        %v2195 = vunpack.c.h.b16 %v627
        %v2196 = vunpack.c.l.b16 %v628
        %v2197 = vunpack.c.h.b16 %v628
        %v2198 = vunpack.c.l.b16 %v629
        %v2199 = vunpack.c.h.b16 %v629
        %v2200 = vunpack.c.l.b16 %v630
        %v2201 = vunpack.c.h.b16 %v630
        %v2202 = vunpack.c.l.b16 %v631
        %v2203 = vunpack.c.h.b16 %v631
        %v2204 = vunpack.c.l.b16 %v632
        %v2205 = vunpack.c.h.b16 %v632
        %v2206 = vunpack.c.l.b16 %v633
        %v2207 = vunpack.c.h.b16 %v633
        %v2208 = vunpack.c.l.b16 %v634
        %v2209 = vunpack.c.h.b16 %v634
        %v2210 = vunpack.c.l.b16 %v635
        %v2211 = vunpack.c.h.b16 %v635
        %v2212 = vunpack.c.l.b16 %v636
        %v2213 = vunpack.c.h.b16 %v636
        %v2214 = vunpack.c.l.b16 %v637
        %v2215 = vunpack.c.h.b16 %v637
        %v2216 = vunpack.c.l.b16 %v638
        %v2217 = vunpack.c.h.b16 %v638
        %v2218 = vunpack.c.l.b16 %v639
        %v2219 = vunpack.c.h.b16 %v639
        %v2220 = vunpack.c.l.b16 %v640
        %v2221 = vunpack.c.h.b16 %v640
        %v2222 = vunpack.c.l.b16 %v641
        %v2223 = vunpack.c.h.b16 %v641
        %v2224 = vunpack.c.l.b16 %v642
        %v2225 = vunpack.c.h.b16 %v642
        %v2226 = vunpack.c.l.b16 %v643
        %v2227 = vunpack.c.h.b16 %v643
        %v2228 = vunpack.c.l.b16 %v644
        %v2229 = vunpack.c.h.b16 %v644
        %v2230 = vunpack.c.l.b16 %v645
        %v2231 = vunpack.c.h.b16 %v645
        %v2232 = vunpack.c.l.b16 %v646
        %v2233 = vunpack.c.h.b16 %v646
        %v2234 = vunpack.c.l.b16 %v647
        %v2235 = vunpack.c.h.b16 %v647
        %v2236 = vunpack.c.l.b16 %v648
        %v2237 = vunpack.c.h.b16 %v648
        %v2238 = vunpack.c.l.b16 %v649
        %v2239 = vunpack.c.h.b16 %v649
        %v2240 = vunpack.c.l.b16 %v650
        %v2241 = vunpack.c.h.b16 %v650
        %v2242 = vunpack.c.l.b16 %v651
        %v2243 = vunpack.c.h.b16 %v651
        %v2244 = vunpack.c.l.b16 %v652
        %v2245 = vunpack.c.h.b16 %v652
        %v2246 = vunpack.c.l.b16 %v653
        %v2247 = vunpack.c.h.b16 %v653
        %v2248 = vunpack.c.l.b16 %v654
        %v2249 = vunpack.c.h.b16 %v654
        %v2250 = vunpack.c.l.b16 %v655
        %v2251 = vunpack.c.h.b16 %v655
        %v2252 = vunpack.c.l.b16 %v656
        %v2253 = vunpack.c.h.b16 %v656
        %v2254 = vunpack.c.l.b16 %v657
        %v2255 = vunpack.c.h.b16 %v657
        %v2256 = vunpack.c.l.b16 %v658
        %v2257 = vunpack.c.h.b16 %v658
        %v2258 = vunpack.c.l.b16 %v659
        %v2259 = vunpack.c.h.b16 %v659
        %v2260 = vunpack.c.l.b16 %v660
        %v2261 = vunpack.c.h.b16 %v660
        %v2262 = vunpack.c.l.b16 %v661
        %v2263 = vunpack.c.h.b16 %v661
        %v2264 = vunpack.c.l.b16 %v662
        %v2265 = vunpack.c.h.b16 %v662
        %v2266 = vunpack.c.l.b16 %v663
        %v2267 = vunpack.c.h.b16 %v663
        %v2268 = vunpack.c.l.b16 %v664
        %v2269 = vunpack.c.h.b16 %v664
        %v2270 = vunpack.c.l.b16 %v665
        %v2271 = vunpack.c.h.b16 %v665
        %v2272 = vunpack.c.l.b16 %v666
        %v2273 = vunpack.c.h.b16 %v666
        %v2274 = vunpack.c.l.b16 %v667
        %v2275 = vunpack.c.h.b16 %v667
        %v2276 = vunpack.c.l.b16 %v668
        %v2277 = vunpack.c.h.b16 %v668
        %v2278 = vunpack.c.l.b16 %v669
        %v2279 = vunpack.c.h.b16 %v669
        %v2280 = vunpack.c.l.b16 %v670
        %v2281 = vunpack.c.h.b16 %v670
        %v2282 = vunpack.c.l.b16 %v671
        %v2283 = vunpack.c.h.b16 %v671
        %v2284 = vunpack.c.l.b16 %v672
        %v2285 = vunpack.c.h.b16 %v672
        %v2286 = vunpack.c.l.b16 %v673
        %v2287 = vunpack.c.h.b16 %v673
        %v2288 = vunpack.c.l.b16 %v674
        %v2289 = vunpack.c.h.b16 %v674
        %v2290 = vunpack.c.l.b16 %v675
        %v2291 = vunpack.c.h.b16 %v675
        %v2292 = vunpack.c.l.b16 %v676
        %v2293 = vunpack.c.h.b16 %v676
        %v2294 = vunpack.c.l.b16 %v677
        %v2295 = vunpack.c.h.b16 %v677
        %v2296 = vunpack.c.l.b16 %v678
        %v2297 = vunpack.c.h.b16 %v678
        %v2298 = vunpack.c.l.b16 %v679
        %v2299 = vunpack.c.h.b16 %v679
        %v2300 = vunpack.c.l.b16 %v680
        %v2301 = vunpack.c.h.b16 %v680
        %v2302 = vunpack.c.l.b16 %v681
        %v2303 = vunpack.c.h.b16 %v681
        %v2304 = vunpack.c.l.b16 %v682
        %v2305 = vunpack.c.h.b16 %v682
        %v2306 = vunpack.c.l.b16 %v683
        %v2307 = vunpack.c.h.b16 %v683
        %v2308 = vunpack.c.l.b16 %v684
        %v2309 = vunpack.c.h.b16 %v684
        %v2310 = vunpack.c.l.b16 %v685
        %v2311 = vunpack.c.h.b16 %v685
        %v2312 = vunpack.c.l.b16 %v686
        %v2313 = vunpack.c.h.b16 %v686
        %v2314 = vunpack.c.l.b16 %v687
        %v2315 = vunpack.c.h.b16 %v687
        %v2316 = vunpack.c.l.b16 %v688
        %v2317 = vunpack.c.h.b16 %v688
        %v2318 = vunpack.c.l.b16 %v689
        %v2319 = vunpack.c.h.b16 %v689
        %v2320 = vunpack.c.l.b16 %v690
        %v2321 = vunpack.c.h.b16 %v690
        %v2322 = vunpack.c.l.b16 %v691
        %v2323 = vunpack.c.h.b16 %v691
        %v2324 = vunpack.c.l.b16 %v692
        %v2325 = vunpack.c.h.b16 %v692
        %v2326 = vunpack.c.l.b16 %v693
        %v2327 = vunpack.c.h.b16 %v693
        %v2328 = vunpack.c.l.b16 %v694
        %v2329 = vunpack.c.h.b16 %v694
        %v2330 = vunpack.c.l.b16 %v695
        %v2331 = vunpack.c.h.b16 %v695
        %v2332 = vunpack.c.l.b16 %v696
        %v2333 = vunpack.c.h.b16 %v696
        %v2334 = vunpack.c.l.b16 %v697
        %v2335 = vunpack.c.h.b16 %v697
        %v2336 = vunpack.c.l.b16 %v698
        %v2337 = vunpack.c.h.b16 %v698
        %v2338 = vunpack.c.l.b16 %v699
        %v2339 = vunpack.c.h.b16 %v699
        %v2340 = vunpack.c.l.b16 %v700
        %v2341 = vunpack.c.h.b16 %v700
        %v2342 = vunpack.c.l.b16 %v701
        %v2343 = vunpack.c.h.b16 %v701
        %v2344 = vunpack.c.l.b16 %v702
        %v2345 = vunpack.c.h.b16 %v702
        %v2346 = vunpack.c.l.b16 %v703
        %v2347 = vunpack.c.h.b16 %v703
        %v2348 = vunpack.c.l.b16 %v704
        %v2349 = vunpack.c.h.b16 %v704
        %v2350 = vunpack.c.l.b16 %v705
        %v2351 = vunpack.c.h.b16 %v705
        %v2352 = vunpack.c.l.b16 %v706
        %v2353 = vunpack.c.h.b16 %v706
        %v2354 = vunpack.c.l.b16 %v707
        %v2355 = vunpack.c.h.b16 %v707
        %v2356 = vunpack.c.l.b16 %v708
        %v2357 = vunpack.c.h.b16 %v708
        %v2358 = vunpack.c.l.b16 %v709
        %v2359 = vunpack.c.h.b16 %v709
        %v2360 = vunpack.c.l.b16 %v710
        %v2361 = vunpack.c.h.b16 %v710
        %v2362 = vunpack.c.l.b16 %v711
        %v2363 = vunpack.c.h.b16 %v711
        %v2364 = vunpack.c.l.b16 %v712
        %v2365 = vunpack.c.h.b16 %v712
        %v2366 = vunpack.c.l.b16 %v713
        %v2367 = vunpack.c.h.b16 %v713
        %v2368 = vunpack.c.l.b16 %v714
        %v2369 = vunpack.c.h.b16 %v714
        %v2370 = vunpack.c.l.b16 %v715
        %v2371 = vunpack.c.h.b16 %v715
        %v2372 = vunpack.c.l.b16 %v716
        %v2373 = vunpack.c.h.b16 %v716
        %v2374 = vunpack.c.l.b16 %v717
        %v2375 = vunpack.c.h.b16 %v717
        %v2376 = vunpack.c.l.b16 %v718
        %v2377 = vunpack.c.h.b16 %v718
        %v2378 = vunpack.c.l.b16 %v719
        %v2379 = vunpack.c.h.b16 %v719
        %v2380 = vunpack.c.l.b16 %v720
        %v2381 = vunpack.c.h.b16 %v720
        %v2382 = vunpack.c.l.b16 %v721
        %v2383 = vunpack.c.h.b16 %v721
        %v2384 = vunpack.c.l.b16 %v722
        %v2385 = vunpack.c.h.b16 %v722
        %v2386 = vunpack.c.l.b16 %v723
        %v2387 = vunpack.c.h.b16 %v723
        %v2388 = vunpack.c.l.b16 %v724
        %v2389 = vunpack.c.h.b16 %v724
        %v2390 = vunpack.c.l.b16 %v725
        %v2391 = vunpack.c.h.b16 %v725
        %v2392 = vunpack.c.l.b16 %v726
        %v2393 = vunpack.c.h.b16 %v726
        %v2394 = vunpack.c.l.b16 %v727
        %v2395 = vunpack.c.h.b16 %v727
        %v2396 = vunpack.c.l.b16 %v728
        %v2397 = vunpack.c.h.b16 %v728
        %v2398 = vunpack.c.l.b16 %v729
        %v2399 = vunpack.c.h.b16 %v729
        %v2400 = vunpack.c.l.b16 %v730
        %v2401 = vunpack.c.h.b16 %v730
        %v2402 = vunpack.c.l.b16 %v731
        %v2403 = vunpack.c.h.b16 %v731
        %v2404 = vunpack.c.l.b16 %v732
        %v2405 = vunpack.c.h.b16 %v732
        %v2406 = vunpack.c.l.b16 %v733
        %v2407 = vunpack.c.h.b16 %v733
        %v2408 = vunpack.c.l.b16 %v734
        %v2409 = vunpack.c.h.b16 %v734
        %v2410 = vunpack.c.l.b16 %v735
        %v2411 = vunpack.c.h.b16 %v735
        %v2412 = vunpack.c.l.b16 %v736
        %v2413 = vunpack.c.h.b16 %v736
        %v2414 = vunpack.c.l.b16 %v737
        %v2415 = vunpack.c.h.b16 %v737
        %v2416 = vunpack.c.l.b16 %v738
        %v2417 = vunpack.c.h.b16 %v738
        %v2418 = vunpack.c.l.b16 %v739
        %v2419 = vunpack.c.h.b16 %v739
        %v2420 = vunpack.c.l.b16 %v740
        %v2421 = vunpack.c.h.b16 %v740
        %v2422 = vunpack.c.l.b16 %v741
        %v2423 = vunpack.c.h.b16 %v741
        %v2424 = vunpack.c.l.b16 %v742
        %v2425 = vunpack.c.h.b16 %v742
        %v2426 = vunpack.c.l.b16 %v743
        %v2427 = vunpack.c.h.b16 %v743
        %v2428 = vunpack.c.l.b16 %v744
        %v2429 = vunpack.c.h.b16 %v744
        %v2430 = vunpack.c.l.b16 %v745
        %v2431 = vunpack.c.h.b16 %v745
        %v2432 = vunpack.c.l.b16 %v746
        %v2433 = vunpack.c.h.b16 %v746
        %v2434 = vunpack.c.l.b16 %v747
        %v2435 = vunpack.c.h.b16 %v747
        %v2436 = vunpack.c.l.b16 %v748
        %v2437 = vunpack.c.h.b16 %v748
        %v2438 = vunpack.c.l.b16 %v749
        %v2439 = vunpack.c.h.b16 %v749
        %v2440 = vunpack.c.l.b16 %v750
        %v2441 = vunpack.c.h.b16 %v750
        %v2442 = vunpack.c.l.b16 %v751
        %v2443 = vunpack.c.h.b16 %v751
        %v2444 = vunpack.c.l.b16 %v752
        %v2445 = vunpack.c.h.b16 %v752
        %v2446 = vunpack.c.l.b16 %v753
        %v2447 = vunpack.c.h.b16 %v753
        %v2448 = vunpack.c.l.b16 %v754
        %v2449 = vunpack.c.h.b16 %v754
        %v2450 = vunpack.c.l.b16 %v755
        %v2451 = vunpack.c.h.b16 %v755
        %v2452 = vpack.c.b16 %v1432, %v1428
        %v2453 = vpack.c.b16 %v1433, %v1429
        %v2454 = vpack.c.b16 %v1434, %v1430
        %v2455 = vpack.c.b16 %v1435, %v1431
        %v2456 = vpack.c.b16 %v1440, %v1436
        %v2457 = vpack.c.b16 %v1441, %v1437
        %v2458 = vpack.c.b16 %v1442, %v1438
        %v2459 = vpack.c.b16 %v1443, %v1439
        %v2460 = vpack.c.b16 %v1448, %v1444
        %v2461 = vpack.c.b16 %v1449, %v1445
        %v2462 = vpack.c.b16 %v1450, %v1446
        %v2463 = vpack.c.b16 %v1451, %v1447
        %v2464 = vpack.c.b16 %v1456, %v1452
        %v2465 = vpack.c.b16 %v1457, %v1453
        %v2466 = vpack.c.b16 %v1458, %v1454
        %v2467 = vpack.c.b16 %v1459, %v1455
        %v2468 = vpack.c.b16 %v1464, %v1460
        %v2469 = vpack.c.b16 %v1465, %v1461
        %v2470 = vpack.c.b16 %v1466, %v1462
        %v2471 = vpack.c.b16 %v1467, %v1463
        %v2472 = vpack.c.b16 %v1472, %v1468
        %v2473 = vpack.c.b16 %v1473, %v1469
        %v2474 = vpack.c.b16 %v1474, %v1470
        %v2475 = vpack.c.b16 %v1475, %v1471
        %v2476 = vpack.c.b16 %v1480, %v1476
        %v2477 = vpack.c.b16 %v1481, %v1477
        %v2478 = vpack.c.b16 %v1482, %v1478
        %v2479 = vpack.c.b16 %v1483, %v1479
        %v2480 = vpack.c.b16 %v1488, %v1484
        %v2481 = vpack.c.b16 %v1489, %v1485
        %v2482 = vpack.c.b16 %v1490, %v1486
        %v2483 = vpack.c.b16 %v1491, %v1487
        %v2484 = vpack.c.b16 %v1496, %v1492
        %v2485 = vpack.c.b16 %v1497, %v1493
        %v2486 = vpack.c.b16 %v1498, %v1494
        %v2487 = vpack.c.b16 %v1499, %v1495
        %v2488 = vpack.c.b16 %v1504, %v1500
        %v2489 = vpack.c.b16 %v1505, %v1501
        %v2490 = vpack.c.b16 %v1506, %v1502
        %v2491 = vpack.c.b16 %v1507, %v1503
        %v2492 = vpack.c.b16 %v1512, %v1508
        %v2493 = vpack.c.b16 %v1513, %v1509
        %v2494 = vpack.c.b16 %v1514, %v1510
        %v2495 = vpack.c.b16 %v1515, %v1511
        %v2496 = vpack.c.b16 %v1520, %v1516
        %v2497 = vpack.c.b16 %v1521, %v1517
        %v2498 = vpack.c.b16 %v1522, %v1518
        %v2499 = vpack.c.b16 %v1523, %v1519
        %v2500 = vpack.c.b16 %v1528, %v1524
        %v2501 = vpack.c.b16 %v1529, %v1525
        %v2502 = vpack.c.b16 %v1530, %v1526
        %v2503 = vpack.c.b16 %v1531, %v1527
        %v2504 = vpack.c.b16 %v1536, %v1532
        %v2505 = vpack.c.b16 %v1537, %v1533
        %v2506 = vpack.c.b16 %v1538, %v1534
        %v2507 = vpack.c.b16 %v1539, %v1535
        %v2508 = vpack.c.b16 %v1544, %v1540
        %v2509 = vpack.c.b16 %v1545, %v1541
        %v2510 = vpack.c.b16 %v1546, %v1542
        %v2511 = vpack.c.b16 %v1547, %v1543
        %v2512 = vpack.c.b16 %v1552, %v1548
        %v2513 = vpack.c.b16 %v1553, %v1549
        %v2514 = vpack.c.b16 %v1554, %v1550
        %v2515 = vpack.c.b16 %v1555, %v1551
        %v2516 = vpack.c.b16 %v1560, %v1556
        %v2517 = vpack.c.b16 %v1561, %v1557
        %v2518 = vpack.c.b16 %v1562, %v1558
        %v2519 = vpack.c.b16 %v1563, %v1559
        %v2520 = vpack.c.b16 %v1568, %v1564
        %v2521 = vpack.c.b16 %v1569, %v1565
        %v2522 = vpack.c.b16 %v1570, %v1566
        %v2523 = vpack.c.b16 %v1571, %v1567
        %v2524 = vpack.c.b16 %v1576, %v1572
        %v2525 = vpack.c.b16 %v1577, %v1573
        %v2526 = vpack.c.b16 %v1578, %v1574
        %v2527 = vpack.c.b16 %v1579, %v1575
        %v2528 = vpack.c.b16 %v1584, %v1580
        %v2529 = vpack.c.b16 %v1585, %v1581
        %v2530 = vpack.c.b16 %v1586, %v1582
        %v2531 = vpack.c.b16 %v1587, %v1583
        %v2532 = vpack.c.b16 %v1592, %v1588
        %v2533 = vpack.c.b16 %v1593, %v1589
        %v2534 = vpack.c.b16 %v1594, %v1590
        %v2535 = vpack.c.b16 %v1595, %v1591
        %v2536 = vpack.c.b16 %v1600, %v1596
        %v2537 = vpack.c.b16 %v1601, %v1597
        %v2538 = vpack.c.b16 %v1602, %v1598
        %v2539 = vpack.c.b16 %v1603, %v1599
        %v2540 = vpack.c.b16 %v1608, %v1604
        %v2541 = vpack.c.b16 %v1609, %v1605
        %v2542 = vpack.c.b16 %v1610, %v1606
        %v2543 = vpack.c.b16 %v1611, %v1607
        %v2544 = vpack.c.b16 %v1616, %v1612
        %v2545 = vpack.c.b16 %v1617, %v1613
        %v2546 = vpack.c.b16 %v1618, %v1614
        %v2547 = vpack.c.b16 %v1619, %v1615
        %v2548 = vpack.c.b16 %v1624, %v1620
        %v2549 = vpack.c.b16 %v1625, %v1621
        %v2550 = vpack.c.b16 %v1626, %v1622
        %v2551 = vpack.c.b16 %v1627, %v1623
        %v2552 = vpack.c.b16 %v1632, %v1628
        %v2553 = vpack.c.b16 %v1633, %v1629
        %v2554 = vpack.c.b16 %v1634, %v1630
        %v2555 = vpack.c.b16 %v1635, %v1631
        %v2556 = vpack.c.b16 %v1640, %v1636
        %v2557 = vpack.c.b16 %v1641, %v1637
        %v2558 = vpack.c.b16 %v1642, %v1638
        %v2559 = vpack.c.b16 %v1643, %v1639
        %v2560 = vpack.c.b16 %v1648, %v1644
        %v2561 = vpack.c.b16 %v1649, %v1645
        %v2562 = vpack.c.b16 %v1650, %v1646
        %v2563 = vpack.c.b16 %v1651, %v1647
        %v2564 = vpack.c.b16 %v1656, %v1652
        %v2565 = vpack.c.b16 %v1657, %v1653
        %v2566 = vpack.c.b16 %v1658, %v1654
        %v2567 = vpack.c.b16 %v1659, %v1655
        %v2568 = vpack.c.b16 %v1664, %v1660
        %v2569 = vpack.c.b16 %v1665, %v1661
        %v2570 = vpack.c.b16 %v1666, %v1662
        %v2571 = vpack.c.b16 %v1667, %v1663
        %v2572 = vpack.c.b16 %v1672, %v1668
        %v2573 = vpack.c.b16 %v1673, %v1669
        %v2574 = vpack.c.b16 %v1674, %v1670
        %v2575 = vpack.c.b16 %v1675, %v1671
        %v2576 = vpack.c.b16 %v1680, %v1676
        %v2577 = vpack.c.b16 %v1681, %v1677
        %v2578 = vpack.c.b16 %v1682, %v1678
        %v2579 = vpack.c.b16 %v1683, %v1679
        %v2580 = vpack.c.b16 %v1688, %v1684
        %v2581 = vpack.c.b16 %v1689, %v1685
        %v2582 = vpack.c.b16 %v1690, %v1686
        %v2583 = vpack.c.b16 %v1691, %v1687
        %v2584 = vpack.c.b16 %v1696, %v1692
        %v2585 = vpack.c.b16 %v1697, %v1693
        %v2586 = vpack.c.b16 %v1698, %v1694
        %v2587 = vpack.c.b16 %v1699, %v1695
        %v2588 = vpack.c.b16 %v1704, %v1700
        %v2589 = vpack.c.b16 %v1705, %v1701
        %v2590 = vpack.c.b16 %v1706, %v1702
        %v2591 = vpack.c.b16 %v1707, %v1703
        %v2592 = vpack.c.b16 %v1712, %v1708
        %v2593 = vpack.c.b16 %v1713, %v1709
        %v2594 = vpack.c.b16 %v1714, %v1710
        %v2595 = vpack.c.b16 %v1715, %v1711
        %v2596 = vpack.c.b16 %v1720, %v1716
        %v2597 = vpack.c.b16 %v1721, %v1717
        %v2598 = vpack.c.b16 %v1722, %v1718
        %v2599 = vpack.c.b16 %v1723, %v1719
        %v2600 = vpack.c.b16 %v1728, %v1724
        %v2601 = vpack.c.b16 %v1729, %v1725
        %v2602 = vpack.c.b16 %v1730, %v1726
        %v2603 = vpack.c.b16 %v1731, %v1727
        %v2604 = vpack.c.b16 %v1736, %v1732
        %v2605 = vpack.c.b16 %v1737, %v1733
        %v2606 = vpack.c.b16 %v1738, %v1734
        %v2607 = vpack.c.b16 %v1739, %v1735
        %v2608 = vpack.c.b16 %v1744, %v1740
        %v2609 = vpack.c.b16 %v1745, %v1741
        %v2610 = vpack.c.b16 %v1746, %v1742
        %v2611 = vpack.c.b16 %v1747, %v1743
        %v2612 = vpack.c.b16 %v1752, %v1748
        %v2613 = vpack.c.b16 %v1753, %v1749
        %v2614 = vpack.c.b16 %v1754, %v1750
        %v2615 = vpack.c.b16 %v1755, %v1751
        %v2616 = vpack.c.b16 %v1760, %v1756
        %v2617 = vpack.c.b16 %v1761, %v1757
        %v2618 = vpack.c.b16 %v1762, %v1758
        %v2619 = vpack.c.b16 %v1763, %v1759
        %v2620 = vpack.c.b16 %v1768, %v1764
        %v2621 = vpack.c.b16 %v1769, %v1765
        %v2622 = vpack.c.b16 %v1770, %v1766
        %v2623 = vpack.c.b16 %v1771, %v1767
        %v2624 = vpack.c.b16 %v1776, %v1772
        %v2625 = vpack.c.b16 %v1777, %v1773
        %v2626 = vpack.c.b16 %v1778, %v1774
        %v2627 = vpack.c.b16 %v1779, %v1775
        %v2628 = vpack.c.b16 %v1784, %v1780
        %v2629 = vpack.c.b16 %v1785, %v1781
        %v2630 = vpack.c.b16 %v1786, %v1782
        %v2631 = vpack.c.b16 %v1787, %v1783
        %v2632 = vpack.c.b16 %v1792, %v1788
        %v2633 = vpack.c.b16 %v1793, %v1789
        %v2634 = vpack.c.b16 %v1794, %v1790
        %v2635 = vpack.c.b16 %v1795, %v1791
        %v2636 = vpack.c.b16 %v1800, %v1796
        %v2637 = vpack.c.b16 %v1801, %v1797
        %v2638 = vpack.c.b16 %v1802, %v1798
        %v2639 = vpack.c.b16 %v1803, %v1799
        %v2640 = vpack.c.b16 %v1808, %v1804
        %v2641 = vpack.c.b16 %v1809, %v1805
        %v2642 = vpack.c.b16 %v1810, %v1806
        %v2643 = vpack.c.b16 %v1811, %v1807
        %v2644 = vpack.c.b16 %v1816, %v1812
        %v2645 = vpack.c.b16 %v1817, %v1813
        %v2646 = vpack.c.b16 %v1818, %v1814
        %v2647 = vpack.c.b16 %v1819, %v1815
        %v2648 = vpack.c.b16 %v1824, %v1820
        %v2649 = vpack.c.b16 %v1825, %v1821
        %v2650 = vpack.c.b16 %v1826, %v1822
        %v2651 = vpack.c.b16 %v1827, %v1823
        %v2652 = vpack.c.b16 %v1832, %v1828
        %v2653 = vpack.c.b16 %v1833, %v1829
        %v2654 = vpack.c.b16 %v1834, %v1830
        %v2655 = vpack.c.b16 %v1835, %v1831
        %v2656 = vpack.c.b16 %v1840, %v1836
        %v2657 = vpack.c.b16 %v1841, %v1837
        %v2658 = vpack.c.b16 %v1842, %v1838
        %v2659 = vpack.c.b16 %v1843, %v1839
        %v2660 = vpack.c.b16 %v1848, %v1844
        %v2661 = vpack.c.b16 %v1849, %v1845
        %v2662 = vpack.c.b16 %v1850, %v1846
        %v2663 = vpack.c.b16 %v1851, %v1847
        %v2664 = vpack.c.b16 %v1856, %v1852
        %v2665 = vpack.c.b16 %v1857, %v1853
        %v2666 = vpack.c.b16 %v1858, %v1854
        %v2667 = vpack.c.b16 %v1859, %v1855
        %v2668 = vpack.c.b16 %v1864, %v1860
        %v2669 = vpack.c.b16 %v1865, %v1861
        %v2670 = vpack.c.b16 %v1866, %v1862
        %v2671 = vpack.c.b16 %v1867, %v1863
        %v2672 = vpack.c.b16 %v1872, %v1868
        %v2673 = vpack.c.b16 %v1873, %v1869
        %v2674 = vpack.c.b16 %v1874, %v1870
        %v2675 = vpack.c.b16 %v1875, %v1871
        %v2676 = vpack.c.b16 %v1880, %v1876
        %v2677 = vpack.c.b16 %v1881, %v1877
        %v2678 = vpack.c.b16 %v1882, %v1878
        %v2679 = vpack.c.b16 %v1883, %v1879
        %v2680 = vpack.c.b16 %v1888, %v1884
        %v2681 = vpack.c.b16 %v1889, %v1885
        %v2682 = vpack.c.b16 %v1890, %v1886
        %v2683 = vpack.c.b16 %v1891, %v1887
        %v2684 = vpack.c.b16 %v1896, %v1892
        %v2685 = vpack.c.b16 %v1897, %v1893
        %v2686 = vpack.c.b16 %v1898, %v1894
        %v2687 = vpack.c.b16 %v1899, %v1895
        %v2688 = vpack.c.b16 %v1904, %v1900
        %v2689 = vpack.c.b16 %v1905, %v1901
        %v2690 = vpack.c.b16 %v1906, %v1902
        %v2691 = vpack.c.b16 %v1907, %v1903
        %v2692 = vpack.c.b16 %v1912, %v1908
        %v2693 = vpack.c.b16 %v1913, %v1909
        %v2694 = vpack.c.b16 %v1914, %v1910
        %v2695 = vpack.c.b16 %v1915, %v1911
        %v2696 = vpack.c.b16 %v1920, %v1916
        %v2697 = vpack.c.b16 %v1921, %v1917
        %v2698 = vpack.c.b16 %v1922, %v1918
        %v2699 = vpack.c.b16 %v1923, %v1919
        %v2700 = vpack.c.b16 %v1928, %v1924
        %v2701 = vpack.c.b16 %v1929, %v1925
        %v2702 = vpack.c.b16 %v1930, %v1926
        %v2703 = vpack.c.b16 %v1931, %v1927
        %v2704 = vpack.c.b16 %v1936, %v1932
        %v2705 = vpack.c.b16 %v1937, %v1933
        %v2706 = vpack.c.b16 %v1938, %v1934
        %v2707 = vpack.c.b16 %v1939, %v1935
        %v2708 = vpack.c.b16 %v1944, %v1940
        %v2709 = vpack.c.b16 %v1945, %v1941
        %v2710 = vpack.c.b16 %v1946, %v1942
        %v2711 = vpack.c.b16 %v1947, %v1943
        %v2712 = vpack.c.b16 %v1952, %v1948
        %v2713 = vpack.c.b16 %v1953, %v1949
        %v2714 = vpack.c.b16 %v1954, %v1950
        %v2715 = vpack.c.b16 %v1955, %v1951
        %v2716 = vpack.c.b16 %v1960, %v1956
        %v2717 = vpack.c.b16 %v1961, %v1957
        %v2718 = vpack.c.b16 %v1962, %v1958
        %v2719 = vpack.c.b16 %v1963, %v1959
        %v2720 = vpack.c.b16 %v1968, %v1964
        %v2721 = vpack.c.b16 %v1969, %v1965
        %v2722 = vpack.c.b16 %v1970, %v1966
        %v2723 = vpack.c.b16 %v1971, %v1967
        %v2724 = vpack.c.b16 %v1976, %v1972
        %v2725 = vpack.c.b16 %v1977, %v1973
        %v2726 = vpack.c.b16 %v1978, %v1974
        %v2727 = vpack.c.b16 %v1979, %v1975
        %v2728 = vpack.c.b16 %v1984, %v1980
        %v2729 = vpack.c.b16 %v1985, %v1981
        %v2730 = vpack.c.b16 %v1986, %v1982
        %v2731 = vpack.c.b16 %v1987, %v1983
        %v2732 = vpack.c.b16 %v1992, %v1988
        %v2733 = vpack.c.b16 %v1993, %v1989
        %v2734 = vpack.c.b16 %v1994, %v1990
        %v2735 = vpack.c.b16 %v1995, %v1991
        %v2736 = vpack.c.b16 %v2000, %v1996
        %v2737 = vpack.c.b16 %v2001, %v1997
        %v2738 = vpack.c.b16 %v2002, %v1998
        %v2739 = vpack.c.b16 %v2003, %v1999
        %v2740 = vpack.c.b16 %v2008, %v2004
        %v2741 = vpack.c.b16 %v2009, %v2005
        %v2742 = vpack.c.b16 %v2010, %v2006
        %v2743 = vpack.c.b16 %v2011, %v2007
        %v2744 = vpack.c.b16 %v2016, %v2012
        %v2745 = vpack.c.b16 %v2017, %v2013
        %v2746 = vpack.c.b16 %v2018, %v2014
        %v2747 = vpack.c.b16 %v2019, %v2015
        %v2748 = vpack.c.b16 %v2024, %v2020
        %v2749 = vpack.c.b16 %v2025, %v2021
        %v2750 = vpack.c.b16 %v2026, %v2022
        %v2751 = vpack.c.b16 %v2027, %v2023
        %v2752 = vpack.c.b16 %v2032, %v2028
        %v2753 = vpack.c.b16 %v2033, %v2029
        %v2754 = vpack.c.b16 %v2034, %v2030
        %v2755 = vpack.c.b16 %v2035, %v2031
        %v2756 = vpack.c.b16 %v2040, %v2036
        %v2757 = vpack.c.b16 %v2041, %v2037
        %v2758 = vpack.c.b16 %v2042, %v2038
        %v2759 = vpack.c.b16 %v2043, %v2039
        %v2760 = vpack.c.b16 %v2048, %v2044
        %v2761 = vpack.c.b16 %v2049, %v2045
        %v2762 = vpack.c.b16 %v2050, %v2046
        %v2763 = vpack.c.b16 %v2051, %v2047
        %v2764 = vpack.c.b16 %v2056, %v2052
        %v2765 = vpack.c.b16 %v2057, %v2053
        %v2766 = vpack.c.b16 %v2058, %v2054
        %v2767 = vpack.c.b16 %v2059, %v2055
        %v2768 = vpack.c.b16 %v2064, %v2060
        %v2769 = vpack.c.b16 %v2065, %v2061
        %v2770 = vpack.c.b16 %v2066, %v2062
        %v2771 = vpack.c.b16 %v2067, %v2063
        %v2772 = vpack.c.b16 %v2072, %v2068
        %v2773 = vpack.c.b16 %v2073, %v2069
        %v2774 = vpack.c.b16 %v2074, %v2070
        %v2775 = vpack.c.b16 %v2075, %v2071
        %v2776 = vpack.c.b16 %v2080, %v2076
        %v2777 = vpack.c.b16 %v2081, %v2077
        %v2778 = vpack.c.b16 %v2082, %v2078
        %v2779 = vpack.c.b16 %v2083, %v2079
        %v2780 = vpack.c.b16 %v2088, %v2084
        %v2781 = vpack.c.b16 %v2089, %v2085
        %v2782 = vpack.c.b16 %v2090, %v2086
        %v2783 = vpack.c.b16 %v2091, %v2087
        %v2784 = vpack.c.b16 %v2096, %v2092
        %v2785 = vpack.c.b16 %v2097, %v2093
        %v2786 = vpack.c.b16 %v2098, %v2094
        %v2787 = vpack.c.b16 %v2099, %v2095
        %v2788 = vpack.c.b16 %v2104, %v2100
        %v2789 = vpack.c.b16 %v2105, %v2101
        %v2790 = vpack.c.b16 %v2106, %v2102
        %v2791 = vpack.c.b16 %v2107, %v2103
        %v2792 = vpack.c.b16 %v2112, %v2108
        %v2793 = vpack.c.b16 %v2113, %v2109
        %v2794 = vpack.c.b16 %v2114, %v2110
        %v2795 = vpack.c.b16 %v2115, %v2111
        %v2796 = vpack.c.b16 %v2120, %v2116
        %v2797 = vpack.c.b16 %v2121, %v2117
        %v2798 = vpack.c.b16 %v2122, %v2118
        %v2799 = vpack.c.b16 %v2123, %v2119
        %v2800 = vpack.c.b16 %v2128, %v2124
        %v2801 = vpack.c.b16 %v2129, %v2125
        %v2802 = vpack.c.b16 %v2130, %v2126
        %v2803 = vpack.c.b16 %v2131, %v2127
        %v2804 = vpack.c.b16 %v2136, %v2132
        %v2805 = vpack.c.b16 %v2137, %v2133
        %v2806 = vpack.c.b16 %v2138, %v2134
        %v2807 = vpack.c.b16 %v2139, %v2135
        %v2808 = vpack.c.b16 %v2144, %v2140
        %v2809 = vpack.c.b16 %v2145, %v2141
        %v2810 = vpack.c.b16 %v2146, %v2142
        %v2811 = vpack.c.b16 %v2147, %v2143
        %v2812 = vpack.c.b16 %v2152, %v2148
        %v2813 = vpack.c.b16 %v2153, %v2149
        %v2814 = vpack.c.b16 %v2154, %v2150
        %v2815 = vpack.c.b16 %v2155, %v2151
        %v2816 = vpack.c.b16 %v2160, %v2156
        %v2817 = vpack.c.b16 %v2161, %v2157
        %v2818 = vpack.c.b16 %v2162, %v2158
        %v2819 = vpack.c.b16 %v2163, %v2159
        %v2820 = vpack.c.b16 %v2168, %v2164
        %v2821 = vpack.c.b16 %v2169, %v2165
        %v2822 = vpack.c.b16 %v2170, %v2166
        %v2823 = vpack.c.b16 %v2171, %v2167
        %v2824 = vpack.c.b16 %v2176, %v2172
        %v2825 = vpack.c.b16 %v2177, %v2173
        %v2826 = vpack.c.b16 %v2178, %v2174
        %v2827 = vpack.c.b16 %v2179, %v2175
        %v2828 = vpack.c.b16 %v2184, %v2180
        %v2829 = vpack.c.b16 %v2185, %v2181
        %v2830 = vpack.c.b16 %v2186, %v2182
        %v2831 = vpack.c.b16 %v2187, %v2183
        %v2832 = vpack.c.b16 %v2192, %v2188
        %v2833 = vpack.c.b16 %v2193, %v2189
        %v2834 = vpack.c.b16 %v2194, %v2190
        %v2835 = vpack.c.b16 %v2195, %v2191
        %v2836 = vpack.c.b16 %v2200, %v2196
        %v2837 = vpack.c.b16 %v2201, %v2197
        %v2838 = vpack.c.b16 %v2202, %v2198
        %v2839 = vpack.c.b16 %v2203, %v2199
        %v2840 = vpack.c.b16 %v2208, %v2204
        %v2841 = vpack.c.b16 %v2209, %v2205
        %v2842 = vpack.c.b16 %v2210, %v2206
        %v2843 = vpack.c.b16 %v2211, %v2207
        %v2844 = vpack.c.b16 %v2216, %v2212
        %v2845 = vpack.c.b16 %v2217, %v2213
        %v2846 = vpack.c.b16 %v2218, %v2214
        %v2847 = vpack.c.b16 %v2219, %v2215
        %v2848 = vpack.c.b16 %v2224, %v2220
        %v2849 = vpack.c.b16 %v2225, %v2221
        %v2850 = vpack.c.b16 %v2226, %v2222
        %v2851 = vpack.c.b16 %v2227, %v2223
        %v2852 = vpack.c.b16 %v2232, %v2228
        %v2853 = vpack.c.b16 %v2233, %v2229
        %v2854 = vpack.c.b16 %v2234, %v2230
        %v2855 = vpack.c.b16 %v2235, %v2231
        %v2856 = vpack.c.b16 %v2240, %v2236
        %v2857 = vpack.c.b16 %v2241, %v2237
        %v2858 = vpack.c.b16 %v2242, %v2238
        %v2859 = vpack.c.b16 %v2243, %v2239
        %v2860 = vpack.c.b16 %v2248, %v2244
        %v2861 = vpack.c.b16 %v2249, %v2245
        %v2862 = vpack.c.b16 %v2250, %v2246
        %v2863 = vpack.c.b16 %v2251, %v2247
        %v2864 = vpack.c.b16 %v2256, %v2252
        %v2865 = vpack.c.b16 %v2257, %v2253
        %v2866 = vpack.c.b16 %v2258, %v2254
        %v2867 = vpack.c.b16 %v2259, %v2255
        %v2868 = vpack.c.b16 %v2264, %v2260
        %v2869 = vpack.c.b16 %v2265, %v2261
        %v2870 = vpack.c.b16 %v2266, %v2262
        %v2871 = vpack.c.b16 %v2267, %v2263
        %v2872 = vpack.c.b16 %v2272, %v2268
        %v2873 = vpack.c.b16 %v2273, %v2269
        %v2874 = vpack.c.b16 %v2274, %v2270
        %v2875 = vpack.c.b16 %v2275, %v2271
        %v2876 = vpack.c.b16 %v2280, %v2276
        %v2877 = vpack.c.b16 %v2281, %v2277
        %v2878 = vpack.c.b16 %v2282, %v2278
        %v2879 = vpack.c.b16 %v2283, %v2279
        %v2880 = vpack.c.b16 %v2288, %v2284
        %v2881 = vpack.c.b16 %v2289, %v2285
        %v2882 = vpack.c.b16 %v2290, %v2286
        %v2883 = vpack.c.b16 %v2291, %v2287
        %v2884 = vpack.c.b16 %v2296, %v2292
        %v2885 = vpack.c.b16 %v2297, %v2293
        %v2886 = vpack.c.b16 %v2298, %v2294
        %v2887 = vpack.c.b16 %v2299, %v2295
        %v2888 = vpack.c.b16 %v2304, %v2300
        %v2889 = vpack.c.b16 %v2305, %v2301
        %v2890 = vpack.c.b16 %v2306, %v2302
        %v2891 = vpack.c.b16 %v2307, %v2303
        %v2892 = vpack.c.b16 %v2312, %v2308
        %v2893 = vpack.c.b16 %v2313, %v2309
        %v2894 = vpack.c.b16 %v2314, %v2310
        %v2895 = vpack.c.b16 %v2315, %v2311
        %v2896 = vpack.c.b16 %v2320, %v2316
        %v2897 = vpack.c.b16 %v2321, %v2317
        %v2898 = vpack.c.b16 %v2322, %v2318
        %v2899 = vpack.c.b16 %v2323, %v2319
        %v2900 = vpack.c.b16 %v2328, %v2324
        %v2901 = vpack.c.b16 %v2329, %v2325
        %v2902 = vpack.c.b16 %v2330, %v2326
        %v2903 = vpack.c.b16 %v2331, %v2327
        %v2904 = vpack.c.b16 %v2336, %v2332
        %v2905 = vpack.c.b16 %v2337, %v2333
        %v2906 = vpack.c.b16 %v2338, %v2334
        %v2907 = vpack.c.b16 %v2339, %v2335
        %v2908 = vpack.c.b16 %v2344, %v2340
        %v2909 = vpack.c.b16 %v2345, %v2341
        %v2910 = vpack.c.b16 %v2346, %v2342
        %v2911 = vpack.c.b16 %v2347, %v2343
        %v2912 = vpack.c.b16 %v2352, %v2348
        %v2913 = vpack.c.b16 %v2353, %v2349
        %v2914 = vpack.c.b16 %v2354, %v2350
        %v2915 = vpack.c.b16 %v2355, %v2351
        %v2916 = vpack.c.b16 %v2360, %v2356
        %v2917 = vpack.c.b16 %v2361, %v2357
        %v2918 = vpack.c.b16 %v2362, %v2358
        %v2919 = vpack.c.b16 %v2363, %v2359
        %v2920 = vpack.c.b16 %v2368, %v2364
        %v2921 = vpack.c.b16 %v2369, %v2365
        %v2922 = vpack.c.b16 %v2370, %v2366
        %v2923 = vpack.c.b16 %v2371, %v2367
        %v2924 = vpack.c.b16 %v2376, %v2372
        %v2925 = vpack.c.b16 %v2377, %v2373
        %v2926 = vpack.c.b16 %v2378, %v2374
        %v2927 = vpack.c.b16 %v2379, %v2375
        %v2928 = vpack.c.b16 %v2384, %v2380
        %v2929 = vpack.c.b16 %v2385, %v2381
        %v2930 = vpack.c.b16 %v2386, %v2382
        %v2931 = vpack.c.b16 %v2387, %v2383
        %v2932 = vpack.c.b16 %v2392, %v2388
        %v2933 = vpack.c.b16 %v2393, %v2389
        %v2934 = vpack.c.b16 %v2394, %v2390
        %v2935 = vpack.c.b16 %v2395, %v2391
        %v2936 = vpack.c.b16 %v2400, %v2396
        %v2937 = vpack.c.b16 %v2401, %v2397
        %v2938 = vpack.c.b16 %v2402, %v2398
        %v2939 = vpack.c.b16 %v2403, %v2399
        %v2940 = vpack.c.b16 %v2408, %v2404
        %v2941 = vpack.c.b16 %v2409, %v2405
        %v2942 = vpack.c.b16 %v2410, %v2406
        %v2943 = vpack.c.b16 %v2411, %v2407
        %v2944 = vpack.c.b16 %v2416, %v2412
        %v2945 = vpack.c.b16 %v2417, %v2413
        %v2946 = vpack.c.b16 %v2418, %v2414
        %v2947 = vpack.c.b16 %v2419, %v2415
        %v2948 = vpack.c.b16 %v2424, %v2420
        %v2949 = vpack.c.b16 %v2425, %v2421
        %v2950 = vpack.c.b16 %v2426, %v2422
        %v2951 = vpack.c.b16 %v2427, %v2423
        %v2952 = vpack.c.b16 %v2432, %v2428
        %v2953 = vpack.c.b16 %v2433, %v2429
        %v2954 = vpack.c.b16 %v2434, %v2430
        %v2955 = vpack.c.b16 %v2435, %v2431
        %v2956 = vpack.c.b16 %v2440, %v2436
        %v2957 = vpack.c.b16 %v2441, %v2437
        %v2958 = vpack.c.b16 %v2442, %v2438
        %v2959 = vpack.c.b16 %v2443, %v2439
        %v2960 = vpack.c.b16 %v2448, %v2444
        %v2961 = vpack.c.b16 %v2449, %v2445
        %v2962 = vpack.c.b16 %v2450, %v2446
        %v2963 = vpack.c.b16 %v2451, %v2447
        %3476 = vmatprep.subr.bf16.mxu0 %v2481
        %3477 = vmatpush1.bf16.msra.mxu0 %v2480
        %3478 = vmatprep.subr.bf16.mxu0 %v2477
        %3479 = vmatpush1.bf16.msra.mxu0 %v2476
        %3480 = vmatprep.subr.bf16.mxu0 %v2473
        %3481 = vmatpush1.bf16.msra.mxu0 %v2472
        %3482 = vmatprep.subr.bf16.mxu0 %v2469
        %3483 = vmatpush1.bf16.msra.mxu0 %v2468
        %3484 = vmatprep.subr.bf16.mxu0 %v2465
        %3485 = vmatpush1.bf16.msra.mxu0 %v2464
        %3486 = vmatprep.subr.bf16.mxu0 %v2461
        %3487 = vmatpush1.bf16.msra.mxu0 %v2460
        %3488 = vmatprep.subr.bf16.mxu0 %v2457
        %3489 = vmatpush1.bf16.msra.mxu0 %v2456
        %3490 = vmatprep.subr.bf16.mxu0 %v2453
        %3491 = vmatpush1.bf16.msra.mxu0 %v2452
        %3492 = vmatprep.subr.bf16.mxu0 %v2513
        %3493 = vmatpush2.bf16.msra.mxu0 %v2512
        %3494 = vmatprep.subr.bf16.mxu0 %v2509
        %3495 = vmatpush2.bf16.msra.mxu0 %v2508
        %3496 = vmatprep.subr.bf16.mxu0 %v2505
        %3497 = vmatpush2.bf16.msra.mxu0 %v2504
        %3498 = vmatprep.subr.bf16.mxu0 %v2501
        %3499 = vmatpush2.bf16.msra.mxu0 %v2500
        %3500 = vmatprep.subr.bf16.mxu0 %v2497
        %3501 = vmatpush2.bf16.msra.mxu0 %v2496
        %3502 = vmatprep.subr.bf16.mxu0 %v2493
        %3503 = vmatpush2.bf16.msra.mxu0 %v2492
        %3504 = vmatprep.subr.bf16.mxu0 %v2489
        %3505 = vmatpush2.bf16.msra.mxu0 %v2488
        %3506 = vmatprep.subr.bf16.mxu0 %v2485
        %3507 = vmatpush2.bf16.msra.mxu0 %v2484
        %3508 = vmatprep.mubr.bf16.mxu0 %v853
        %3509 = vmatmul.mubr.bf16.gmra.mxu0 %v852
        %v3510 = vpop.f32.mrf.mxu0
        %v3511 = vadd.f32 0.0, %v3510
        %v3512 = vpop.f32.mrf.mxu0
        %v3513 = vadd.f32 0.0, %v3512
        %v3514 = vpop.f32.mrf.mxu0
        %v3515 = vadd.f32 0.0, %v3514
        %v3516 = vpop.f32.mrf.mxu0
        %v3517 = vadd.f32 0.0, %v3516
        %3518 = vmatprep.mubr.bf16.mxu0 %v869
        %3519 = vmatmul.mubr.bf16.gmra.mxu0 %v868
        %v3520 = vpop.f32.mrf.mxu0
        %v3521 = vadd.f32 0.0, %v3520
        %v3522 = vpop.f32.mrf.mxu0
        %v3523 = vadd.f32 0.0, %v3522
        %v3524 = vpop.f32.mrf.mxu0
        %v3525 = vadd.f32 0.0, %v3524
        %v3526 = vpop.f32.mrf.mxu0
        %v3527 = vadd.f32 0.0, %v3526
        %3528 = vdwg.mxu0
        %3529 = vmatprep.subr.bf16.mxu0 %v2545
        %3530 = vmatpush1.bf16.msra.mxu0 %v2544
        %3531 = vmatprep.subr.bf16.mxu0 %v2541
        %3532 = vmatpush1.bf16.msra.mxu0 %v2540
        %3533 = vmatprep.subr.bf16.mxu0 %v2537
        %3534 = vmatpush1.bf16.msra.mxu0 %v2536
        %3535 = vmatprep.subr.bf16.mxu0 %v2533
        %3536 = vmatpush1.bf16.msra.mxu0 %v2532
        %3537 = vmatprep.subr.bf16.mxu0 %v2529
        %3538 = vmatpush1.bf16.msra.mxu0 %v2528
        %3539 = vmatprep.subr.bf16.mxu0 %v2525
        %3540 = vmatpush1.bf16.msra.mxu0 %v2524
        %3541 = vmatprep.subr.bf16.mxu0 %v2521
        %3542 = vmatpush1.bf16.msra.mxu0 %v2520
        %3543 = vmatprep.subr.bf16.mxu0 %v2517
        %3544 = vmatpush1.bf16.msra.mxu0 %v2516
        %3545 = vmatprep.subr.bf16.mxu0 %v2577
        %3546 = vmatpush2.bf16.msra.mxu0 %v2576
        %3547 = vmatprep.subr.bf16.mxu0 %v2573
        %3548 = vmatpush2.bf16.msra.mxu0 %v2572
        %3549 = vmatprep.subr.bf16.mxu0 %v2569
        %3550 = vmatpush2.bf16.msra.mxu0 %v2568
        %3551 = vmatprep.subr.bf16.mxu0 %v2565
        %3552 = vmatpush2.bf16.msra.mxu0 %v2564
        %3553 = vmatprep.subr.bf16.mxu0 %v2561
        %3554 = vmatpush2.bf16.msra.mxu0 %v2560
        %3555 = vmatprep.subr.bf16.mxu0 %v2557
        %3556 = vmatpush2.bf16.msra.mxu0 %v2556
        %3557 = vmatprep.subr.bf16.mxu0 %v2553
        %3558 = vmatpush2.bf16.msra.mxu0 %v2552
        %3559 = vmatprep.subr.bf16.mxu0 %v2549
        %3560 = vmatpush2.bf16.msra.mxu0 %v2548
        %3561 = vmatprep.mubr.bf16.mxu0 %v855
        %3562 = vmatmul.mubr.bf16.gmra.mxu0 %v854
        %v3563 = vpop.f32.mrf.mxu0
        %v3564 = vadd.f32 %v3511, %v3563
        %v3565 = vpop.f32.mrf.mxu0
        %v3566 = vadd.f32 %v3513, %v3565
        %v3567 = vpop.f32.mrf.mxu0
        %v3568 = vadd.f32 %v3515, %v3567
        %v3569 = vpop.f32.mrf.mxu0
        %v3570 = vadd.f32 %v3517, %v3569
        %3571 = vmatprep.mubr.bf16.mxu0 %v871
        %3572 = vmatmul.mubr.bf16.gmra.mxu0 %v870
        %v3573 = vpop.f32.mrf.mxu0
        %v3574 = vadd.f32 %v3521, %v3573
        %v3575 = vpop.f32.mrf.mxu0
        %v3576 = vadd.f32 %v3523, %v3575
        %v3577 = vpop.f32.mrf.mxu0
        %v3578 = vadd.f32 %v3525, %v3577
        %v3579 = vpop.f32.mrf.mxu0
        %v3580 = vadd.f32 %v3527, %v3579
        %3581 = vdwg.mxu0
        %3582 = vmatprep.subr.bf16.mxu0 %v2609
        %3583 = vmatpush1.bf16.msra.mxu0 %v2608
        %3584 = vmatprep.subr.bf16.mxu0 %v2605
        %3585 = vmatpush1.bf16.msra.mxu0 %v2604
        %3586 = vmatprep.subr.bf16.mxu0 %v2601
        %3587 = vmatpush1.bf16.msra.mxu0 %v2600
        %3588 = vmatprep.subr.bf16.mxu0 %v2597
        %3589 = vmatpush1.bf16.msra.mxu0 %v2596
        %3590 = vmatprep.subr.bf16.mxu0 %v2593
        %3591 = vmatpush1.bf16.msra.mxu0 %v2592
        %3592 = vmatprep.subr.bf16.mxu0 %v2589
        %3593 = vmatpush1.bf16.msra.mxu0 %v2588
        %3594 = vmatprep.subr.bf16.mxu0 %v2585
        %3595 = vmatpush1.bf16.msra.mxu0 %v2584
        %3596 = vmatprep.subr.bf16.mxu0 %v2581
        %3597 = vmatpush1.bf16.msra.mxu0 %v2580
        %3598 = vmatprep.subr.bf16.mxu0 %v2641
        %3599 = vmatpush2.bf16.msra.mxu0 %v2640
        %3600 = vmatprep.subr.bf16.mxu0 %v2637
        %3601 = vmatpush2.bf16.msra.mxu0 %v2636
        %3602 = vmatprep.subr.bf16.mxu0 %v2633
        %3603 = vmatpush2.bf16.msra.mxu0 %v2632
        %3604 = vmatprep.subr.bf16.mxu0 %v2629
        %3605 = vmatpush2.bf16.msra.mxu0 %v2628
        %3606 = vmatprep.subr.bf16.mxu0 %v2625
        %3607 = vmatpush2.bf16.msra.mxu0 %v2624
        %3608 = vmatprep.subr.bf16.mxu0 %v2621
        %3609 = vmatpush2.bf16.msra.mxu0 %v2620
        %3610 = vmatprep.subr.bf16.mxu0 %v2617
        %3611 = vmatpush2.bf16.msra.mxu0 %v2616
        %3612 = vmatprep.subr.bf16.mxu0 %v2613
        %3613 = vmatpush2.bf16.msra.mxu0 %v2612
        %3614 = vmatprep.mubr.bf16.mxu0 %v857
        %3615 = vmatmul.mubr.bf16.gmra.mxu0 %v856
        %v3616 = vpop.f32.mrf.mxu0
        %v3617 = vadd.f32 %v3564, %v3616
        %v3618 = vpop.f32.mrf.mxu0
        %v3619 = vadd.f32 %v3566, %v3618
        %v3620 = vpop.f32.mrf.mxu0
        %v3621 = vadd.f32 %v3568, %v3620
        %v3622 = vpop.f32.mrf.mxu0
        %v3623 = vadd.f32 %v3570, %v3622
        %3624 = vmatprep.mubr.bf16.mxu0 %v873
        %3625 = vmatmul.mubr.bf16.gmra.mxu0 %v872
        %v3626 = vpop.f32.mrf.mxu0
        %v3627 = vadd.f32 %v3574, %v3626
        %v3628 = vpop.f32.mrf.mxu0
        %v3629 = vadd.f32 %v3576, %v3628
        %v3630 = vpop.f32.mrf.mxu0
        %v3631 = vadd.f32 %v3578, %v3630
        %v3632 = vpop.f32.mrf.mxu0
        %v3633 = vadd.f32 %v3580, %v3632
        %3634 = vdwg.mxu0
        %3635 = vmatprep.subr.bf16.mxu0 %v2673
        %3636 = vmatpush1.bf16.msra.mxu0 %v2672
        %3637 = vmatprep.subr.bf16.mxu0 %v2669
        %3638 = vmatpush1.bf16.msra.mxu0 %v2668
        %3639 = vmatprep.subr.bf16.mxu0 %v2665
        %3640 = vmatpush1.bf16.msra.mxu0 %v2664
        %3641 = vmatprep.subr.bf16.mxu0 %v2661
        %3642 = vmatpush1.bf16.msra.mxu0 %v2660
        %3643 = vmatprep.subr.bf16.mxu0 %v2657
        %3644 = vmatpush1.bf16.msra.mxu0 %v2656
        %3645 = vmatprep.subr.bf16.mxu0 %v2653
        %3646 = vmatpush1.bf16.msra.mxu0 %v2652
        %3647 = vmatprep.subr.bf16.mxu0 %v2649
        %3648 = vmatpush1.bf16.msra.mxu0 %v2648
        %3649 = vmatprep.subr.bf16.mxu0 %v2645
        %3650 = vmatpush1.bf16.msra.mxu0 %v2644
        %3651 = vmatprep.subr.bf16.mxu0 %v2705
        %3652 = vmatpush2.bf16.msra.mxu0 %v2704
        %3653 = vmatprep.subr.bf16.mxu0 %v2701
        %3654 = vmatpush2.bf16.msra.mxu0 %v2700
        %3655 = vmatprep.subr.bf16.mxu0 %v2697
        %3656 = vmatpush2.bf16.msra.mxu0 %v2696
        %3657 = vmatprep.subr.bf16.mxu0 %v2693
        %3658 = vmatpush2.bf16.msra.mxu0 %v2692
        %3659 = vmatprep.subr.bf16.mxu0 %v2689
        %3660 = vmatpush2.bf16.msra.mxu0 %v2688
        %3661 = vmatprep.subr.bf16.mxu0 %v2685
        %3662 = vmatpush2.bf16.msra.mxu0 %v2684
        %3663 = vmatprep.subr.bf16.mxu0 %v2681
        %3664 = vmatpush2.bf16.msra.mxu0 %v2680
        %3665 = vmatprep.subr.bf16.mxu0 %v2677
        %3666 = vmatpush2.bf16.msra.mxu0 %v2676
        %3667 = vmatprep.mubr.bf16.mxu0 %v859
        %3668 = vmatmul.mubr.bf16.gmra.mxu0 %v858
        %v3669 = vpop.f32.mrf.mxu0
        %v3670 = vadd.f32 %v3617, %v3669
        %v3671 = vpop.f32.mrf.mxu0
        %v3672 = vadd.f32 %v3619, %v3671
        %v3673 = vpop.f32.mrf.mxu0
        %v3674 = vadd.f32 %v3621, %v3673
        %v3675 = vpop.f32.mrf.mxu0
        %v3676 = vadd.f32 %v3623, %v3675
        %3677 = vmatprep.mubr.bf16.mxu0 %v875
        %3678 = vmatmul.mubr.bf16.gmra.mxu0 %v874
        %v3679 = vpop.f32.mrf.mxu0
        %v3680 = vadd.f32 %v3627, %v3679
        %v3681 = vpop.f32.mrf.mxu0
        %v3682 = vadd.f32 %v3629, %v3681
        %v3683 = vpop.f32.mrf.mxu0
        %v3684 = vadd.f32 %v3631, %v3683
        %v3685 = vpop.f32.mrf.mxu0
        %v3686 = vadd.f32 %v3633, %v3685
        %3687 = vdwg.mxu0
        %3688 = vmatprep.subr.bf16.mxu0 %v2737
        %3689 = vmatpush1.bf16.msra.mxu0 %v2736
        %3690 = vmatprep.subr.bf16.mxu0 %v2733
        %3691 = vmatpush1.bf16.msra.mxu0 %v2732
        %3692 = vmatprep.subr.bf16.mxu0 %v2729
        %3693 = vmatpush1.bf16.msra.mxu0 %v2728
        %3694 = vmatprep.subr.bf16.mxu0 %v2725
        %3695 = vmatpush1.bf16.msra.mxu0 %v2724
        %3696 = vmatprep.subr.bf16.mxu0 %v2721
        %3697 = vmatpush1.bf16.msra.mxu0 %v2720
        %3698 = vmatprep.subr.bf16.mxu0 %v2717
        %3699 = vmatpush1.bf16.msra.mxu0 %v2716
        %3700 = vmatprep.subr.bf16.mxu0 %v2713
        %3701 = vmatpush1.bf16.msra.mxu0 %v2712
        %3702 = vmatprep.subr.bf16.mxu0 %v2709
        %3703 = vmatpush1.bf16.msra.mxu0 %v2708
        %3704 = vmatprep.subr.bf16.mxu0 %v2769
        %3705 = vmatpush2.bf16.msra.mxu0 %v2768
        %3706 = vmatprep.subr.bf16.mxu0 %v2765
        %3707 = vmatpush2.bf16.msra.mxu0 %v2764
        %3708 = vmatprep.subr.bf16.mxu0 %v2761
        %3709 = vmatpush2.bf16.msra.mxu0 %v2760
        %3710 = vmatprep.subr.bf16.mxu0 %v2757
        %3711 = vmatpush2.bf16.msra.mxu0 %v2756
        %3712 = vmatprep.subr.bf16.mxu0 %v2753
        %3713 = vmatpush2.bf16.msra.mxu0 %v2752
        %3714 = vmatprep.subr.bf16.mxu0 %v2749
        %3715 = vmatpush2.bf16.msra.mxu0 %v2748
        %3716 = vmatprep.subr.bf16.mxu0 %v2745
        %3717 = vmatpush2.bf16.msra.mxu0 %v2744
        %3718 = vmatprep.subr.bf16.mxu0 %v2741
        %3719 = vmatpush2.bf16.msra.mxu0 %v2740
        %3720 = vmatprep.mubr.bf16.mxu0 %v861
        %3721 = vmatmul.mubr.bf16.gmra.mxu0 %v860
        %v3722 = vpop.f32.mrf.mxu0
        %v3723 = vadd.f32 %v3670, %v3722
        %v3724 = vpop.f32.mrf.mxu0
        %v3725 = vadd.f32 %v3672, %v3724
        %v3726 = vpop.f32.mrf.mxu0
        %v3727 = vadd.f32 %v3674, %v3726
        %v3728 = vpop.f32.mrf.mxu0
        %v3729 = vadd.f32 %v3676, %v3728
        %3730 = vmatprep.mubr.bf16.mxu0 %v877
        %3731 = vmatmul.mubr.bf16.gmra.mxu0 %v876
        %v3732 = vpop.f32.mrf.mxu0
        %v3733 = vadd.f32 %v3680, %v3732
        %v3734 = vpop.f32.mrf.mxu0
        %v3735 = vadd.f32 %v3682, %v3734
        %v3736 = vpop.f32.mrf.mxu0
        %v3737 = vadd.f32 %v3684, %v3736
        %v3738 = vpop.f32.mrf.mxu0
        %v3739 = vadd.f32 %v3686, %v3738
        %3740 = vdwg.mxu0
        %3741 = vmatprep.subr.bf16.mxu0 %v2801
        %3742 = vmatpush1.bf16.msra.mxu0 %v2800
        %3743 = vmatprep.subr.bf16.mxu0 %v2797
        %3744 = vmatpush1.bf16.msra.mxu0 %v2796
        %3745 = vmatprep.subr.bf16.mxu0 %v2793
        %3746 = vmatpush1.bf16.msra.mxu0 %v2792
        %3747 = vmatprep.subr.bf16.mxu0 %v2789
        %3748 = vmatpush1.bf16.msra.mxu0 %v2788
        %3749 = vmatprep.subr.bf16.mxu0 %v2785
        %3750 = vmatpush1.bf16.msra.mxu0 %v2784
        %3751 = vmatprep.subr.bf16.mxu0 %v2781
        %3752 = vmatpush1.bf16.msra.mxu0 %v2780
        %3753 = vmatprep.subr.bf16.mxu0 %v2777
        %3754 = vmatpush1.bf16.msra.mxu0 %v2776
        %3755 = vmatprep.subr.bf16.mxu0 %v2773
        %3756 = vmatpush1.bf16.msra.mxu0 %v2772
        %3757 = vmatprep.subr.bf16.mxu0 %v2833
        %3758 = vmatpush2.bf16.msra.mxu0 %v2832
        %3759 = vmatprep.subr.bf16.mxu0 %v2829
        %3760 = vmatpush2.bf16.msra.mxu0 %v2828
        %3761 = vmatprep.subr.bf16.mxu0 %v2825
        %3762 = vmatpush2.bf16.msra.mxu0 %v2824
        %3763 = vmatprep.subr.bf16.mxu0 %v2821
        %3764 = vmatpush2.bf16.msra.mxu0 %v2820
        %3765 = vmatprep.subr.bf16.mxu0 %v2817
        %3766 = vmatpush2.bf16.msra.mxu0 %v2816
        %3767 = vmatprep.subr.bf16.mxu0 %v2813
        %3768 = vmatpush2.bf16.msra.mxu0 %v2812
        %3769 = vmatprep.subr.bf16.mxu0 %v2809
        %3770 = vmatpush2.bf16.msra.mxu0 %v2808
        %3771 = vmatprep.subr.bf16.mxu0 %v2805
        %3772 = vmatpush2.bf16.msra.mxu0 %v2804
        %3773 = vmatprep.mubr.bf16.mxu0 %v863
        %3774 = vmatmul.mubr.bf16.gmra.mxu0 %v862
        %v3775 = vpop.f32.mrf.mxu0
        %v3776 = vadd.f32 %v3723, %v3775
        %v3777 = vpop.f32.mrf.mxu0
        %v3778 = vadd.f32 %v3725, %v3777
        %v3779 = vpop.f32.mrf.mxu0
        %v3780 = vadd.f32 %v3727, %v3779
        %v3781 = vpop.f32.mrf.mxu0
        %v3782 = vadd.f32 %v3729, %v3781
        %3783 = vmatprep.mubr.bf16.mxu0 %v879
        %3784 = vmatmul.mubr.bf16.gmra.mxu0 %v878
        %v3785 = vpop.f32.mrf.mxu0
        %v3786 = vadd.f32 %v3733, %v3785
        %v3787 = vpop.f32.mrf.mxu0
        %v3788 = vadd.f32 %v3735, %v3787
        %v3789 = vpop.f32.mrf.mxu0
        %v3790 = vadd.f32 %v3737, %v3789
        %v3791 = vpop.f32.mrf.mxu0
        %v3792 = vadd.f32 %v3739, %v3791
        %3793 = vdwg.mxu0
        %3794 = vmatprep.subr.bf16.mxu0 %v2865
        %3795 = vmatpush1.bf16.msra.mxu0 %v2864
        %3796 = vmatprep.subr.bf16.mxu0 %v2861
        %3797 = vmatpush1.bf16.msra.mxu0 %v2860
        %3798 = vmatprep.subr.bf16.mxu0 %v2857
        %3799 = vmatpush1.bf16.msra.mxu0 %v2856
        %3800 = vmatprep.subr.bf16.mxu0 %v2853
        %3801 = vmatpush1.bf16.msra.mxu0 %v2852
        %3802 = vmatprep.subr.bf16.mxu0 %v2849
        %3803 = vmatpush1.bf16.msra.mxu0 %v2848
        %3804 = vmatprep.subr.bf16.mxu0 %v2845
        %3805 = vmatpush1.bf16.msra.mxu0 %v2844
        %3806 = vmatprep.subr.bf16.mxu0 %v2841
        %3807 = vmatpush1.bf16.msra.mxu0 %v2840
        %3808 = vmatprep.subr.bf16.mxu0 %v2837
        %3809 = vmatpush1.bf16.msra.mxu0 %v2836
        %3810 = vmatprep.subr.bf16.mxu0 %v2897
        %3811 = vmatpush2.bf16.msra.mxu0 %v2896
        %3812 = vmatprep.subr.bf16.mxu0 %v2893
        %3813 = vmatpush2.bf16.msra.mxu0 %v2892
        %3814 = vmatprep.subr.bf16.mxu0 %v2889
        %3815 = vmatpush2.bf16.msra.mxu0 %v2888
        %3816 = vmatprep.subr.bf16.mxu0 %v2885
        %3817 = vmatpush2.bf16.msra.mxu0 %v2884
        %3818 = vmatprep.subr.bf16.mxu0 %v2881
        %3819 = vmatpush2.bf16.msra.mxu0 %v2880
        %3820 = vmatprep.subr.bf16.mxu0 %v2877
        %3821 = vmatpush2.bf16.msra.mxu0 %v2876
        %3822 = vmatprep.subr.bf16.mxu0 %v2873
        %3823 = vmatpush2.bf16.msra.mxu0 %v2872
        %3824 = vmatprep.subr.bf16.mxu0 %v2869
        %3825 = vmatpush2.bf16.msra.mxu0 %v2868
        %3826 = vmatprep.mubr.bf16.mxu0 %v865
        %3827 = vmatmul.mubr.bf16.gmra.mxu0 %v864
        %v3828 = vpop.f32.mrf.mxu0
        %v3829 = vadd.f32 %v3776, %v3828
        %v3830 = vpop.f32.mrf.mxu0
        %v3831 = vadd.f32 %v3778, %v3830
        %v3832 = vpop.f32.mrf.mxu0
        %v3833 = vadd.f32 %v3780, %v3832
        %v3834 = vpop.f32.mrf.mxu0
        %v3835 = vadd.f32 %v3782, %v3834
        %3836 = vmatprep.mubr.bf16.mxu0 %v881
        %3837 = vmatmul.mubr.bf16.gmra.mxu0 %v880
        %v3838 = vpop.f32.mrf.mxu0
        %v3839 = vadd.f32 %v3786, %v3838
        %v3840 = vpop.f32.mrf.mxu0
        %v3841 = vadd.f32 %v3788, %v3840
        %v3842 = vpop.f32.mrf.mxu0
        %v3843 = vadd.f32 %v3790, %v3842
        %v3844 = vpop.f32.mrf.mxu0
        %v3845 = vadd.f32 %v3792, %v3844
        %3846 = vdwg.mxu0
        %3847 = vmatprep.subr.bf16.mxu0 %v2929
        %3848 = vmatpush1.bf16.msra.mxu0 %v2928
        %3849 = vmatprep.subr.bf16.mxu0 %v2925
        %3850 = vmatpush1.bf16.msra.mxu0 %v2924
        %3851 = vmatprep.subr.bf16.mxu0 %v2921
        %3852 = vmatpush1.bf16.msra.mxu0 %v2920
        %3853 = vmatprep.subr.bf16.mxu0 %v2917
        %3854 = vmatpush1.bf16.msra.mxu0 %v2916
        %3855 = vmatprep.subr.bf16.mxu0 %v2913
        %3856 = vmatpush1.bf16.msra.mxu0 %v2912
        %3857 = vmatprep.subr.bf16.mxu0 %v2909
        %3858 = vmatpush1.bf16.msra.mxu0 %v2908
        %3859 = vmatprep.subr.bf16.mxu0 %v2905
        %3860 = vmatpush1.bf16.msra.mxu0 %v2904
        %3861 = vmatprep.subr.bf16.mxu0 %v2901
        %3862 = vmatpush1.bf16.msra.mxu0 %v2900
        %3863 = vmatprep.subr.bf16.mxu0 %v2961
        %3864 = vmatpush2.bf16.msra.mxu0 %v2960
        %3865 = vmatprep.subr.bf16.mxu0 %v2957
        %3866 = vmatpush2.bf16.msra.mxu0 %v2956
        %3867 = vmatprep.subr.bf16.mxu0 %v2953
        %3868 = vmatpush2.bf16.msra.mxu0 %v2952
        %3869 = vmatprep.subr.bf16.mxu0 %v2949
        %3870 = vmatpush2.bf16.msra.mxu0 %v2948
        %3871 = vmatprep.subr.bf16.mxu0 %v2945
        %3872 = vmatpush2.bf16.msra.mxu0 %v2944
        %3873 = vmatprep.subr.bf16.mxu0 %v2941
        %3874 = vmatpush2.bf16.msra.mxu0 %v2940
        %3875 = vmatprep.subr.bf16.mxu0 %v2937
        %3876 = vmatpush2.bf16.msra.mxu0 %v2936
        %3877 = vmatprep.subr.bf16.mxu0 %v2933
        %3878 = vmatpush2.bf16.msra.mxu0 %v2932
        %3879 = vmatprep.mubr.bf16.mxu0 %v867
        %3880 = vmatmul.mubr.bf16.gmra.mxu0 %v866
        %v3881 = vpop.f32.mrf.mxu0
        %v3882 = vadd.f32 %v3829, %v3881
        %v3883 = vpop.f32.mrf.mxu0
        %v3884 = vadd.f32 %v3831, %v3883
        %v3885 = vpop.f32.mrf.mxu0
        %v3886 = vadd.f32 %v3833, %v3885
        %v3887 = vpop.f32.mrf.mxu0
        %v3888 = vadd.f32 %v3835, %v3887
        %3889 = vmatprep.mubr.bf16.mxu0 %v883
        %3890 = vmatmul.mubr.bf16.gmra.mxu0 %v882
        %v3891 = vpop.f32.mrf.mxu0
        %v3892 = vadd.f32 %v3839, %v3891
        %v3893 = vpop.f32.mrf.mxu0
        %v3894 = vadd.f32 %v3841, %v3893
        %v3895 = vpop.f32.mrf.mxu0
        %v3896 = vadd.f32 %v3843, %v3895
        %v3897 = vpop.f32.mrf.mxu0
        %v3898 = vadd.f32 %v3845, %v3897
        %3899 = vdwg.mxu0
        %3900 = vmatprep.subr.bf16.mxu0 %v2483
        %3901 = vmatpush1.bf16.msra.mxu0 %v2482
        %3902 = vmatprep.subr.bf16.mxu0 %v2479
        %3903 = vmatpush1.bf16.msra.mxu0 %v2478
        %3904 = vmatprep.subr.bf16.mxu0 %v2475
        %3905 = vmatpush1.bf16.msra.mxu0 %v2474
        %3906 = vmatprep.subr.bf16.mxu0 %v2471
        %3907 = vmatpush1.bf16.msra.mxu0 %v2470
        %3908 = vmatprep.subr.bf16.mxu0 %v2467
        %3909 = vmatpush1.bf16.msra.mxu0 %v2466
        %3910 = vmatprep.subr.bf16.mxu0 %v2463
        %3911 = vmatpush1.bf16.msra.mxu0 %v2462
        %3912 = vmatprep.subr.bf16.mxu0 %v2459
        %3913 = vmatpush1.bf16.msra.mxu0 %v2458
        %3914 = vmatprep.subr.bf16.mxu0 %v2455
        %3915 = vmatpush1.bf16.msra.mxu0 %v2454
        %3916 = vmatprep.subr.bf16.mxu0 %v2515
        %3917 = vmatpush2.bf16.msra.mxu0 %v2514
        %3918 = vmatprep.subr.bf16.mxu0 %v2511
        %3919 = vmatpush2.bf16.msra.mxu0 %v2510
        %3920 = vmatprep.subr.bf16.mxu0 %v2507
        %3921 = vmatpush2.bf16.msra.mxu0 %v2506
        %3922 = vmatprep.subr.bf16.mxu0 %v2503
        %3923 = vmatpush2.bf16.msra.mxu0 %v2502
        %3924 = vmatprep.subr.bf16.mxu0 %v2499
        %3925 = vmatpush2.bf16.msra.mxu0 %v2498
        %3926 = vmatprep.subr.bf16.mxu0 %v2495
        %3927 = vmatpush2.bf16.msra.mxu0 %v2494
        %3928 = vmatprep.subr.bf16.mxu0 %v2491
        %3929 = vmatpush2.bf16.msra.mxu0 %v2490
        %3930 = vmatprep.subr.bf16.mxu0 %v2487
        %3931 = vmatpush2.bf16.msra.mxu0 %v2486
        %3932 = vmatprep.mubr.bf16.mxu0 %v853
        %3933 = vmatmul.mubr.bf16.gmra.mxu0 %v852
        %v3934 = vpop.f32.mrf.mxu0
        %v3935 = vadd.f32 0.0, %v3934
        %v3936 = vpop.f32.mrf.mxu0
        %v3937 = vadd.f32 0.0, %v3936
        %v3938 = vpop.f32.mrf.mxu0
        %v3939 = vadd.f32 0.0, %v3938
        %v3940 = vpop.f32.mrf.mxu0
        %v3941 = vadd.f32 0.0, %v3940
        %3942 = vmatprep.mubr.bf16.mxu0 %v869
        %3943 = vmatmul.mubr.bf16.gmra.mxu0 %v868
        %v3944 = vpop.f32.mrf.mxu0
        %v3945 = vadd.f32 0.0, %v3944
        %v3946 = vpop.f32.mrf.mxu0
        %v3947 = vadd.f32 0.0, %v3946
        %v3948 = vpop.f32.mrf.mxu0
        %v3949 = vadd.f32 0.0, %v3948
        %v3950 = vpop.f32.mrf.mxu0
        %v3951 = vadd.f32 0.0, %v3950
        %3952 = vdwg.mxu0
        %3953 = vmatprep.subr.bf16.mxu0 %v2547
        %3954 = vmatpush1.bf16.msra.mxu0 %v2546
        %3955 = vmatprep.subr.bf16.mxu0 %v2543
        %3956 = vmatpush1.bf16.msra.mxu0 %v2542
        %3957 = vmatprep.subr.bf16.mxu0 %v2539
        %3958 = vmatpush1.bf16.msra.mxu0 %v2538
        %3959 = vmatprep.subr.bf16.mxu0 %v2535
        %3960 = vmatpush1.bf16.msra.mxu0 %v2534
        %3961 = vmatprep.subr.bf16.mxu0 %v2531
        %3962 = vmatpush1.bf16.msra.mxu0 %v2530
        %3963 = vmatprep.subr.bf16.mxu0 %v2527
        %3964 = vmatpush1.bf16.msra.mxu0 %v2526
        %3965 = vmatprep.subr.bf16.mxu0 %v2523
        %3966 = vmatpush1.bf16.msra.mxu0 %v2522
        %3967 = vmatprep.subr.bf16.mxu0 %v2519
        %3968 = vmatpush1.bf16.msra.mxu0 %v2518
        %3969 = vmatprep.subr.bf16.mxu0 %v2579
        %3970 = vmatpush2.bf16.msra.mxu0 %v2578
        %3971 = vmatprep.subr.bf16.mxu0 %v2575
        %3972 = vmatpush2.bf16.msra.mxu0 %v2574
        %3973 = vmatprep.subr.bf16.mxu0 %v2571
        %3974 = vmatpush2.bf16.msra.mxu0 %v2570
        %3975 = vmatprep.subr.bf16.mxu0 %v2567
        %3976 = vmatpush2.bf16.msra.mxu0 %v2566
        %3977 = vmatprep.subr.bf16.mxu0 %v2563
        %3978 = vmatpush2.bf16.msra.mxu0 %v2562
        %3979 = vmatprep.subr.bf16.mxu0 %v2559
        %3980 = vmatpush2.bf16.msra.mxu0 %v2558
        %3981 = vmatprep.subr.bf16.mxu0 %v2555
        %3982 = vmatpush2.bf16.msra.mxu0 %v2554
        %3983 = vmatprep.subr.bf16.mxu0 %v2551
        %3984 = vmatpush2.bf16.msra.mxu0 %v2550
        %3985 = vmatprep.mubr.bf16.mxu0 %v855
        %3986 = vmatmul.mubr.bf16.gmra.mxu0 %v854
        %v3987 = vpop.f32.mrf.mxu0
        %v3988 = vadd.f32 %v3935, %v3987
        %v3989 = vpop.f32.mrf.mxu0
        %v3990 = vadd.f32 %v3937, %v3989
        %v3991 = vpop.f32.mrf.mxu0
        %v3992 = vadd.f32 %v3939, %v3991
        %v3993 = vpop.f32.mrf.mxu0
        %v3994 = vadd.f32 %v3941, %v3993
        %3995 = vmatprep.mubr.bf16.mxu0 %v871
        %3996 = vmatmul.mubr.bf16.gmra.mxu0 %v870
        %v3997 = vpop.f32.mrf.mxu0
        %v3998 = vadd.f32 %v3945, %v3997
        %v3999 = vpop.f32.mrf.mxu0
        %v4000 = vadd.f32 %v3947, %v3999
        %v4001 = vpop.f32.mrf.mxu0
        %v4002 = vadd.f32 %v3949, %v4001
        %v4003 = vpop.f32.mrf.mxu0
        %v4004 = vadd.f32 %v3951, %v4003
        %4005 = vdwg.mxu0
        %4006 = vmatprep.subr.bf16.mxu0 %v2611
        %4007 = vmatpush1.bf16.msra.mxu0 %v2610
        %4008 = vmatprep.subr.bf16.mxu0 %v2607
        %4009 = vmatpush1.bf16.msra.mxu0 %v2606
        %4010 = vmatprep.subr.bf16.mxu0 %v2603
        %4011 = vmatpush1.bf16.msra.mxu0 %v2602
        %4012 = vmatprep.subr.bf16.mxu0 %v2599
        %4013 = vmatpush1.bf16.msra.mxu0 %v2598
        %4014 = vmatprep.subr.bf16.mxu0 %v2595
        %4015 = vmatpush1.bf16.msra.mxu0 %v2594
        %4016 = vmatprep.subr.bf16.mxu0 %v2591
        %4017 = vmatpush1.bf16.msra.mxu0 %v2590
        %4018 = vmatprep.subr.bf16.mxu0 %v2587
        %4019 = vmatpush1.bf16.msra.mxu0 %v2586
        %4020 = vmatprep.subr.bf16.mxu0 %v2583
        %4021 = vmatpush1.bf16.msra.mxu0 %v2582
        %4022 = vmatprep.subr.bf16.mxu0 %v2643
        %4023 = vmatpush2.bf16.msra.mxu0 %v2642
        %4024 = vmatprep.subr.bf16.mxu0 %v2639
        %4025 = vmatpush2.bf16.msra.mxu0 %v2638
        %4026 = vmatprep.subr.bf16.mxu0 %v2635
        %4027 = vmatpush2.bf16.msra.mxu0 %v2634
        %4028 = vmatprep.subr.bf16.mxu0 %v2631
        %4029 = vmatpush2.bf16.msra.mxu0 %v2630
        %4030 = vmatprep.subr.bf16.mxu0 %v2627
        %4031 = vmatpush2.bf16.msra.mxu0 %v2626
        %4032 = vmatprep.subr.bf16.mxu0 %v2623
        %4033 = vmatpush2.bf16.msra.mxu0 %v2622
        %4034 = vmatprep.subr.bf16.mxu0 %v2619
        %4035 = vmatpush2.bf16.msra.mxu0 %v2618
        %4036 = vmatprep.subr.bf16.mxu0 %v2615
        %4037 = vmatpush2.bf16.msra.mxu0 %v2614
        %4038 = vmatprep.mubr.bf16.mxu0 %v857
        %4039 = vmatmul.mubr.bf16.gmra.mxu0 %v856
        %v4040 = vpop.f32.mrf.mxu0
        %v4041 = vadd.f32 %v3988, %v4040
        %v4042 = vpop.f32.mrf.mxu0
        %v4043 = vadd.f32 %v3990, %v4042
        %v4044 = vpop.f32.mrf.mxu0
        %v4045 = vadd.f32 %v3992, %v4044
        %v4046 = vpop.f32.mrf.mxu0
        %v4047 = vadd.f32 %v3994, %v4046
        %4048 = vmatprep.mubr.bf16.mxu0 %v873
        %4049 = vmatmul.mubr.bf16.gmra.mxu0 %v872
        %v4050 = vpop.f32.mrf.mxu0
        %v4051 = vadd.f32 %v3998, %v4050
        %v4052 = vpop.f32.mrf.mxu0
        %v4053 = vadd.f32 %v4000, %v4052
        %v4054 = vpop.f32.mrf.mxu0
        %v4055 = vadd.f32 %v4002, %v4054
        %v4056 = vpop.f32.mrf.mxu0
        %v4057 = vadd.f32 %v4004, %v4056
        %4058 = vdwg.mxu0
        %4059 = vmatprep.subr.bf16.mxu0 %v2675
        %4060 = vmatpush1.bf16.msra.mxu0 %v2674
        %4061 = vmatprep.subr.bf16.mxu0 %v2671
        %4062 = vmatpush1.bf16.msra.mxu0 %v2670
        %4063 = vmatprep.subr.bf16.mxu0 %v2667
        %4064 = vmatpush1.bf16.msra.mxu0 %v2666
        %4065 = vmatprep.subr.bf16.mxu0 %v2663
        %4066 = vmatpush1.bf16.msra.mxu0 %v2662
        %4067 = vmatprep.subr.bf16.mxu0 %v2659
        %4068 = vmatpush1.bf16.msra.mxu0 %v2658
        %4069 = vmatprep.subr.bf16.mxu0 %v2655
        %4070 = vmatpush1.bf16.msra.mxu0 %v2654
        %4071 = vmatprep.subr.bf16.mxu0 %v2651
        %4072 = vmatpush1.bf16.msra.mxu0 %v2650
        %4073 = vmatprep.subr.bf16.mxu0 %v2647
        %4074 = vmatpush1.bf16.msra.mxu0 %v2646
        %4075 = vmatprep.subr.bf16.mxu0 %v2707
        %4076 = vmatpush2.bf16.msra.mxu0 %v2706
        %4077 = vmatprep.subr.bf16.mxu0 %v2703
        %4078 = vmatpush2.bf16.msra.mxu0 %v2702
        %4079 = vmatprep.subr.bf16.mxu0 %v2699
        %4080 = vmatpush2.bf16.msra.mxu0 %v2698
        %4081 = vmatprep.subr.bf16.mxu0 %v2695
        %4082 = vmatpush2.bf16.msra.mxu0 %v2694
        %4083 = vmatprep.subr.bf16.mxu0 %v2691
        %4084 = vmatpush2.bf16.msra.mxu0 %v2690
        %4085 = vmatprep.subr.bf16.mxu0 %v2687
        %4086 = vmatpush2.bf16.msra.mxu0 %v2686
        %4087 = vmatprep.subr.bf16.mxu0 %v2683
        %4088 = vmatpush2.bf16.msra.mxu0 %v2682
        %4089 = vmatprep.subr.bf16.mxu0 %v2679
        %4090 = vmatpush2.bf16.msra.mxu0 %v2678
        %4091 = vmatprep.mubr.bf16.mxu0 %v859
        %4092 = vmatmul.mubr.bf16.gmra.mxu0 %v858
        %v4093 = vpop.f32.mrf.mxu0
        %v4094 = vadd.f32 %v4041, %v4093
        %v4095 = vpop.f32.mrf.mxu0
        %v4096 = vadd.f32 %v4043, %v4095
        %v4097 = vpop.f32.mrf.mxu0
        %v4098 = vadd.f32 %v4045, %v4097
        %v4099 = vpop.f32.mrf.mxu0
        %v4100 = vadd.f32 %v4047, %v4099
        %4101 = vmatprep.mubr.bf16.mxu0 %v875
        %4102 = vmatmul.mubr.bf16.gmra.mxu0 %v874
        %v4103 = vpop.f32.mrf.mxu0
        %v4104 = vadd.f32 %v4051, %v4103
        %v4105 = vpop.f32.mrf.mxu0
        %v4106 = vadd.f32 %v4053, %v4105
        %v4107 = vpop.f32.mrf.mxu0
        %v4108 = vadd.f32 %v4055, %v4107
        %v4109 = vpop.f32.mrf.mxu0
        %v4110 = vadd.f32 %v4057, %v4109
        %4111 = vdwg.mxu0
        %4112 = vmatprep.subr.bf16.mxu0 %v2739
        %4113 = vmatpush1.bf16.msra.mxu0 %v2738
        %4114 = vmatprep.subr.bf16.mxu0 %v2735
        %4115 = vmatpush1.bf16.msra.mxu0 %v2734
        %4116 = vmatprep.subr.bf16.mxu0 %v2731
        %4117 = vmatpush1.bf16.msra.mxu0 %v2730
        %4118 = vmatprep.subr.bf16.mxu0 %v2727
        %4119 = vmatpush1.bf16.msra.mxu0 %v2726
        %4120 = vmatprep.subr.bf16.mxu0 %v2723
        %4121 = vmatpush1.bf16.msra.mxu0 %v2722
        %4122 = vmatprep.subr.bf16.mxu0 %v2719
        %4123 = vmatpush1.bf16.msra.mxu0 %v2718
        %4124 = vmatprep.subr.bf16.mxu0 %v2715
        %4125 = vmatpush1.bf16.msra.mxu0 %v2714
        %4126 = vmatprep.subr.bf16.mxu0 %v2711
        %4127 = vmatpush1.bf16.msra.mxu0 %v2710
        %4128 = vmatprep.subr.bf16.mxu0 %v2771
        %4129 = vmatpush2.bf16.msra.mxu0 %v2770
        %4130 = vmatprep.subr.bf16.mxu0 %v2767
        %4131 = vmatpush2.bf16.msra.mxu0 %v2766
        %4132 = vmatprep.subr.bf16.mxu0 %v2763
        %4133 = vmatpush2.bf16.msra.mxu0 %v2762
        %4134 = vmatprep.subr.bf16.mxu0 %v2759
        %4135 = vmatpush2.bf16.msra.mxu0 %v2758
        %4136 = vmatprep.subr.bf16.mxu0 %v2755
        %4137 = vmatpush2.bf16.msra.mxu0 %v2754
        %4138 = vmatprep.subr.bf16.mxu0 %v2751
        %4139 = vmatpush2.bf16.msra.mxu0 %v2750
        %4140 = vmatprep.subr.bf16.mxu0 %v2747
        %4141 = vmatpush2.bf16.msra.mxu0 %v2746
        %4142 = vmatprep.subr.bf16.mxu0 %v2743
        %4143 = vmatpush2.bf16.msra.mxu0 %v2742
        %4144 = vmatprep.mubr.bf16.mxu0 %v861
        %4145 = vmatmul.mubr.bf16.gmra.mxu0 %v860
        %v4146 = vpop.f32.mrf.mxu0
        %v4147 = vadd.f32 %v4094, %v4146
        %v4148 = vpop.f32.mrf.mxu0
        %v4149 = vadd.f32 %v4096, %v4148
        %v4150 = vpop.f32.mrf.mxu0
        %v4151 = vadd.f32 %v4098, %v4150
        %v4152 = vpop.f32.mrf.mxu0
        %v4153 = vadd.f32 %v4100, %v4152
        %4154 = vmatprep.mubr.bf16.mxu0 %v877
        %4155 = vmatmul.mubr.bf16.gmra.mxu0 %v876
        %v4156 = vpop.f32.mrf.mxu0
        %v4157 = vadd.f32 %v4104, %v4156
        %v4158 = vpop.f32.mrf.mxu0
        %v4159 = vadd.f32 %v4106, %v4158
        %v4160 = vpop.f32.mrf.mxu0
        %v4161 = vadd.f32 %v4108, %v4160
        %v4162 = vpop.f32.mrf.mxu0
        %v4163 = vadd.f32 %v4110, %v4162
        %4164 = vdwg.mxu0
        %4165 = vmatprep.subr.bf16.mxu0 %v2803
        %4166 = vmatpush1.bf16.msra.mxu0 %v2802
        %4167 = vmatprep.subr.bf16.mxu0 %v2799
        %4168 = vmatpush1.bf16.msra.mxu0 %v2798
        %4169 = vmatprep.subr.bf16.mxu0 %v2795
        %4170 = vmatpush1.bf16.msra.mxu0 %v2794
        %4171 = vmatprep.subr.bf16.mxu0 %v2791
        %4172 = vmatpush1.bf16.msra.mxu0 %v2790
        %4173 = vmatprep.subr.bf16.mxu0 %v2787
        %4174 = vmatpush1.bf16.msra.mxu0 %v2786
        %4175 = vmatprep.subr.bf16.mxu0 %v2783
        %4176 = vmatpush1.bf16.msra.mxu0 %v2782
        %4177 = vmatprep.subr.bf16.mxu0 %v2779
        %4178 = vmatpush1.bf16.msra.mxu0 %v2778
        %4179 = vmatprep.subr.bf16.mxu0 %v2775
        %4180 = vmatpush1.bf16.msra.mxu0 %v2774
        %4181 = vmatprep.subr.bf16.mxu0 %v2835
        %4182 = vmatpush2.bf16.msra.mxu0 %v2834
        %4183 = vmatprep.subr.bf16.mxu0 %v2831
        %4184 = vmatpush2.bf16.msra.mxu0 %v2830
        %4185 = vmatprep.subr.bf16.mxu0 %v2827
        %4186 = vmatpush2.bf16.msra.mxu0 %v2826
        %4187 = vmatprep.subr.bf16.mxu0 %v2823
        %4188 = vmatpush2.bf16.msra.mxu0 %v2822
        %4189 = vmatprep.subr.bf16.mxu0 %v2819
        %4190 = vmatpush2.bf16.msra.mxu0 %v2818
        %4191 = vmatprep.subr.bf16.mxu0 %v2815
        %4192 = vmatpush2.bf16.msra.mxu0 %v2814
        %4193 = vmatprep.subr.bf16.mxu0 %v2811
        %4194 = vmatpush2.bf16.msra.mxu0 %v2810
        %4195 = vmatprep.subr.bf16.mxu0 %v2807
        %4196 = vmatpush2.bf16.msra.mxu0 %v2806
        %4197 = vmatprep.mubr.bf16.mxu0 %v863
        %4198 = vmatmul.mubr.bf16.gmra.mxu0 %v862
        %v4199 = vpop.f32.mrf.mxu0
        %v4200 = vadd.f32 %v4147, %v4199
        %v4201 = vpop.f32.mrf.mxu0
        %v4202 = vadd.f32 %v4149, %v4201
        %v4203 = vpop.f32.mrf.mxu0
        %v4204 = vadd.f32 %v4151, %v4203
        %v4205 = vpop.f32.mrf.mxu0
        %v4206 = vadd.f32 %v4153, %v4205
        %4207 = vmatprep.mubr.bf16.mxu0 %v879
        %4208 = vmatmul.mubr.bf16.gmra.mxu0 %v878
        %v4209 = vpop.f32.mrf.mxu0
        %v4210 = vadd.f32 %v4157, %v4209
        %v4211 = vpop.f32.mrf.mxu0
        %v4212 = vadd.f32 %v4159, %v4211
        %v4213 = vpop.f32.mrf.mxu0
        %v4214 = vadd.f32 %v4161, %v4213
        %v4215 = vpop.f32.mrf.mxu0
        %v4216 = vadd.f32 %v4163, %v4215
        %4217 = vdwg.mxu0
        %4218 = vmatprep.subr.bf16.mxu0 %v2867
        %4219 = vmatpush1.bf16.msra.mxu0 %v2866
        %4220 = vmatprep.subr.bf16.mxu0 %v2863
        %4221 = vmatpush1.bf16.msra.mxu0 %v2862
        %4222 = vmatprep.subr.bf16.mxu0 %v2859
        %4223 = vmatpush1.bf16.msra.mxu0 %v2858
        %4224 = vmatprep.subr.bf16.mxu0 %v2855
        %4225 = vmatpush1.bf16.msra.mxu0 %v2854
        %4226 = vmatprep.subr.bf16.mxu0 %v2851
        %4227 = vmatpush1.bf16.msra.mxu0 %v2850
        %4228 = vmatprep.subr.bf16.mxu0 %v2847
        %4229 = vmatpush1.bf16.msra.mxu0 %v2846
        %4230 = vmatprep.subr.bf16.mxu0 %v2843
        %4231 = vmatpush1.bf16.msra.mxu0 %v2842
        %4232 = vmatprep.subr.bf16.mxu0 %v2839
        %4233 = vmatpush1.bf16.msra.mxu0 %v2838
        %4234 = vmatprep.subr.bf16.mxu0 %v2899
        %4235 = vmatpush2.bf16.msra.mxu0 %v2898
        %4236 = vmatprep.subr.bf16.mxu0 %v2895
        %4237 = vmatpush2.bf16.msra.mxu0 %v2894
        %4238 = vmatprep.subr.bf16.mxu0 %v2891
        %4239 = vmatpush2.bf16.msra.mxu0 %v2890
        %4240 = vmatprep.subr.bf16.mxu0 %v2887
        %4241 = vmatpush2.bf16.msra.mxu0 %v2886
        %4242 = vmatprep.subr.bf16.mxu0 %v2883
        %4243 = vmatpush2.bf16.msra.mxu0 %v2882
        %4244 = vmatprep.subr.bf16.mxu0 %v2879
        %4245 = vmatpush2.bf16.msra.mxu0 %v2878
        %4246 = vmatprep.subr.bf16.mxu0 %v2875
        %4247 = vmatpush2.bf16.msra.mxu0 %v2874
        %4248 = vmatprep.subr.bf16.mxu0 %v2871
        %4249 = vmatpush2.bf16.msra.mxu0 %v2870
        %4250 = vmatprep.mubr.bf16.mxu0 %v865
        %4251 = vmatmul.mubr.bf16.gmra.mxu0 %v864
        %v4252 = vpop.f32.mrf.mxu0
        %v4253 = vadd.f32 %v4200, %v4252
        %v4254 = vpop.f32.mrf.mxu0
        %v4255 = vadd.f32 %v4202, %v4254
        %v4256 = vpop.f32.mrf.mxu0
        %v4257 = vadd.f32 %v4204, %v4256
        %v4258 = vpop.f32.mrf.mxu0
        %v4259 = vadd.f32 %v4206, %v4258
        %4260 = vmatprep.mubr.bf16.mxu0 %v881
        %4261 = vmatmul.mubr.bf16.gmra.mxu0 %v880
        %v4262 = vpop.f32.mrf.mxu0
        %v4263 = vadd.f32 %v4210, %v4262
        %v4264 = vpop.f32.mrf.mxu0
        %v4265 = vadd.f32 %v4212, %v4264
        %v4266 = vpop.f32.mrf.mxu0
        %v4267 = vadd.f32 %v4214, %v4266
        %v4268 = vpop.f32.mrf.mxu0
        %v4269 = vadd.f32 %v4216, %v4268
        %4270 = vdwg.mxu0
        %4271 = vmatprep.subr.bf16.mxu0 %v2931
        %4272 = vmatpush1.bf16.msra.mxu0 %v2930
        %4273 = vmatprep.subr.bf16.mxu0 %v2927
        %4274 = vmatpush1.bf16.msra.mxu0 %v2926
        %4275 = vmatprep.subr.bf16.mxu0 %v2923
        %4276 = vmatpush1.bf16.msra.mxu0 %v2922
        %4277 = vmatprep.subr.bf16.mxu0 %v2919
        %4278 = vmatpush1.bf16.msra.mxu0 %v2918
        %4279 = vmatprep.subr.bf16.mxu0 %v2915
        %4280 = vmatpush1.bf16.msra.mxu0 %v2914
        %4281 = vmatprep.subr.bf16.mxu0 %v2911
        %4282 = vmatpush1.bf16.msra.mxu0 %v2910
        %4283 = vmatprep.subr.bf16.mxu0 %v2907
        %4284 = vmatpush1.bf16.msra.mxu0 %v2906
        %4285 = vmatprep.subr.bf16.mxu0 %v2903
        %4286 = vmatpush1.bf16.msra.mxu0 %v2902
        %4287 = vmatprep.subr.bf16.mxu0 %v2963
        %4288 = vmatpush2.bf16.msra.mxu0 %v2962
        %4289 = vmatprep.subr.bf16.mxu0 %v2959
        %4290 = vmatpush2.bf16.msra.mxu0 %v2958
        %4291 = vmatprep.subr.bf16.mxu0 %v2955
        %4292 = vmatpush2.bf16.msra.mxu0 %v2954
        %4293 = vmatprep.subr.bf16.mxu0 %v2951
        %4294 = vmatpush2.bf16.msra.mxu0 %v2950
        %4295 = vmatprep.subr.bf16.mxu0 %v2947
        %4296 = vmatpush2.bf16.msra.mxu0 %v2946
        %4297 = vmatprep.subr.bf16.mxu0 %v2943
        %4298 = vmatpush2.bf16.msra.mxu0 %v2942
        %4299 = vmatprep.subr.bf16.mxu0 %v2939
        %4300 = vmatpush2.bf16.msra.mxu0 %v2938
        %4301 = vmatprep.subr.bf16.mxu0 %v2935
        %4302 = vmatpush2.bf16.msra.mxu0 %v2934
        %4303 = vmatprep.mubr.bf16.mxu0 %v867
        %4304 = vmatmul.mubr.bf16.gmra.mxu0 %v866
        %v4305 = vpop.f32.mrf.mxu0
        %v4306 = vadd.f32 %v4253, %v4305
        %v4307 = vpop.f32.mrf.mxu0
        %v4308 = vadd.f32 %v4255, %v4307
        %v4309 = vpop.f32.mrf.mxu0
        %v4310 = vadd.f32 %v4257, %v4309
        %v4311 = vpop.f32.mrf.mxu0
        %v4312 = vadd.f32 %v4259, %v4311
        %4313 = vmatprep.mubr.bf16.mxu0 %v883
        %4314 = vmatmul.mubr.bf16.gmra.mxu0 %v882
        %v4315 = vpop.f32.mrf.mxu0
        %v4316 = vadd.f32 %v4263, %v4315
        %v4317 = vpop.f32.mrf.mxu0
        %v4318 = vadd.f32 %v4265, %v4317
        %v4319 = vpop.f32.mrf.mxu0
        %v4320 = vadd.f32 %v4267, %v4319
        %v4321 = vpop.f32.mrf.mxu0
        %v4322 = vadd.f32 %v4269, %v4321
        %4323 = vdwg.mxu0
        %v4324 = vld [vmem:[#allocation2] sm:$0xff]
        %v4325 = vld [vmem:[#allocation2 + $0x8] sm:$0xff]
        %v4326 = vld [vmem:[#allocation2 + $0x10] sm:$0xff]
        %v4327 = vld [vmem:[#allocation2 + $0x18] sm:$0xff]
        %v4328 = vmul.f32 %v3882, %v3882
        %v4329 = vmul.f32 %v3884, %v3884
        %v4330 = vmul.f32 %v4306, %v4306
        %v4331 = vmul.f32 %v4308, %v4308
        %v4332 = vmul.f32 %v3886, %v3886
        %v4333 = vmul.f32 %v3888, %v3888
        %v4334 = vmul.f32 %v4310, %v4310
        %v4335 = vmul.f32 %v4312, %v4312
        %v4336 = vmul.f32 %v3892, %v3892
        %v4337 = vmul.f32 %v3894, %v3894
        %v4338 = vmul.f32 %v4316, %v4316
        %v4339 = vmul.f32 %v4318, %v4318
        %v4340 = vmul.f32 %v3896, %v3896
        %v4341 = vmul.f32 %v3898, %v3898
        %v4342 = vmul.f32 %v4320, %v4320
        %v4343 = vmul.f32 %v4322, %v4322
        %v4344 = vadd.f32 %v4328, %v4329
        %v4345 = vadd.f32 %v4344, %v4330
        %v4346 = vadd.f32 %v4345, %v4331
        %4347 = vadd.xlane.f32.xlu0 %v4346
        %v4348 = vpop.xlane.xlu0 %4347
        %v4349 = vadd.f32 %v4332, %v4333
        %v4350 = vadd.f32 %v4349, %v4334
        %v4351 = vadd.f32 %v4350, %v4335
        %4352 = vadd.xlane.f32.xlu0 %v4351
        %v4353 = vpop.xlane.xlu0 %4352
        %v4354 = vadd.f32 %v4336, %v4337
        %v4355 = vadd.f32 %v4354, %v4338
        %v4356 = vadd.f32 %v4355, %v4339
        %4357 = vadd.xlane.f32.xlu0 %v4356
        %v4358 = vpop.xlane.xlu0 %4357
        %v4359 = vadd.f32 %v4340, %v4341
        %v4360 = vadd.f32 %v4359, %v4342
        %v4361 = vadd.f32 %v4360, %v4343
        %4362 = vadd.xlane.f32.xlu0 %v4361
        %v4363 = vpop.xlane.xlu0 %4362
        %v4364 = vadd.f32 %v4324, %v4348
        %v4365 = vadd.f32 %v4325, %v4353
        %v4366 = vadd.f32 %v4326, %v4358
        %v4367 = vadd.f32 %v4327, %v4363
        %vm4368 = vcmask 7168
        %4369 = vst.msk [vmem:[#allocation2] sm:$0xff] %vm4368, %v4364
        %4370 = vst.msk [vmem:[#allocation2 + $0x8] sm:$0xff] %vm4368, %v4365
        %4371 = vst.msk [vmem:[#allocation2 + $0x10] sm:$0xff] %vm4368, %v4366
        %4372 = vst.msk [vmem:[#allocation2 + $0x18] sm:$0xff] %vm4368, %v4367
        %p4373 = scmp.eq.s32.totalorder %s21, 4
        // Predicated region
        $region37: #{_mix_sounds_impl.2} parent=27 // pred_check
          %p4374 = pneg %p4373
        $region38: #{_mix_sounds_impl.2} parent=27 // pred_check_branch
          %4376 = sbr.rel (%p4374) target = $region40
        $region39: #{_mix_sounds_impl.2} parent=27 // pred_region
          %v4377 = vld [vmem:[#allocation2] sm:$0xff]
          %v4378 = vld [vmem:[#allocation2 + $0x8] sm:$0xff]
          %v4379 = vld [vmem:[#allocation2 + $0x10] sm:$0xff]
          %v4380 = vld [vmem:[#allocation2 + $0x18] sm:$0xff]
          %v4381 = vmax.f32 %v4377, 1e-08
          %v4382 = vmax.f32 %v4378, 1e-08
          %v4383 = vmax.f32 %v4379, 1e-08
          %v4384 = vmax.f32 %v4380, 1e-08
          %v4385 = vlog2.pop %v4381
          %v4386 = vmul.f32 %v4385, 0.6931472
          %v4387 = vlog2.pop %v4382
          %v4388 = vmul.f32 %v4387, 0.6931472
          %v4389 = vlog2.pop %v4383
          %v4390 = vmul.f32 %v4389, 0.6931472
          %v4391 = vlog2.pop %v4384
          %v4392 = vmul.f32 %v4391, 0.6931472
          %v4393 = vmul.f32 %v4386, 0.4342945
          %v4394 = vmul.f32 %v4388, 0.4342945
          %v4395 = vmul.f32 %v4390, 0.4342945
          %v4396 = vmul.f32 %v4392, 0.4342945
          %v4397 = vmul.f32 %v4393, 10.0
          %v4398 = vmul.f32 %v4394, 10.0
          %v4399 = vmul.f32 %v4395, 10.0
          %v4400 = vmul.f32 %v4396, 10.0
          %4401 = vst.msk [vmem:[%s201] sm:$0xff] %vm4368, %v4397
          %4402 = vst.msk [vmem:[%s201 + $0x8] sm:$0xff] %vm4368, %v4398
          %4403 = vst.msk [vmem:[%s201 + $0x10] sm:$0xff] %vm4368, %v4399
          %4404 = vst.msk [vmem:[%s201 + $0x18] sm:$0xff] %vm4368, %v4400
        $region40: #{_mix_sounds_impl.2} parent=27 // pred_fallthru
          _
        %s4405 = smul.u32 4, %s20
        %p4406 = scmp.lt.s32.totalorder %s4405, 3
        %s4407 = scalar_select %p4406, %s4405, 3
        %s4408 = smul.addr %s4407, 8
        %s4409 = scalar_lea.vmem %s2, %s4408
        // Predicated region
        $region41: #{_mix_sounds_impl.2} parent=27 // pred_check
          %p4410 = pneg %p98
        $region42: #{_mix_sounds_impl.2} parent=27 // pred_check_branch
          %4412 = sbr.rel (%p4410) target = $region44
        $region43: #{_mix_sounds_impl.2} parent=27 // pred_region
          %s4413 = smul.u32 4, %s20
        $region44: #{_mix_sounds_impl.2} parent=27 // pred_fallthru
          _
        // Predicated region
        $region45: #{_mix_sounds_impl.2} parent=27 // pred_check
          %p4414 = pneg %p98
        $region46: #{_mix_sounds_impl.2} parent=27 // pred_check_branch
          %4416 = sbr.rel (%p4414) target = $region48
        $region47: #{_mix_sounds_impl.2} parent=27 // pred_region
          %s4417 = smul.u32 4, %s20
          %p4418 = scmp.lt.s32.totalorder %s4417, 3
          %s4419 = scalar_select %p4418, %s4417, 3
          %s4420 = smul.addr %s4419, 8
          %s4421 = scalar_lea.vmem %s2, %s4420
        $region48: #{_mix_sounds_impl.2} parent=27 // pred_fallthru
          _
      $region28: #{_mix_sounds_impl.2} parent=5 // pred_fallthru
        _
      %p4422 = scmp.le.s32.totalorder 2, %s11
      // Predicated region
      $region49: #{_mix_sounds_impl.2} parent=5 // pred_check
        %p4423 = pneg %p4422
      $region50: #{_mix_sounds_impl.2} parent=5 // pred_check_branch
        %4425 = sbr.rel (%p4423) target = $region52
      $region51: #{_mix_sounds_impl.2} parent=5 // pred_region
        %s4426 = ssub.s32 %s11, 2
      $region52: #{_mix_sounds_impl.2} parent=5 // pred_fallthru
        _
    $region6: #{_mix_sounds_impl.2} parent=1 // loop_footer
      %s15 = sadd.s32 1, %s11
    $region7: #{_mix_sounds_impl.2} parent=1 // loop_footer_branch
      %10 = sbr.rel target = $region3
    $region8: #{_mix_sounds_impl.2} parent=1 // loop_exit
      _
    %4427 = vsyncpa [#allocation4], 1
    %s4428 = scalar_lea.sflag [#allocation4], 1
    %4429 = vsyncpa %s4428, 1

</llo_original>
